<compile_context>
chip_gen: v5e
topology: v5e:2x2
jax: 0.10.0
libtpu: 0.0.40
codegen_flags: <defaults>
</compile_context>

<pallas_src>
import jax
import jax.numpy as jnp
from jax.experimental import pallas as pl
from jax.experimental.pallas import tpu as pltpu

NEG_SLOPE = 0.01  # default slope of nn.LeakyReLU()


def _full_spec(shape):
    # single grid point, full-array block (last two dims == full dims -> OK)
    return pl.BlockSpec(shape, lambda: tuple(0 for _ in shape))


# --------------------------------------------------------------------------- #
# Fused forward
# --------------------------------------------------------------------------- #
def dueling_dqn_forward(s_mission, st_x, st_len, cr_x, cr_len, yd_x, yd_len,
                        params, *, m_max_num, hidden_size, n_layers):
    """
    s_mission : [B, Dm]                      mission features
    st_x      : [n_st, B, T, Dmach]          per-station padded sequences
    st_len    : [n_st, B]                    valid lengths (>=1)
    cr_x      : [B, T, Dmach], cr_len : [B]
    yd_x      : [B, T, Dyard], yd_len : [B]
    """
    B, Dm = s_mission.shape
    n_st = st_x.shape[0]
    T = m_max_num + 1
    Dmach = st_x.shape[-1]
    Dyard = yd_x.shape[-1]
    H = hidden_size
    L = n_layers
    E = params["emb_w2"].shape[-1]            # embedding output dim (8)
    maxD = params["st_w_ih"].shape[1]         # padded GRU input width
    assert maxD >= max(Dmach, Dyard, H)
    assert st_x.shape == (n_st, B, T, Dmach)
    Rst = n_st * B                            # batched station rows
    blk = max(16, ((Dm + 15) // 16) * 16)     # head block K (bf16-tile aligned)
    assert E <= blk <= 64
    out_lanes = max(128, ((n_st + 127) // 128) * 128)   # lane-dense output slab
    f32, bf16 = jnp.float32, jnp.bfloat16

    # ----------------- wrapper-side packing (plain JAX, one-off) -------------
    def pad_feat(a, d):
        return jnp.pad(a.astype(f32), ((0, 0), (0, maxD - d)))

    # time-major flat sequences; station rows ordered k = s*B + b
    st_xs = pad_feat(jnp.transpose(st_x, (2, 0, 1, 3)).reshape(T * Rst, Dmach),
                     Dmach)                                       # [T*Rst, maxD]
    cr_tm = pad_feat(jnp.transpose(cr_x, (1, 0, 2)).reshape(T * B, Dmach), Dmach)
    yd_tm = pad_feat(jnp.transpose(yd_x, (1, 0, 2)).reshape(T * B, Dyard), Dyard)
    cy_xs = jnp.stack([cr_tm, yd_tm])                             # [2, T*B, maxD]

    lens = jnp.concatenate([st_len.reshape(Rst), cr_len.reshape(B),
                            yd_len.reshape(B)]).astype(jnp.int32).reshape(-1, 1)

    gwih = jnp.stack([params["st_w_ih"], params["cr_w_ih"],
                      params["yd_w_ih"]]).astype(bf16)            # [3,L,maxD,3H]
    gwhh = jnp.stack([params["st_w_hh"], params["cr_w_hh"],
                      params["yd_w_hh"]]).astype(bf16)            # [3,L,H,3H]
    gb = jnp.stack([jnp.stack([params[f"{p}_b_ih"], params[f"{p}_b_hh"]], axis=1)
                    for p in ("st", "cr", "yd")])                 # [3,L,2,1,3H]

    ew1 = params["emb_w1"].astype(bf16)                           # [3,H,64]
    ew2 = jnp.pad(params["emb_w2"],
                  ((0, 0), (0, 0), (0, blk - E))).astype(bf16)    # [3,64,blk]
    eb = jnp.stack([params["emb_b1"],
                    jnp.pad(params["emb_b2"], ((0, 0), (0, 0), (0, 64 - E)))],
                   axis=1)                                        # [3,2,1,64]

    def padr(w):  # pad a weight block to blk rows
        return jnp.pad(w, ((0, blk - w.shape[0]), (0, 0)))

    aw, vw = params["adv_w1"], params["val_w1"]
    # block order: 0 adv-mission, 1 adv-station, 2 adv-cross, 3 adv-yard,
    #              4 val-mission, 5 val-cross,   6 val-yard
    headw1 = jnp.stack([
        padr(aw[0:Dm]), padr(aw[Dm:Dm + E]), padr(aw[Dm + E:Dm + 2 * E]),
        padr(aw[Dm + 2 * E:Dm + 3 * E]),
        padr(vw[0:Dm]), padr(vw[Dm:Dm + E]), padr(vw[Dm + E:Dm + 2 * E]),
    ]).astype(bf16)                                               # [7,blk,64]

    headv = jnp.stack([
        params["adv_b1"][0], params["adv_w2r"][0],
        params["val_b1"][0], params["val_w2r"][0],
        jnp.concatenate([params["adv_b2"][0], params["val_b2"][0],
                         jnp.zeros((64 - 2,), f32)]),
    ])                                                            # [5,64] f32

    mission_p = jnp.pad(s_mission.astype(f32), ((0, 0), (0, blk - Dm)))

    args = (mission_p, st_xs, cy_xs, lens, gwih, gwhh, gb, ew1, ew2, eb,
            headw1, headv)

    # ------------------------------- kernel ---------------------------------
    def kernel(mission_ref, st_xs_ref, cy_xs_ref, lens_ref,
               gwih_ref, gwhh_ref, gb_ref, ew1_ref, ew2_ref, eb_ref,
               hw1_ref, hv_ref, out_ref):

        def sigmoid(x):
            # exp + approx reciprocal -> stays in the EUP slot (review item)
            return pl.reciprocal(1.0 + jnp.exp(-x), approx=True)

        def leaky(x):
            return jnp.where(x > 0, x, NEG_SLOPE * x)

        def mm(x, w):
            # NOTE: weights-and-activations bf16 with f32 accumulation; fine
            # at T=5, verify tolerance vs. f32 reference if T grows.
            return jnp.dot(x.astype(bf16), w, preferred_element_type=f32)

        def gru_last(x_flat, lns, enc, rows):
            """Layer-major multi-layer GRU over a padded time-major sequence.
            Returns the top-layer output at timestep (len-1) for each row."""
            seq = x_flat                                   # [T*rows, maxD] f32
            outs = None
            for l in range(L):
                wi = gwih_ref[enc, l]                      # bf16 [maxD, 3H]
                wh = gwhh_ref[enc, l]                      # bf16 [H, 3H]
                bih = gb_ref[enc, l, 0]                    # f32 [1, 3H]
                bhh = jnp.broadcast_to(gb_ref[enc, l, 1], (rows, 3 * H))
                # hoisted input projection: all timesteps in one matmul
                gx_all = mm(seq, wi) + bih                 # [T*rows, 3H]
                h = jnp.zeros((rows, H), f32)
                outs = []
                # T is small -> static unroll keeps LLO scheduler visibility.
                # TODO(synk): at production batch sizes switch to
                #   lax.fori_loop with h as carry to bound vreg live ranges.
                for t in range(T):
                    gx = gx_all[t * rows:(t + 1) * rows, :]
                    gh = mm(h, wh) + bhh
                    r = sigmoid(gx[:, 0:H] + gh[:, 0:H])
                    z = sigmoid(gx[:, H:2 * H] + gh[:, H:2 * H])
                    n = jnp.tanh(gx[:, 2 * H:3 * H] + r * gh[:, 2 * H:3 * H])
                    h = (1.0 - z) * n + z * h
                    outs.append(h)
                if l + 1 < L:
                    seq = jnp.concatenate(outs, axis=0)    # [T*rows, H]
                    if H < maxD:                           # keep full-tile K
                        seq = jnp.concatenate(
                            [seq, jnp.zeros((T * rows, maxD - H), f32)], axis=1)
            # PackedSequence gather: top-layer output at t = len-1
            last = outs[0]
            for t in range(1, T):
                last = jnp.where(lns == t + 1, outs[t], last)
            return last                                    # [rows, H]

        def emb_mlp(h_last, i):
            h1 = leaky(mm(h_last, ew1_ref[i]) + eb_ref[i, 0])
            return mm(h1, ew2_ref[i]) + eb_ref[i, 1][:, 0:blk]   # [rows, blk]

        lens_all = lens_ref[...]
        # station sequences batched into one GRU pass (rows = n_st*B)
        st_last = gru_last(st_xs_ref[...], lens_all[0:Rst, :], 0, Rst)
        cr_last = gru_last(cy_xs_ref[0], lens_all[Rst:Rst + B, :], 1, B)
        yd_last = gru_last(cy_xs_ref[1], lens_all[Rst + B:Rst + 2 * B, :], 2, B)

        st_emb = emb_mlp(st_last, 0)                       # [Rst, blk]
        cr_emb = emb_mlp(cr_last, 1)                       # [B, blk]
        yd_emb = emb_mlp(yd_last, 2)                       # [B, blk]

        mission_s = mission_ref[...] * (1.0 / 1000.0)      # [B, blk]

        adv_b1, adv_w2r = hv_ref[0:1, :], hv_ref[1:2, :]
        val_b1, val_w2r = hv_ref[2:3, :], hv_ref[3:4, :]
        b2row = hv_ref[4:5, :]
        adv_b2, val_b2 = b2row[:, 0:1], b2row[:, 1:2]

        # ---- advantage head: shared part once + ONE batched station matmul --
        adv_base = (mm(mission_s, hw1_ref[0]) + mm(cr_emb, hw1_ref[2])
                    + mm(yd_emb, hw1_ref[3]) + adv_b1)     # [B, 64]
        h_adv = leaky(jnp.concatenate([adv_base] * n_st, axis=0)
                      + mm(st_emb, hw1_ref[1]))            # [Rst, 64]
        # output layer as VPU multiply + lane reduction (no 1-column matmul)
        adv_flat = (jnp.sum(h_adv * adv_w2r, axis=-1, keepdims=True)
                    + adv_b2)                              # [Rst, 1]

        # ---- value head ------------------------------------------------------
        h_val = leaky(mm(mission_s, hw1_ref[4]) + mm(cr_emb, hw1_ref[5])
                      + mm(yd_emb, hw1_ref[6]) + val_b1)
        val = jnp.sum(h_val * val_w2r, axis=-1, keepdims=True) + val_b2  # [B,1]

        # ---- dueling combine: adv + val - mean(adv) --------------------------
        adv_cols = [adv_flat[s * B:(s + 1) * B, :] for s in range(n_st)]
        adv_mean = adv_cols[0]
        for a in adv_cols[1:]:
            adv_mean = adv_mean + a
        adv_mean = adv_mean * (1.0 / n_st)
        q_cols = [a + val - adv_mean for a in adv_cols]    # n_st x [B, 1]
        out_ref[...] = jnp.concatenate(
            q_cols + [jnp.zeros((B, out_lanes - n_st), f32)], axis=1)

    # ------------------------- cost estimate (advisory) ----------------------
    def enc_flops(rows):
        # per layer: one [T*rows,maxD]@[maxD,3H] + T x [rows,H]@[H,3H]
        return L * T * rows * 2 * 3 * H * (maxD + H)

    emb_rows = Rst + 2 * B
    gru_flops = enc_flops(Rst) + 2 * enc_flops(B)
    emb_flops = 2 * emb_rows * (H * 64 + 64 * blk)
    head_flops = (2 * (3 * B + Rst) * blk * 64     # adv W1 blocks
                  + 2 * 3 * B * blk * 64           # val W1 blocks
                  + 2 * (Rst + B) * 64)            # output reductions
    flops = int(gru_flops + emb_flops + head_flops)
    transcendentals = int(5 * H * T * L * emb_rows)
    bytes_accessed = int(sum(a.size * a.dtype.itemsize for a in args)
                         + B * out_lanes * 4)

    out_pad = pl.pallas_call(
        kernel,
        out_shape=jax.ShapeDtypeStruct((B, out_lanes), jnp.float32),
        in_specs=[_full_spec(a.shape) for a in args],
        out_specs=_full_spec((B, out_lanes)),
        compiler_params=pltpu.CompilerParams(vmem_limit_bytes=32 * 1024 * 1024),
        cost_estimate=pl.CostEstimate(flops=flops,
                                      transcendentals=transcendentals,
                                      bytes_accessed=bytes_accessed),
    )(*args)
    # NOTE: at production batch sizes, add a grid over B marked "parallel"
    # (dimension_semantics) with per-B-tile BlockSpecs to shard across v7x's
    # two TensorCores; size the B-tile for 64 MiB VMEM on v7x and keep the
    # whole batch resident on v5e/v6e (128 MiB, single TC).
    return out_pad[:, :n_st]


# --------------------------------------------------------------------------- #
# Deterministic synthetic parameters
# --------------------------------------------------------------------------- #
def init_params(key, Dm, Dmach, Dyard, H, L, E):
    maxD = max(Dmach, Dyard, H)
    ks = iter(jax.random.split(key, 64))

    def init_w(k, shape, fan_in):
        return jax.random.normal(k, shape, jnp.float32) / jnp.sqrt(
            jnp.float32(fan_in))

    def init_gru(d_in):
        w_ih = jnp.zeros((L, maxD, 3 * H), jnp.float32)
        w_hh = jnp.zeros((L, H, 3 * H), jnp.float32)
        b_ih = jnp.zeros((L, 1, 3 * H), jnp.float32)
        b_hh = jnp.zeros((L, 1, 3 * H), jnp.float32)
        for l in range(L):
            din_l = d_in if l == 0 else H
            w_ih = w_ih.at[l, :din_l].set(init_w(next(ks), (din_l, 3 * H), H))
            w_hh = w_hh.at[l].set(init_w(next(ks), (H, 3 * H), H))
            b_ih = b_ih.at[l].set(0.01 * jnp.ones((1, 3 * H), jnp.float32))
            b_hh = b_hh.at[l].set(0.01 * jnp.ones((1, 3 * H), jnp.float32))
        return w_ih, w_hh, b_ih, b_hh

    p = {}
    for name, d_in in (("st", Dmach), ("cr", Dmach), ("yd", Dyard)):
        w_ih, w_hh, b_ih, b_hh = init_gru(d_in)
        p[f"{name}_w_ih"] = w_ih
        p[f"{name}_w_hh"] = w_hh
        p[f"{name}_b_ih"] = b_ih
        p[f"{name}_b_hh"] = b_hh

    # embedding FlattenMlps (station, cross, yard): H -> 64 -> E
    p["emb_w1"] = jnp.stack([init_w(next(ks), (H, 64), H) for _ in range(3)])
    p["emb_b1"] = 0.01 * jnp.ones((3, 1, 64), jnp.float32)
    p["emb_w2"] = jnp.stack([init_w(next(ks), (64, E), 64) for _ in range(3)])
    p["emb_b2"] = jnp.zeros((3, 1, E), jnp.float32)

    # dueling heads: adv (Dm + 3E -> 64 -> 1), val (Dm + 2E -> 64 -> 1)
    p["adv_w1"] = init_w(next(ks), (Dm + 3 * E, 64), Dm + 3 * E)
    p["adv_b1"] = 0.01 * jnp.ones((1, 64), jnp.float32)
    p["adv_w2r"] = init_w(next(ks), (1, 64), 64)
    p["adv_b2"] = jnp.zeros((1, 1), jnp.float32)
    p["val_w1"] = init_w(next(ks), (Dm + 2 * E, 64), Dm + 2 * E)
    p["val_b1"] = 0.01 * jnp.ones((1, 64), jnp.float32)
    p["val_w2r"] = init_w(next(ks), (1, 64), 64)
    p["val_b2"] = jnp.zeros((1, 1), jnp.float32)
    return p


# --------------------------------------------------------------------------- #
# Main
# --------------------------------------------------------------------------- #
if __name__ == "__main__":
    key = jax.random.PRNGKey(0)

    # Small shapes consistent with the module structure.
    B = 2                 # batch
    m_max_num = 4         # -> padded sequence length T = m_max_num + 1 = 5
    T = m_max_num + 1
    dim_mission_fea = 16
    dim_mach_fea = 8
    dim_yard_fea = 8
    hidden_size = 32
    n_layers = 2
    n_station = 3         # number of stations in s_station
    E = 8                 # Dueling_DQN.output_dim

    keys = jax.random.split(key, 8)

    s_mission = 100.0 * jax.random.normal(keys[0], (B, dim_mission_fea),
                                          jnp.float32)
    st_x = jax.random.normal(keys[1], (n_station, B, T, dim_mach_fea),
                             jnp.float32)
    st_len = jax.random.randint(keys[2], (n_station, B), 1, T + 1)
    cr_x = jax.random.normal(keys[3], (B, T, dim_mach_fea), jnp.float32)
    cr_len = jax.random.randint(keys[4], (B,), 1, T + 1)
    yd_x = jax.random.normal(keys[5], (B, T, dim_yard_fea), jnp.float32)
    yd_len = jax.random.randint(keys[6], (B,), 1, T + 1)

    params = init_params(keys[7], dim_mission_fea, dim_mach_fea, dim_yard_fea,
                         hidden_size, n_layers, E)

    out = dueling_dqn_forward(s_mission, st_x, st_len, cr_x, cr_len,
                              yd_x, yd_len, params,
                              m_max_num=m_max_num, hidden_size=hidden_size,
                              n_layers=n_layers)
    out = jax.block_until_ready(out)
    assert out.shape == (B, n_station)
    assert bool(jnp.all(jnp.isfinite(out)))
    print("KERNEL_OK")
</pallas_src>

<mosaic_0001>
module attributes {stable_mosaic.version = 11 : i64} {
  func.func @kernel(%arg0: memref<2x16xf32, #tpu.memory_space<vmem>>, %arg1: memref<30x32xf32, #tpu.memory_space<vmem>>, %arg2: memref<2x10x32xf32, #tpu.memory_space<vmem>>, %arg3: memref<10x1xi32, #tpu.memory_space<vmem>>, %arg4: memref<3x2x32x96xbf16, #tpu.memory_space<vmem>>, %arg5: memref<3x2x32x96xbf16, #tpu.memory_space<vmem>>, %arg6: memref<3x2x2x1x96xf32, #tpu.memory_space<vmem>>, %arg7: memref<3x32x64xbf16, #tpu.memory_space<vmem>>, %arg8: memref<3x64x16xbf16, #tpu.memory_space<vmem>>, %arg9: memref<3x2x1x64xf32, #tpu.memory_space<vmem>>, %arg10: memref<7x16x64xbf16, #tpu.memory_space<vmem>>, %arg11: memref<5x64xf32, #tpu.memory_space<vmem>>, %arg12: memref<2x128xf32, #tpu.memory_space<vmem>>) attributes {dimension_semantics = [], scalar_prefetch = 0 : i64, scratch_operands = 0 : i64, tpu.core_type = #tpu.core_type<tc>} {
    %c0 = arith.constant 0 : index
    %c0_0 = arith.constant 0 : index
    %0 = vector.load %arg3[%c0, %c0_0] : memref<10x1xi32, #tpu.memory_space<vmem>>, vector<10x1xi32>
    %c0_1 = arith.constant 0 : index
    %c0_2 = arith.constant 0 : index
    %1 = vector.load %arg1[%c0_1, %c0_2] : memref<30x32xf32, #tpu.memory_space<vmem>>, vector<30x32xf32>
    %2 = vector.extract_strided_slice %0 {offsets = [0, 0], sizes = [6, 1], strides = [1, 1]} : vector<10x1xi32> to vector<6x1xi32>
    %c0_3 = arith.constant 0 : index
    %c0_4 = arith.constant 0 : index
    %c0_5 = arith.constant 0 : index
    %c0_6 = arith.constant 0 : index
    %3 = vector.load %arg4[%c0_3, %c0_4, %c0_5, %c0_6] : memref<3x2x32x96xbf16, #tpu.memory_space<vmem>>, vector<1x1x32x96xbf16>
    %4 = vector.shape_cast %3 : vector<1x1x32x96xbf16> to vector<32x96xbf16>
    %c0_7 = arith.constant 0 : index
    %c0_8 = arith.constant 0 : index
    %c0_9 = arith.constant 0 : index
    %c0_10 = arith.constant 0 : index
    %5 = vector.load %arg5[%c0_7, %c0_8, %c0_9, %c0_10] : memref<3x2x32x96xbf16, #tpu.memory_space<vmem>>, vector<1x1x32x96xbf16>
    %6 = vector.shape_cast %5 : vector<1x1x32x96xbf16> to vector<32x96xbf16>
    %c0_11 = arith.constant 0 : index
    %c0_12 = arith.constant 0 : index
    %c0_13 = arith.constant 0 : index
    %c0_14 = arith.constant 0 : index
    %c0_15 = arith.constant 0 : index
    %7 = vector.load %arg6[%c0_11, %c0_12, %c0_13, %c0_14, %c0_15] : memref<3x2x2x1x96xf32, #tpu.memory_space<vmem>>, vector<1x1x1x1x96xf32>
    %8 = vector.shape_cast %7 : vector<1x1x1x1x96xf32> to vector<1x96xf32>
    %c0_16 = arith.constant 0 : index
    %c0_17 = arith.constant 0 : index
    %c1 = arith.constant 1 : index
    %c0_18 = arith.constant 0 : index
    %c0_19 = arith.constant 0 : index
    %9 = vector.load %arg6[%c0_16, %c0_17, %c1, %c0_18, %c0_19] : memref<3x2x2x1x96xf32, #tpu.memory_space<vmem>>, vector<1x1x1x1x96xf32>
    %10 = vector.shape_cast %9 : vector<1x1x1x1x96xf32> to vector<1x96xf32>
    %11 = vector.shape_cast %10 : vector<1x96xf32> to vector<1x96xf32>
    %12 = vector.broadcast %11 : vector<1x96xf32> to vector<6x96xf32>
    %13 = arith.truncf %1 : vector<30x32xf32> to vector<30x32xbf16>
    %cst = arith.constant dense<0.000000e+00> : vector<30x96xf32>
    %14 = tpu.matmul %13, %4, %cst {dimension_numbers = #tpu.dot_dimension_numbers<[1], [0], [0], [1], [0, 0, 1, 1], [], []>} : vector<30x32xbf16>, vector<32x96xbf16>, vector<30x96xf32> -> vector<30x96xf32>
    %15 = vector.broadcast %8 : vector<1x96xf32> to vector<30x96xf32>
    %16 = arith.addf %14, %15 : vector<30x96xf32>
    %cst_20 = arith.constant 0.000000e+00 : f32
    %17 = vector.broadcast %cst_20 : f32 to vector<6x32xf32>
    %18 = vector.extract_strided_slice %16 {offsets = [0, 0], sizes = [6, 96], strides = [1, 1]} : vector<30x96xf32> to vector<6x96xf32>
    %19 = arith.truncf %17 : vector<6x32xf32> to vector<6x32xbf16>
    %cst_21 = arith.constant dense<0.000000e+00> : vector<6x96xf32>
    %20 = tpu.matmul %19, %6, %cst_21 {dimension_numbers = #tpu.dot_dimension_numbers<[1], [0], [0], [1], [0, 0, 1, 1], [], []>} : vector<6x32xbf16>, vector<32x96xbf16>, vector<6x96xf32> -> vector<6x96xf32>
    %21 = arith.addf %20, %12 : vector<6x96xf32>
    %22 = vector.extract_strided_slice %18 {offsets = [0, 0], sizes = [6, 32], strides = [1, 1]} : vector<6x96xf32> to vector<6x32xf32>
    %23 = vector.extract_strided_slice %21 {offsets = [0, 0], sizes = [6, 32], strides = [1, 1]} : vector<6x96xf32> to vector<6x32xf32>
    %24 = arith.addf %22, %23 : vector<6x32xf32>
    %cst_22 = arith.constant 0.000000e+00 : f32
    %25 = vector.broadcast %cst_22 : f32 to vector<6x32xf32>
    %26 = arith.subf %25, %24 : vector<6x32xf32>
    %27 = math.exp %26 : vector<6x32xf32>
    %cst_23 = arith.constant 1.000000e+00 : f32
    %28 = vector.broadcast %cst_23 : f32 to vector<6x32xf32>
    %29 = arith.addf %28, %27 : vector<6x32xf32>
    %30 = tpu.reciprocal %29 {approx = true} : vector<6x32xf32> -> vector<6x32xf32>
    %31 = vector.extract_strided_slice %18 {offsets = [0, 32], sizes = [6, 32], strides = [1, 1]} : vector<6x96xf32> to vector<6x32xf32>
    %32 = vector.extract_strided_slice %21 {offsets = [0, 32], sizes = [6, 32], strides = [1, 1]} : vector<6x96xf32> to vector<6x32xf32>
    %33 = arith.addf %31, %32 : vector<6x32xf32>
    %cst_24 = arith.constant 0.000000e+00 : f32
    %34 = vector.broadcast %cst_24 : f32 to vector<6x32xf32>
    %35 = arith.subf %34, %33 : vector<6x32xf32>
    %36 = math.exp %35 : vector<6x32xf32>
    %cst_25 = arith.constant 1.000000e+00 : f32
    %37 = vector.broadcast %cst_25 : f32 to vector<6x32xf32>
    %38 = arith.addf %37, %36 : vector<6x32xf32>
    %39 = tpu.reciprocal %38 {approx = true} : vector<6x32xf32> -> vector<6x32xf32>
    %40 = vector.extract_strided_slice %18 {offsets = [0, 64], sizes = [6, 32], strides = [1, 1]} : vector<6x96xf32> to vector<6x32xf32>
    %41 = vector.extract_strided_slice %21 {offsets = [0, 64], sizes = [6, 32], strides = [1, 1]} : vector<6x96xf32> to vector<6x32xf32>
    %42 = arith.mulf %30, %41 : vector<6x32xf32>
    %43 = arith.addf %40, %42 : vector<6x32xf32>
    %44 = math.tanh %43 : vector<6x32xf32>
    %cst_26 = arith.constant 1.000000e+00 : f32
    %45 = vector.broadcast %cst_26 : f32 to vector<6x32xf32>
    %46 = arith.subf %45, %39 : vector<6x32xf32>
    %47 = arith.mulf %46, %44 : vector<6x32xf32>
    %48 = arith.mulf %39, %17 : vector<6x32xf32>
    %49 = arith.addf %47, %48 : vector<6x32xf32>
    %50 = vector.extract_strided_slice %16 {offsets = [6, 0], sizes = [6, 96], strides = [1, 1]} : vector<30x96xf32> to vector<6x96xf32>
    %51 = arith.truncf %49 : vector<6x32xf32> to vector<6x32xbf16>
    %cst_27 = arith.constant dense<0.000000e+00> : vector<6x96xf32>
    %52 = tpu.matmul %51, %6, %cst_27 {dimension_numbers = #tpu.dot_dimension_numbers<[1], [0], [0], [1], [0, 0, 1, 1], [], []>} : vector<6x32xbf16>, vector<32x96xbf16>, vector<6x96xf32> -> vector<6x96xf32>
    %53 = arith.addf %52, %12 : vector<6x96xf32>
    %54 = vector.extract_strided_slice %50 {offsets = [0, 0], sizes = [6, 32], strides = [1, 1]} : vector<6x96xf32> to vector<6x32xf32>
    %55 = vector.extract_strided_slice %53 {offsets = [0, 0], sizes = [6, 32], strides = [1, 1]} : vector<6x96xf32> to vector<6x32xf32>
    %56 = arith.addf %54, %55 : vector<6x32xf32>
    %cst_28 = arith.constant 0.000000e+00 : f32
    %57 = vector.broadcast %cst_28 : f32 to vector<6x32xf32>
    %58 = arith.subf %57, %56 : vector<6x32xf32>
    %59 = math.exp %58 : vector<6x32xf32>
    %cst_29 = arith.constant 1.000000e+00 : f32
    %60 = vector.broadcast %cst_29 : f32 to vector<6x32xf32>
    %61 = arith.addf %60, %59 : vector<6x32xf32>
    %62 = tpu.reciprocal %61 {approx = true} : vector<6x32xf32> -> vector<6x32xf32>
    %63 = vector.extract_strided_slice %50 {offsets = [0, 32], sizes = [6, 32], strides = [1, 1]} : vector<6x96xf32> to vector<6x32xf32>
    %64 = vector.extract_strided_slice %53 {offsets = [0, 32], sizes = [6, 32], strides = [1, 1]} : vector<6x96xf32> to vector<6x32xf32>
    %65 = arith.addf %63, %64 : vector<6x32xf32>
    %cst_30 = arith.constant 0.000000e+00 : f32
    %66 = vector.broadcast %cst_30 : f32 to vector<6x32xf32>
    %67 = arith.subf %66, %65 : vector<6x32xf32>
    %68 = math.exp %67 : vector<6x32xf32>
    %cst_31 = arith.constant 1.000000e+00 : f32
    %69 = vector.broadcast %cst_31 : f32 to vector<6x32xf32>
    %70 = arith.addf %69, %68 : vector<6x32xf32>
    %71 = tpu.reciprocal %70 {approx = true} : vector<6x32xf32> -> vector<6x32xf32>
    %72 = vector.extract_strided_slice %50 {offsets = [0, 64], sizes = [6, 32], strides = [1, 1]} : vector<6x96xf32> to vector<6x32xf32>
    %73 = vector.extract_strided_slice %53 {offsets = [0, 64], sizes = [6, 32], strides = [1, 1]} : vector<6x96xf32> to vector<6x32xf32>
    %74 = arith.mulf %62, %73 : vector<6x32xf32>
    %75 = arith.addf %72, %74 : vector<6x32xf32>
    %76 = math.tanh %75 : vector<6x32xf32>
    %cst_32 = arith.constant 1.000000e+00 : f32
    %77 = vector.broadcast %cst_32 : f32 to vector<6x32xf32>
    %78 = arith.subf %77, %71 : vector<6x32xf32>
    %79 = arith.mulf %78, %76 : vector<6x32xf32>
    %80 = arith.mulf %71, %49 : vector<6x32xf32>
    %81 = arith.addf %79, %80 : vector<6x32xf32>
    %82 = vector.extract_strided_slice %16 {offsets = [12, 0], sizes = [6, 96], strides = [1, 1]} : vector<30x96xf32> to vector<6x96xf32>
    %83 = arith.truncf %81 : vector<6x32xf32> to vector<6x32xbf16>
    %cst_33 = arith.constant dense<0.000000e+00> : vector<6x96xf32>
    %84 = tpu.matmul %83, %6, %cst_33 {dimension_numbers = #tpu.dot_dimension_numbers<[1], [0], [0], [1], [0, 0, 1, 1], [], []>} : vector<6x32xbf16>, vector<32x96xbf16>, vector<6x96xf32> -> vector<6x96xf32>
    %85 = arith.addf %84, %12 : vector<6x96xf32>
    %86 = vector.extract_strided_slice %82 {offsets = [0, 0], sizes = [6, 32], strides = [1, 1]} : vector<6x96xf32> to vector<6x32xf32>
    %87 = vector.extract_strided_slice %85 {offsets = [0, 0], sizes = [6, 32], strides = [1, 1]} : vector<6x96xf32> to vector<6x32xf32>
    %88 = arith.addf %86, %87 : vector<6x32xf32>
    %cst_34 = arith.constant 0.000000e+00 : f32
    %89 = vector.broadcast %cst_34 : f32 to vector<6x32xf32>
    %90 = arith.subf %89, %88 : vector<6x32xf32>
    %91 = math.exp %90 : vector<6x32xf32>
    %cst_35 = arith.constant 1.000000e+00 : f32
    %92 = vector.broadcast %cst_35 : f32 to vector<6x32xf32>
    %93 = arith.addf %92, %91 : vector<6x32xf32>
    %94 = tpu.reciprocal %93 {approx = true} : vector<6x32xf32> -> vector<6x32xf32>
    %95 = vector.extract_strided_slice %82 {offsets = [0, 32], sizes = [6, 32], strides = [1, 1]} : vector<6x96xf32> to vector<6x32xf32>
    %96 = vector.extract_strided_slice %85 {offsets = [0, 32], sizes = [6, 32], strides = [1, 1]} : vector<6x96xf32> to vector<6x32xf32>
    %97 = arith.addf %95, %96 : vector<6x32xf32>
    %cst_36 = arith.constant 0.000000e+00 : f32
    %98 = vector.broadcast %cst_36 : f32 to vector<6x32xf32>
    %99 = arith.subf %98, %97 : vector<6x32xf32>
    %100 = math.exp %99 : vector<6x32xf32>
    %cst_37 = arith.constant 1.000000e+00 : f32
    %101 = vector.broadcast %cst_37 : f32 to vector<6x32xf32>
    %102 = arith.addf %101, %100 : vector<6x32xf32>
    %103 = tpu.reciprocal %102 {approx = true} : vector<6x32xf32> -> vector<6x32xf32>
    %104 = vector.extract_strided_slice %82 {offsets = [0, 64], sizes = [6, 32], strides = [1, 1]} : vector<6x96xf32> to vector<6x32xf32>
    %105 = vector.extract_strided_slice %85 {offsets = [0, 64], sizes = [6, 32], strides = [1, 1]} : vector<6x96xf32> to vector<6x32xf32>
    %106 = arith.mulf %94, %105 : vector<6x32xf32>
    %107 = arith.addf %104, %106 : vector<6x32xf32>
    %108 = math.tanh %107 : vector<6x32xf32>
    %cst_38 = arith.constant 1.000000e+00 : f32
    %109 = vector.broadcast %cst_38 : f32 to vector<6x32xf32>
    %110 = arith.subf %109, %103 : vector<6x32xf32>
    %111 = arith.mulf %110, %108 : vector<6x32xf32>
    %112 = arith.mulf %103, %81 : vector<6x32xf32>
    %113 = arith.addf %111, %112 : vector<6x32xf32>
    %114 = vector.extract_strided_slice %16 {offsets = [18, 0], sizes = [6, 96], strides = [1, 1]} : vector<30x96xf32> to vector<6x96xf32>
    %115 = arith.truncf %113 : vector<6x32xf32> to vector<6x32xbf16>
    %cst_39 = arith.constant dense<0.000000e+00> : vector<6x96xf32>
    %116 = tpu.matmul %115, %6, %cst_39 {dimension_numbers = #tpu.dot_dimension_numbers<[1], [0], [0], [1], [0, 0, 1, 1], [], []>} : vector<6x32xbf16>, vector<32x96xbf16>, vector<6x96xf32> -> vector<6x96xf32>
    %117 = arith.addf %116, %12 : vector<6x96xf32>
    %118 = vector.extract_strided_slice %114 {offsets = [0, 0], sizes = [6, 32], strides = [1, 1]} : vector<6x96xf32> to vector<6x32xf32>
    %119 = vector.extract_strided_slice %117 {offsets = [0, 0], sizes = [6, 32], strides = [1, 1]} : vector<6x96xf32> to vector<6x32xf32>
    %120 = arith.addf %118, %119 : vector<6x32xf32>
    %cst_40 = arith.constant 0.000000e+00 : f32
    %121 = vector.broadcast %cst_40 : f32 to vector<6x32xf32>
    %122 = arith.subf %121, %120 : vector<6x32xf32>
    %123 = math.exp %122 : vector<6x32xf32>
    %cst_41 = arith.constant 1.000000e+00 : f32
    %124 = vector.broadcast %cst_41 : f32 to vector<6x32xf32>
    %125 = arith.addf %124, %123 : vector<6x32xf32>
    %126 = tpu.reciprocal %125 {approx = true} : vector<6x32xf32> -> vector<6x32xf32>
    %127 = vector.extract_strided_slice %114 {offsets = [0, 32], sizes = [6, 32], strides = [1, 1]} : vector<6x96xf32> to vector<6x32xf32>
    %128 = vector.extract_strided_slice %117 {offsets = [0, 32], sizes = [6, 32], strides = [1, 1]} : vector<6x96xf32> to vector<6x32xf32>
    %129 = arith.addf %127, %128 : vector<6x32xf32>
    %cst_42 = arith.constant 0.000000e+00 : f32
    %130 = vector.broadcast %cst_42 : f32 to vector<6x32xf32>
    %131 = arith.subf %130, %129 : vector<6x32xf32>
    %132 = math.exp %131 : vector<6x32xf32>
    %cst_43 = arith.constant 1.000000e+00 : f32
    %133 = vector.broadcast %cst_43 : f32 to vector<6x32xf32>
    %134 = arith.addf %133, %132 : vector<6x32xf32>
    %135 = tpu.reciprocal %134 {approx = true} : vector<6x32xf32> -> vector<6x32xf32>
    %136 = vector.extract_strided_slice %114 {offsets = [0, 64], sizes = [6, 32], strides = [1, 1]} : vector<6x96xf32> to vector<6x32xf32>
    %137 = vector.extract_strided_slice %117 {offsets = [0, 64], sizes = [6, 32], strides = [1, 1]} : vector<6x96xf32> to vector<6x32xf32>
    %138 = arith.mulf %126, %137 : vector<6x32xf32>
    %139 = arith.addf %136, %138 : vector<6x32xf32>
    %140 = math.tanh %139 : vector<6x32xf32>
    %cst_44 = arith.constant 1.000000e+00 : f32
    %141 = vector.broadcast %cst_44 : f32 to vector<6x32xf32>
    %142 = arith.subf %141, %135 : vector<6x32xf32>
    %143 = arith.mulf %142, %140 : vector<6x32xf32>
    %144 = arith.mulf %135, %113 : vector<6x32xf32>
    %145 = arith.addf %143, %144 : vector<6x32xf32>
    %146 = vector.extract_strided_slice %16 {offsets = [24, 0], sizes = [6, 96], strides = [1, 1]} : vector<30x96xf32> to vector<6x96xf32>
    %147 = arith.truncf %145 : vector<6x32xf32> to vector<6x32xbf16>
    %cst_45 = arith.constant dense<0.000000e+00> : vector<6x96xf32>
    %148 = tpu.matmul %147, %6, %cst_45 {dimension_numbers = #tpu.dot_dimension_numbers<[1], [0], [0], [1], [0, 0, 1, 1], [], []>} : vector<6x32xbf16>, vector<32x96xbf16>, vector<6x96xf32> -> vector<6x96xf32>
    %149 = arith.addf %148, %12 : vector<6x96xf32>
    %150 = vector.extract_strided_slice %146 {offsets = [0, 0], sizes = [6, 32], strides = [1, 1]} : vector<6x96xf32> to vector<6x32xf32>
    %151 = vector.extract_strided_slice %149 {offsets = [0, 0], sizes = [6, 32], strides = [1, 1]} : vector<6x96xf32> to vector<6x32xf32>
    %152 = arith.addf %150, %151 : vector<6x32xf32>
    %cst_46 = arith.constant 0.000000e+00 : f32
    %153 = vector.broadcast %cst_46 : f32 to vector<6x32xf32>
    %154 = arith.subf %153, %152 : vector<6x32xf32>
    %155 = math.exp %154 : vector<6x32xf32>
    %cst_47 = arith.constant 1.000000e+00 : f32
    %156 = vector.broadcast %cst_47 : f32 to vector<6x32xf32>
    %157 = arith.addf %156, %155 : vector<6x32xf32>
    %158 = tpu.reciprocal %157 {approx = true} : vector<6x32xf32> -> vector<6x32xf32>
    %159 = vector.extract_strided_slice %146 {offsets = [0, 32], sizes = [6, 32], strides = [1, 1]} : vector<6x96xf32> to vector<6x32xf32>
    %160 = vector.extract_strided_slice %149 {offsets = [0, 32], sizes = [6, 32], strides = [1, 1]} : vector<6x96xf32> to vector<6x32xf32>
    %161 = arith.addf %159, %160 : vector<6x32xf32>
    %cst_48 = arith.constant 0.000000e+00 : f32
    %162 = vector.broadcast %cst_48 : f32 to vector<6x32xf32>
    %163 = arith.subf %162, %161 : vector<6x32xf32>
    %164 = math.exp %163 : vector<6x32xf32>
    %cst_49 = arith.constant 1.000000e+00 : f32
    %165 = vector.broadcast %cst_49 : f32 to vector<6x32xf32>
    %166 = arith.addf %165, %164 : vector<6x32xf32>
    %167 = tpu.reciprocal %166 {approx = true} : vector<6x32xf32> -> vector<6x32xf32>
    %168 = vector.extract_strided_slice %146 {offsets = [0, 64], sizes = [6, 32], strides = [1, 1]} : vector<6x96xf32> to vector<6x32xf32>
    %169 = vector.extract_strided_slice %149 {offsets = [0, 64], sizes = [6, 32], strides = [1, 1]} : vector<6x96xf32> to vector<6x32xf32>
    %170 = arith.mulf %158, %169 : vector<6x32xf32>
    %171 = arith.addf %168, %170 : vector<6x32xf32>
    %172 = math.tanh %171 : vector<6x32xf32>
    %cst_50 = arith.constant 1.000000e+00 : f32
    %173 = vector.broadcast %cst_50 : f32 to vector<6x32xf32>
    %174 = arith.subf %173, %167 : vector<6x32xf32>
    %175 = arith.mulf %174, %172 : vector<6x32xf32>
    %176 = arith.mulf %167, %145 : vector<6x32xf32>
    %177 = arith.addf %175, %176 : vector<6x32xf32>
    %178 = tpu.concatenate %49, %81, %113, %145, %177 in 0 : vector<6x32xf32>, vector<6x32xf32>, vector<6x32xf32>, vector<6x32xf32>, vector<6x32xf32> -> vector<30x32xf32>
    %c0_51 = arith.constant 0 : index
    %c1_52 = arith.constant 1 : index
    %c0_53 = arith.constant 0 : index
    %c0_54 = arith.constant 0 : index
    %179 = vector.load %arg4[%c0_51, %c1_52, %c0_53, %c0_54] : memref<3x2x32x96xbf16, #tpu.memory_space<vmem>>, vector<1x1x32x96xbf16>
    %180 = vector.shape_cast %179 : vector<1x1x32x96xbf16> to vector<32x96xbf16>
    %c0_55 = arith.constant 0 : index
    %c1_56 = arith.constant 1 : index
    %c0_57 = arith.constant 0 : index
    %c0_58 = arith.constant 0 : index
    %181 = vector.load %arg5[%c0_55, %c1_56, %c0_57, %c0_58] : memref<3x2x32x96xbf16, #tpu.memory_space<vmem>>, vector<1x1x32x96xbf16>
    %182 = vector.shape_cast %181 : vector<1x1x32x96xbf16> to vector<32x96xbf16>
    %c0_59 = arith.constant 0 : index
    %c1_60 = arith.constant 1 : index
    %c0_61 = arith.constant 0 : index
    %c0_62 = arith.constant 0 : index
    %c0_63 = arith.constant 0 : index
    %183 = vector.load %arg6[%c0_59, %c1_60, %c0_61, %c0_62, %c0_63] : memref<3x2x2x1x96xf32, #tpu.memory_space<vmem>>, vector<1x1x1x1x96xf32>
    %184 = vector.shape_cast %183 : vector<1x1x1x1x96xf32> to vector<1x96xf32>
    %c0_64 = arith.constant 0 : index
    %c1_65 = arith.constant 1 : index
    %c1_66 = arith.constant 1 : index
    %c0_67 = arith.constant 0 : index
    %c0_68 = arith.constant 0 : index
    %185 = vector.load %arg6[%c0_64, %c1_65, %c1_66, %c0_67, %c0_68] : memref<3x2x2x1x96xf32, #tpu.memory_space<vmem>>, vector<1x1x1x1x96xf32>
    %186 = vector.shape_cast %185 : vector<1x1x1x1x96xf32> to vector<1x96xf32>
    %187 = vector.shape_cast %186 : vector<1x96xf32> to vector<1x96xf32>
    %188 = vector.broadcast %187 : vector<1x96xf32> to vector<6x96xf32>
    %189 = arith.truncf %178 : vector<30x32xf32> to vector<30x32xbf16>
    %cst_69 = arith.constant dense<0.000000e+00> : vector<30x96xf32>
    %190 = tpu.matmul %189, %180, %cst_69 {dimension_numbers = #tpu.dot_dimension_numbers<[1], [0], [0], [1], [0, 0, 1, 1], [], []>} : vector<30x32xbf16>, vector<32x96xbf16>, vector<30x96xf32> -> vector<30x96xf32>
    %191 = vector.broadcast %184 : vector<1x96xf32> to vector<30x96xf32>
    %192 = arith.addf %190, %191 : vector<30x96xf32>
    %cst_70 = arith.constant 0.000000e+00 : f32
    %193 = vector.broadcast %cst_70 : f32 to vector<6x32xf32>
    %194 = vector.extract_strided_slice %192 {offsets = [0, 0], sizes = [6, 96], strides = [1, 1]} : vector<30x96xf32> to vector<6x96xf32>
    %195 = arith.truncf %193 : vector<6x32xf32> to vector<6x32xbf16>
    %cst_71 = arith.constant dense<0.000000e+00> : vector<6x96xf32>
    %196 = tpu.matmul %195, %182, %cst_71 {dimension_numbers = #tpu.dot_dimension_numbers<[1], [0], [0], [1], [0, 0, 1, 1], [], []>} : vector<6x32xbf16>, vector<32x96xbf16>, vector<6x96xf32> -> vector<6x96xf32>
    %197 = arith.addf %196, %188 : vector<6x96xf32>
    %198 = vector.extract_strided_slice %194 {offsets = [0, 0], sizes = [6, 32], strides = [1, 1]} : vector<6x96xf32> to vector<6x32xf32>
    %199 = vector.extract_strided_slice %197 {offsets = [0, 0], sizes = [6, 32], strides = [1, 1]} : vector<6x96xf32> to vector<6x32xf32>
    %200 = arith.addf %198, %199 : vector<6x32xf32>
    %cst_72 = arith.constant 0.000000e+00 : f32
    %201 = vector.broadcast %cst_72 : f32 to vector<6x32xf32>
    %202 = arith.subf %201, %200 : vector<6x32xf32>
    %203 = math.exp %202 : vector<6x32xf32>
    %cst_73 = arith.constant 1.000000e+00 : f32
    %204 = vector.broadcast %cst_73 : f32 to vector<6x32xf32>
    %205 = arith.addf %204, %203 : vector<6x32xf32>
    %206 = tpu.reciprocal %205 {approx = true} : vector<6x32xf32> -> vector<6x32xf32>
    %207 = vector.extract_strided_slice %194 {offsets = [0, 32], sizes = [6, 32], strides = [1, 1]} : vector<6x96xf32> to vector<6x32xf32>
    %208 = vector.extract_strided_slice %197 {offsets = [0, 32], sizes = [6, 32], strides = [1, 1]} : vector<6x96xf32> to vector<6x32xf32>
    %209 = arith.addf %207, %208 : vector<6x32xf32>
    %cst_74 = arith.constant 0.000000e+00 : f32
    %210 = vector.broadcast %cst_74 : f32 to vector<6x32xf32>
    %211 = arith.subf %210, %209 : vector<6x32xf32>
    %212 = math.exp %211 : vector<6x32xf32>
    %cst_75 = arith.constant 1.000000e+00 : f32
    %213 = vector.broadcast %cst_75 : f32 to vector<6x32xf32>
    %214 = arith.addf %213, %212 : vector<6x32xf32>
    %215 = tpu.reciprocal %214 {approx = true} : vector<6x32xf32> -> vector<6x32xf32>
    %216 = vector.extract_strided_slice %194 {offsets = [0, 64], sizes = [6, 32], strides = [1, 1]} : vector<6x96xf32> to vector<6x32xf32>
    %217 = vector.extract_strided_slice %197 {offsets = [0, 64], sizes = [6, 32], strides = [1, 1]} : vector<6x96xf32> to vector<6x32xf32>
    %218 = arith.mulf %206, %217 : vector<6x32xf32>
    %219 = arith.addf %216, %218 : vector<6x32xf32>
    %220 = math.tanh %219 : vector<6x32xf32>
    %cst_76 = arith.constant 1.000000e+00 : f32
    %221 = vector.broadcast %cst_76 : f32 to vector<6x32xf32>
    %222 = arith.subf %221, %215 : vector<6x32xf32>
    %223 = arith.mulf %222, %220 : vector<6x32xf32>
    %224 = arith.mulf %215, %193 : vector<6x32xf32>
    %225 = arith.addf %223, %224 : vector<6x32xf32>
    %226 = vector.extract_strided_slice %192 {offsets = [6, 0], sizes = [6, 96], strides = [1, 1]} : vector<30x96xf32> to vector<6x96xf32>
    %227 = arith.truncf %225 : vector<6x32xf32> to vector<6x32xbf16>
    %cst_77 = arith.constant dense<0.000000e+00> : vector<6x96xf32>
    %228 = tpu.matmul %227, %182, %cst_77 {dimension_numbers = #tpu.dot_dimension_numbers<[1], [0], [0], [1], [0, 0, 1, 1], [], []>} : vector<6x32xbf16>, vector<32x96xbf16>, vector<6x96xf32> -> vector<6x96xf32>
    %229 = arith.addf %228, %188 : vector<6x96xf32>
    %230 = vector.extract_strided_slice %226 {offsets = [0, 0], sizes = [6, 32], strides = [1, 1]} : vector<6x96xf32> to vector<6x32xf32>
    %231 = vector.extract_strided_slice %229 {offsets = [0, 0], sizes = [6, 32], strides = [1, 1]} : vector<6x96xf32> to vector<6x32xf32>
    %232 = arith.addf %230, %231 : vector<6x32xf32>
    %cst_78 = arith.constant 0.000000e+00 : f32
    %233 = vector.broadcast %cst_78 : f32 to vector<6x32xf32>
    %234 = arith.subf %233, %232 : vector<6x32xf32>
    %235 = math.exp %234 : vector<6x32xf32>
    %cst_79 = arith.constant 1.000000e+00 : f32
    %236 = vector.broadcast %cst_79 : f32 to vector<6x32xf32>
    %237 = arith.addf %236, %235 : vector<6x32xf32>
    %238 = tpu.reciprocal %237 {approx = true} : vector<6x32xf32> -> vector<6x32xf32>
    %239 = vector.extract_strided_slice %226 {offsets = [0, 32], sizes = [6, 32], strides = [1, 1]} : vector<6x96xf32> to vector<6x32xf32>
    %240 = vector.extract_strided_slice %229 {offsets = [0, 32], sizes = [6, 32], strides = [1, 1]} : vector<6x96xf32> to vector<6x32xf32>
    %241 = arith.addf %239, %240 : vector<6x32xf32>
    %cst_80 = arith.constant 0.000000e+00 : f32
    %242 = vector.broadcast %cst_80 : f32 to vector<6x32xf32>
    %243 = arith.subf %242, %241 : vector<6x32xf32>
    %244 = math.exp %243 : vector<6x32xf32>
    %cst_81 = arith.constant 1.000000e+00 : f32
    %245 = vector.broadcast %cst_81 : f32 to vector<6x32xf32>
    %246 = arith.addf %245, %244 : vector<6x32xf32>
    %247 = tpu.reciprocal %246 {approx = true} : vector<6x32xf32> -> vector<6x32xf32>
    %248 = vector.extract_strided_slice %226 {offsets = [0, 64], sizes = [6, 32], strides = [1, 1]} : vector<6x96xf32> to vector<6x32xf32>
    %249 = vector.extract_strided_slice %229 {offsets = [0, 64], sizes = [6, 32], strides = [1, 1]} : vector<6x96xf32> to vector<6x32xf32>
    %250 = arith.mulf %238, %249 : vector<6x32xf32>
    %251 = arith.addf %248, %250 : vector<6x32xf32>
    %252 = math.tanh %251 : vector<6x32xf32>
    %cst_82 = arith.constant 1.000000e+00 : f32
    %253 = vector.broadcast %cst_82 : f32 to vector<6x32xf32>
    %254 = arith.subf %253, %247 : vector<6x32xf32>
    %255 = arith.mulf %254, %252 : vector<6x32xf32>
    %256 = arith.mulf %247, %225 : vector<6x32xf32>
    %257 = arith.addf %255, %256 : vector<6x32xf32>
    %258 = vector.extract_strided_slice %192 {offsets = [12, 0], sizes = [6, 96], strides = [1, 1]} : vector<30x96xf32> to vector<6x96xf32>
    %259 = arith.truncf %257 : vector<6x32xf32> to vector<6x32xbf16>
    %cst_83 = arith.constant dense<0.000000e+00> : vector<6x96xf32>
    %260 = tpu.matmul %259, %182, %cst_83 {dimension_numbers = #tpu.dot_dimension_numbers<[1], [0], [0], [1], [0, 0, 1, 1], [], []>} : vector<6x32xbf16>, vector<32x96xbf16>, vector<6x96xf32> -> vector<6x96xf32>
    %261 = arith.addf %260, %188 : vector<6x96xf32>
    %262 = vector.extract_strided_slice %258 {offsets = [0, 0], sizes = [6, 32], strides = [1, 1]} : vector<6x96xf32> to vector<6x32xf32>
    %263 = vector.extract_strided_slice %261 {offsets = [0, 0], sizes = [6, 32], strides = [1, 1]} : vector<6x96xf32> to vector<6x32xf32>
    %264 = arith.addf %262, %263 : vector<6x32xf32>
    %cst_84 = arith.constant 0.000000e+00 : f32
    %265 = vector.broadcast %cst_84 : f32 to vector<6x32xf32>
    %266 = arith.subf %265, %264 : vector<6x32xf32>
    %267 = math.exp %266 : vector<6x32xf32>
    %cst_85 = arith.constant 1.000000e+00 : f32
    %268 = vector.broadcast %cst_85 : f32 to vector<6x32xf32>
    %269 = arith.addf %268, %267 : vector<6x32xf32>
    %270 = tpu.reciprocal %269 {approx = true} : vector<6x32xf32> -> vector<6x32xf32>
    %271 = vector.extract_strided_slice %258 {offsets = [0, 32], sizes = [6, 32], strides = [1, 1]} : vector<6x96xf32> to vector<6x32xf32>
    %272 = vector.extract_strided_slice %261 {offsets = [0, 32], sizes = [6, 32], strides = [1, 1]} : vector<6x96xf32> to vector<6x32xf32>
    %273 = arith.addf %271, %272 : vector<6x32xf32>
    %cst_86 = arith.constant 0.000000e+00 : f32
    %274 = vector.broadcast %cst_86 : f32 to vector<6x32xf32>
    %275 = arith.subf %274, %273 : vector<6x32xf32>
    %276 = math.exp %275 : vector<6x32xf32>
    %cst_87 = arith.constant 1.000000e+00 : f32
    %277 = vector.broadcast %cst_87 : f32 to vector<6x32xf32>
    %278 = arith.addf %277, %276 : vector<6x32xf32>
    %279 = tpu.reciprocal %278 {approx = true} : vector<6x32xf32> -> vector<6x32xf32>
    %280 = vector.extract_strided_slice %258 {offsets = [0, 64], sizes = [6, 32], strides = [1, 1]} : vector<6x96xf32> to vector<6x32xf32>
    %281 = vector.extract_strided_slice %261 {offsets = [0, 64], sizes = [6, 32], strides = [1, 1]} : vector<6x96xf32> to vector<6x32xf32>
    %282 = arith.mulf %270, %281 : vector<6x32xf32>
    %283 = arith.addf %280, %282 : vector<6x32xf32>
    %284 = math.tanh %283 : vector<6x32xf32>
    %cst_88 = arith.constant 1.000000e+00 : f32
    %285 = vector.broadcast %cst_88 : f32 to vector<6x32xf32>
    %286 = arith.subf %285, %279 : vector<6x32xf32>
    %287 = arith.mulf %286, %284 : vector<6x32xf32>
    %288 = arith.mulf %279, %257 : vector<6x32xf32>
    %289 = arith.addf %287, %288 : vector<6x32xf32>
    %290 = vector.extract_strided_slice %192 {offsets = [18, 0], sizes = [6, 96], strides = [1, 1]} : vector<30x96xf32> to vector<6x96xf32>
    %291 = arith.truncf %289 : vector<6x32xf32> to vector<6x32xbf16>
    %cst_89 = arith.constant dense<0.000000e+00> : vector<6x96xf32>
    %292 = tpu.matmul %291, %182, %cst_89 {dimension_numbers = #tpu.dot_dimension_numbers<[1], [0], [0], [1], [0, 0, 1, 1], [], []>} : vector<6x32xbf16>, vector<32x96xbf16>, vector<6x96xf32> -> vector<6x96xf32>
    %293 = arith.addf %292, %188 : vector<6x96xf32>
    %294 = vector.extract_strided_slice %290 {offsets = [0, 0], sizes = [6, 32], strides = [1, 1]} : vector<6x96xf32> to vector<6x32xf32>
    %295 = vector.extract_strided_slice %293 {offsets = [0, 0], sizes = [6, 32], strides = [1, 1]} : vector<6x96xf32> to vector<6x32xf32>
    %296 = arith.addf %294, %295 : vector<6x32xf32>
    %cst_90 = arith.constant 0.000000e+00 : f32
    %297 = vector.broadcast %cst_90 : f32 to vector<6x32xf32>
    %298 = arith.subf %297, %296 : vector<6x32xf32>
    %299 = math.exp %298 : vector<6x32xf32>
    %cst_91 = arith.constant 1.000000e+00 : f32
    %300 = vector.broadcast %cst_91 : f32 to vector<6x32xf32>
    %301 = arith.addf %300, %299 : vector<6x32xf32>
    %302 = tpu.reciprocal %301 {approx = true} : vector<6x32xf32> -> vector<6x32xf32>
    %303 = vector.extract_strided_slice %290 {offsets = [0, 32], sizes = [6, 32], strides = [1, 1]} : vector<6x96xf32> to vector<6x32xf32>
    %304 = vector.extract_strided_slice %293 {offsets = [0, 32], sizes = [6, 32], strides = [1, 1]} : vector<6x96xf32> to vector<6x32xf32>
    %305 = arith.addf %303, %304 : vector<6x32xf32>
    %cst_92 = arith.constant 0.000000e+00 : f32
    %306 = vector.broadcast %cst_92 : f32 to vector<6x32xf32>
    %307 = arith.subf %306, %305 : vector<6x32xf32>
    %308 = math.exp %307 : vector<6x32xf32>
    %cst_93 = arith.constant 1.000000e+00 : f32
    %309 = vector.broadcast %cst_93 : f32 to vector<6x32xf32>
    %310 = arith.addf %309, %308 : vector<6x32xf32>
    %311 = tpu.reciprocal %310 {approx = true} : vector<6x32xf32> -> vector<6x32xf32>
    %312 = vector.extract_strided_slice %290 {offsets = [0, 64], sizes = [6, 32], strides = [1, 1]} : vector<6x96xf32> to vector<6x32xf32>
    %313 = vector.extract_strided_slice %293 {offsets = [0, 64], sizes = [6, 32], strides = [1, 1]} : vector<6x96xf32> to vector<6x32xf32>
    %314 = arith.mulf %302, %313 : vector<6x32xf32>
    %315 = arith.addf %312, %314 : vector<6x32xf32>
    %316 = math.tanh %315 : vector<6x32xf32>
    %cst_94 = arith.constant 1.000000e+00 : f32
    %317 = vector.broadcast %cst_94 : f32 to vector<6x32xf32>
    %318 = arith.subf %317, %311 : vector<6x32xf32>
    %319 = arith.mulf %318, %316 : vector<6x32xf32>
    %320 = arith.mulf %311, %289 : vector<6x32xf32>
    %321 = arith.addf %319, %320 : vector<6x32xf32>
    %322 = vector.extract_strided_slice %192 {offsets = [24, 0], sizes = [6, 96], strides = [1, 1]} : vector<30x96xf32> to vector<6x96xf32>
    %323 = arith.truncf %321 : vector<6x32xf32> to vector<6x32xbf16>
    %cst_95 = arith.constant dense<0.000000e+00> : vector<6x96xf32>
    %324 = tpu.matmul %323, %182, %cst_95 {dimension_numbers = #tpu.dot_dimension_numbers<[1], [0], [0], [1], [0, 0, 1, 1], [], []>} : vector<6x32xbf16>, vector<32x96xbf16>, vector<6x96xf32> -> vector<6x96xf32>
    %325 = arith.addf %324, %188 : vector<6x96xf32>
    %326 = vector.extract_strided_slice %322 {offsets = [0, 0], sizes = [6, 32], strides = [1, 1]} : vector<6x96xf32> to vector<6x32xf32>
    %327 = vector.extract_strided_slice %325 {offsets = [0, 0], sizes = [6, 32], strides = [1, 1]} : vector<6x96xf32> to vector<6x32xf32>
    %328 = arith.addf %326, %327 : vector<6x32xf32>
    %cst_96 = arith.constant 0.000000e+00 : f32
    %329 = vector.broadcast %cst_96 : f32 to vector<6x32xf32>
    %330 = arith.subf %329, %328 : vector<6x32xf32>
    %331 = math.exp %330 : vector<6x32xf32>
    %cst_97 = arith.constant 1.000000e+00 : f32
    %332 = vector.broadcast %cst_97 : f32 to vector<6x32xf32>
    %333 = arith.addf %332, %331 : vector<6x32xf32>
    %334 = tpu.reciprocal %333 {approx = true} : vector<6x32xf32> -> vector<6x32xf32>
    %335 = vector.extract_strided_slice %322 {offsets = [0, 32], sizes = [6, 32], strides = [1, 1]} : vector<6x96xf32> to vector<6x32xf32>
    %336 = vector.extract_strided_slice %325 {offsets = [0, 32], sizes = [6, 32], strides = [1, 1]} : vector<6x96xf32> to vector<6x32xf32>
    %337 = arith.addf %335, %336 : vector<6x32xf32>
    %cst_98 = arith.constant 0.000000e+00 : f32
    %338 = vector.broadcast %cst_98 : f32 to vector<6x32xf32>
    %339 = arith.subf %338, %337 : vector<6x32xf32>
    %340 = math.exp %339 : vector<6x32xf32>
    %cst_99 = arith.constant 1.000000e+00 : f32
    %341 = vector.broadcast %cst_99 : f32 to vector<6x32xf32>
    %342 = arith.addf %341, %340 : vector<6x32xf32>
    %343 = tpu.reciprocal %342 {approx = true} : vector<6x32xf32> -> vector<6x32xf32>
    %344 = vector.extract_strided_slice %322 {offsets = [0, 64], sizes = [6, 32], strides = [1, 1]} : vector<6x96xf32> to vector<6x32xf32>
    %345 = vector.extract_strided_slice %325 {offsets = [0, 64], sizes = [6, 32], strides = [1, 1]} : vector<6x96xf32> to vector<6x32xf32>
    %346 = arith.mulf %334, %345 : vector<6x32xf32>
    %347 = arith.addf %344, %346 : vector<6x32xf32>
    %348 = math.tanh %347 : vector<6x32xf32>
    %cst_100 = arith.constant 1.000000e+00 : f32
    %349 = vector.broadcast %cst_100 : f32 to vector<6x32xf32>
    %350 = arith.subf %349, %343 : vector<6x32xf32>
    %351 = arith.mulf %350, %348 : vector<6x32xf32>
    %352 = arith.mulf %343, %321 : vector<6x32xf32>
    %353 = arith.addf %351, %352 : vector<6x32xf32>
    %c2_i32 = arith.constant 2 : i32
    %354 = vector.broadcast %c2_i32 : i32 to vector<6x1xi32>
    %355 = arith.cmpi eq, %2, %354 : vector<6x1xi32>
    %356 = vector.shape_cast %355 : vector<6x1xi1> to vector<6x1xi1>
    %357 = vector.broadcast %356 : vector<6x1xi1> to vector<6x32xi1>
    %358 = arith.select %357, %257, %225 : vector<6x32xi1>, vector<6x32xf32>
    %c3_i32 = arith.constant 3 : i32
    %359 = vector.broadcast %c3_i32 : i32 to vector<6x1xi32>
    %360 = arith.cmpi eq, %2, %359 : vector<6x1xi32>
    %361 = vector.shape_cast %360 : vector<6x1xi1> to vector<6x1xi1>
    %362 = vector.broadcast %361 : vector<6x1xi1> to vector<6x32xi1>
    %363 = arith.select %362, %289, %358 : vector<6x32xi1>, vector<6x32xf32>
    %c4_i32 = arith.constant 4 : i32
    %364 = vector.broadcast %c4_i32 : i32 to vector<6x1xi32>
    %365 = arith.cmpi eq, %2, %364 : vector<6x1xi32>
    %366 = vector.shape_cast %365 : vector<6x1xi1> to vector<6x1xi1>
    %367 = vector.broadcast %366 : vector<6x1xi1> to vector<6x32xi1>
    %368 = arith.select %367, %321, %363 : vector<6x32xi1>, vector<6x32xf32>
    %c5_i32 = arith.constant 5 : i32
    %369 = vector.broadcast %c5_i32 : i32 to vector<6x1xi32>
    %370 = arith.cmpi eq, %2, %369 : vector<6x1xi32>
    %371 = vector.shape_cast %370 : vector<6x1xi1> to vector<6x1xi1>
    %372 = vector.broadcast %371 : vector<6x1xi1> to vector<6x32xi1>
    %373 = arith.select %372, %353, %368 : vector<6x32xi1>, vector<6x32xf32>
    %c0_101 = arith.constant 0 : index
    %c0_102 = arith.constant 0 : index
    %c0_103 = arith.constant 0 : index
    %374 = vector.load %arg2[%c0_101, %c0_102, %c0_103] : memref<2x10x32xf32, #tpu.memory_space<vmem>>, vector<1x10x32xf32>
    %375 = vector.shape_cast %374 : vector<1x10x32xf32> to vector<10x32xf32>
    %376 = vector.extract_strided_slice %0 {offsets = [6, 0], sizes = [2, 1], strides = [1, 1]} : vector<10x1xi32> to vector<2x1xi32>
    %c1_104 = arith.constant 1 : index
    %c0_105 = arith.constant 0 : index
    %c0_106 = arith.constant 0 : index
    %c0_107 = arith.constant 0 : index
    %377 = vector.load %arg4[%c1_104, %c0_105, %c0_106, %c0_107] : memref<3x2x32x96xbf16, #tpu.memory_space<vmem>>, vector<1x1x32x96xbf16>
    %378 = vector.shape_cast %377 : vector<1x1x32x96xbf16> to vector<32x96xbf16>
    %c1_108 = arith.constant 1 : index
    %c0_109 = arith.constant 0 : index
    %c0_110 = arith.constant 0 : index
    %c0_111 = arith.constant 0 : index
    %379 = vector.load %arg5[%c1_108, %c0_109, %c0_110, %c0_111] : memref<3x2x32x96xbf16, #tpu.memory_space<vmem>>, vector<1x1x32x96xbf16>
    %380 = vector.shape_cast %379 : vector<1x1x32x96xbf16> to vector<32x96xbf16>
    %c1_112 = arith.constant 1 : index
    %c0_113 = arith.constant 0 : index
    %c0_114 = arith.constant 0 : index
    %c0_115 = arith.constant 0 : index
    %c0_116 = arith.constant 0 : index
    %381 = vector.load %arg6[%c1_112, %c0_113, %c0_114, %c0_115, %c0_116] : memref<3x2x2x1x96xf32, #tpu.memory_space<vmem>>, vector<1x1x1x1x96xf32>
    %382 = vector.shape_cast %381 : vector<1x1x1x1x96xf32> to vector<1x96xf32>
    %c1_117 = arith.constant 1 : index
    %c0_118 = arith.constant 0 : index
    %c1_119 = arith.constant 1 : index
    %c0_120 = arith.constant 0 : index
    %c0_121 = arith.constant 0 : index
    %383 = vector.load %arg6[%c1_117, %c0_118, %c1_119, %c0_120, %c0_121] : memref<3x2x2x1x96xf32, #tpu.memory_space<vmem>>, vector<1x1x1x1x96xf32>
    %384 = vector.shape_cast %383 : vector<1x1x1x1x96xf32> to vector<1x96xf32>
    %385 = vector.shape_cast %384 : vector<1x96xf32> to vector<1x96xf32>
    %386 = vector.broadcast %385 : vector<1x96xf32> to vector<2x96xf32>
    %387 = arith.truncf %375 : vector<10x32xf32> to vector<10x32xbf16>
    %cst_122 = arith.constant dense<0.000000e+00> : vector<10x96xf32>
    %388 = tpu.matmul %387, %378, %cst_122 {dimension_numbers = #tpu.dot_dimension_numbers<[1], [0], [0], [1], [0, 0, 1, 1], [], []>} : vector<10x32xbf16>, vector<32x96xbf16>, vector<10x96xf32> -> vector<10x96xf32>
    %389 = vector.broadcast %382 : vector<1x96xf32> to vector<10x96xf32>
    %390 = arith.addf %388, %389 : vector<10x96xf32>
    %cst_123 = arith.constant 0.000000e+00 : f32
    %391 = vector.broadcast %cst_123 : f32 to vector<2x32xf32>
    %392 = vector.extract_strided_slice %390 {offsets = [0, 0], sizes = [2, 96], strides = [1, 1]} : vector<10x96xf32> to vector<2x96xf32>
    %393 = arith.truncf %391 : vector<2x32xf32> to vector<2x32xbf16>
    %cst_124 = arith.constant dense<0.000000e+00> : vector<2x96xf32>
    %394 = tpu.matmul %393, %380, %cst_124 {dimension_numbers = #tpu.dot_dimension_numbers<[1], [0], [0], [1], [0, 0, 1, 1], [], []>} : vector<2x32xbf16>, vector<32x96xbf16>, vector<2x96xf32> -> vector<2x96xf32>
    %395 = arith.addf %394, %386 : vector<2x96xf32>
    %396 = vector.extract_strided_slice %392 {offsets = [0, 0], sizes = [2, 32], strides = [1, 1]} : vector<2x96xf32> to vector<2x32xf32>
    %397 = vector.extract_strided_slice %395 {offsets = [0, 0], sizes = [2, 32], strides = [1, 1]} : vector<2x96xf32> to vector<2x32xf32>
    %398 = arith.addf %396, %397 : vector<2x32xf32>
    %cst_125 = arith.constant 0.000000e+00 : f32
    %399 = vector.broadcast %cst_125 : f32 to vector<2x32xf32>
    %400 = arith.subf %399, %398 : vector<2x32xf32>
    %401 = math.exp %400 : vector<2x32xf32>
    %cst_126 = arith.constant 1.000000e+00 : f32
    %402 = vector.broadcast %cst_126 : f32 to vector<2x32xf32>
    %403 = arith.addf %402, %401 : vector<2x32xf32>
    %404 = tpu.reciprocal %403 {approx = true} : vector<2x32xf32> -> vector<2x32xf32>
    %405 = vector.extract_strided_slice %392 {offsets = [0, 32], sizes = [2, 32], strides = [1, 1]} : vector<2x96xf32> to vector<2x32xf32>
    %406 = vector.extract_strided_slice %395 {offsets = [0, 32], sizes = [2, 32], strides = [1, 1]} : vector<2x96xf32> to vector<2x32xf32>
    %407 = arith.addf %405, %406 : vector<2x32xf32>
    %cst_127 = arith.constant 0.000000e+00 : f32
    %408 = vector.broadcast %cst_127 : f32 to vector<2x32xf32>
    %409 = arith.subf %408, %407 : vector<2x32xf32>
    %410 = math.exp %409 : vector<2x32xf32>
    %cst_128 = arith.constant 1.000000e+00 : f32
    %411 = vector.broadcast %cst_128 : f32 to vector<2x32xf32>
    %412 = arith.addf %411, %410 : vector<2x32xf32>
    %413 = tpu.reciprocal %412 {approx = true} : vector<2x32xf32> -> vector<2x32xf32>
    %414 = vector.extract_strided_slice %392 {offsets = [0, 64], sizes = [2, 32], strides = [1, 1]} : vector<2x96xf32> to vector<2x32xf32>
    %415 = vector.extract_strided_slice %395 {offsets = [0, 64], sizes = [2, 32], strides = [1, 1]} : vector<2x96xf32> to vector<2x32xf32>
    %416 = arith.mulf %404, %415 : vector<2x32xf32>
    %417 = arith.addf %414, %416 : vector<2x32xf32>
    %418 = math.tanh %417 : vector<2x32xf32>
    %cst_129 = arith.constant 1.000000e+00 : f32
    %419 = vector.broadcast %cst_129 : f32 to vector<2x32xf32>
    %420 = arith.subf %419, %413 : vector<2x32xf32>
    %421 = arith.mulf %420, %418 : vector<2x32xf32>
    %422 = arith.mulf %413, %391 : vector<2x32xf32>
    %423 = arith.addf %421, %422 : vector<2x32xf32>
    %424 = vector.extract_strided_slice %390 {offsets = [2, 0], sizes = [2, 96], strides = [1, 1]} : vector<10x96xf32> to vector<2x96xf32>
    %425 = arith.truncf %423 : vector<2x32xf32> to vector<2x32xbf16>
    %cst_130 = arith.constant dense<0.000000e+00> : vector<2x96xf32>
    %426 = tpu.matmul %425, %380, %cst_130 {dimension_numbers = #tpu.dot_dimension_numbers<[1], [0], [0], [1], [0, 0, 1, 1], [], []>} : vector<2x32xbf16>, vector<32x96xbf16>, vector<2x96xf32> -> vector<2x96xf32>
    %427 = arith.addf %426, %386 : vector<2x96xf32>
    %428 = vector.extract_strided_slice %424 {offsets = [0, 0], sizes = [2, 32], strides = [1, 1]} : vector<2x96xf32> to vector<2x32xf32>
    %429 = vector.extract_strided_slice %427 {offsets = [0, 0], sizes = [2, 32], strides = [1, 1]} : vector<2x96xf32> to vector<2x32xf32>
    %430 = arith.addf %428, %429 : vector<2x32xf32>
    %cst_131 = arith.constant 0.000000e+00 : f32
    %431 = vector.broadcast %cst_131 : f32 to vector<2x32xf32>
    %432 = arith.subf %431, %430 : vector<2x32xf32>
    %433 = math.exp %432 : vector<2x32xf32>
    %cst_132 = arith.constant 1.000000e+00 : f32
    %434 = vector.broadcast %cst_132 : f32 to vector<2x32xf32>
    %435 = arith.addf %434, %433 : vector<2x32xf32>
    %436 = tpu.reciprocal %435 {approx = true} : vector<2x32xf32> -> vector<2x32xf32>
    %437 = vector.extract_strided_slice %424 {offsets = [0, 32], sizes = [2, 32], strides = [1, 1]} : vector<2x96xf32> to vector<2x32xf32>
    %438 = vector.extract_strided_slice %427 {offsets = [0, 32], sizes = [2, 32], strides = [1, 1]} : vector<2x96xf32> to vector<2x32xf32>
    %439 = arith.addf %437, %438 : vector<2x32xf32>
    %cst_133 = arith.constant 0.000000e+00 : f32
    %440 = vector.broadcast %cst_133 : f32 to vector<2x32xf32>
    %441 = arith.subf %440, %439 : vector<2x32xf32>
    %442 = math.exp %441 : vector<2x32xf32>
    %cst_134 = arith.constant 1.000000e+00 : f32
    %443 = vector.broadcast %cst_134 : f32 to vector<2x32xf32>
    %444 = arith.addf %443, %442 : vector<2x32xf32>
    %445 = tpu.reciprocal %444 {approx = true} : vector<2x32xf32> -> vector<2x32xf32>
    %446 = vector.extract_strided_slice %424 {offsets = [0, 64], sizes = [2, 32], strides = [1, 1]} : vector<2x96xf32> to vector<2x32xf32>
    %447 = vector.extract_strided_slice %427 {offsets = [0, 64], sizes = [2, 32], strides = [1, 1]} : vector<2x96xf32> to vector<2x32xf32>
    %448 = arith.mulf %436, %447 : vector<2x32xf32>
    %449 = arith.addf %446, %448 : vector<2x32xf32>
    %450 = math.tanh %449 : vector<2x32xf32>
    %cst_135 = arith.constant 1.000000e+00 : f32
    %451 = vector.broadcast %cst_135 : f32 to vector<2x32xf32>
    %452 = arith.subf %451, %445 : vector<2x32xf32>
    %453 = arith.mulf %452, %450 : vector<2x32xf32>
    %454 = arith.mulf %445, %423 : vector<2x32xf32>
    %455 = arith.addf %453, %454 : vector<2x32xf32>
    %456 = vector.extract_strided_slice %390 {offsets = [4, 0], sizes = [2, 96], strides = [1, 1]} : vector<10x96xf32> to vector<2x96xf32>
    %457 = arith.truncf %455 : vector<2x32xf32> to vector<2x32xbf16>
    %cst_136 = arith.constant dense<0.000000e+00> : vector<2x96xf32>
    %458 = tpu.matmul %457, %380, %cst_136 {dimension_numbers = #tpu.dot_dimension_numbers<[1], [0], [0], [1], [0, 0, 1, 1], [], []>} : vector<2x32xbf16>, vector<32x96xbf16>, vector<2x96xf32> -> vector<2x96xf32>
    %459 = arith.addf %458, %386 : vector<2x96xf32>
    %460 = vector.extract_strided_slice %456 {offsets = [0, 0], sizes = [2, 32], strides = [1, 1]} : vector<2x96xf32> to vector<2x32xf32>
    %461 = vector.extract_strided_slice %459 {offsets = [0, 0], sizes = [2, 32], strides = [1, 1]} : vector<2x96xf32> to vector<2x32xf32>
    %462 = arith.addf %460, %461 : vector<2x32xf32>
    %cst_137 = arith.constant 0.000000e+00 : f32
    %463 = vector.broadcast %cst_137 : f32 to vector<2x32xf32>
    %464 = arith.subf %463, %462 : vector<2x32xf32>
    %465 = math.exp %464 : vector<2x32xf32>
    %cst_138 = arith.constant 1.000000e+00 : f32
    %466 = vector.broadcast %cst_138 : f32 to vector<2x32xf32>
    %467 = arith.addf %466, %465 : vector<2x32xf32>
    %468 = tpu.reciprocal %467 {approx = true} : vector<2x32xf32> -> vector<2x32xf32>
    %469 = vector.extract_strided_slice %456 {offsets = [0, 32], sizes = [2, 32], strides = [1, 1]} : vector<2x96xf32> to vector<2x32xf32>
    %470 = vector.extract_strided_slice %459 {offsets = [0, 32], sizes = [2, 32], strides = [1, 1]} : vector<2x96xf32> to vector<2x32xf32>
    %471 = arith.addf %469, %470 : vector<2x32xf32>
    %cst_139 = arith.constant 0.000000e+00 : f32
    %472 = vector.broadcast %cst_139 : f32 to vector<2x32xf32>
    %473 = arith.subf %472, %471 : vector<2x32xf32>
    %474 = math.exp %473 : vector<2x32xf32>
    %cst_140 = arith.constant 1.000000e+00 : f32
    %475 = vector.broadcast %cst_140 : f32 to vector<2x32xf32>
    %476 = arith.addf %475, %474 : vector<2x32xf32>
    %477 = tpu.reciprocal %476 {approx = true} : vector<2x32xf32> -> vector<2x32xf32>
    %478 = vector.extract_strided_slice %456 {offsets = [0, 64], sizes = [2, 32], strides = [1, 1]} : vector<2x96xf32> to vector<2x32xf32>
    %479 = vector.extract_strided_slice %459 {offsets = [0, 64], sizes = [2, 32], strides = [1, 1]} : vector<2x96xf32> to vector<2x32xf32>
    %480 = arith.mulf %468, %479 : vector<2x32xf32>
    %481 = arith.addf %478, %480 : vector<2x32xf32>
    %482 = math.tanh %481 : vector<2x32xf32>
    %cst_141 = arith.constant 1.000000e+00 : f32
    %483 = vector.broadcast %cst_141 : f32 to vector<2x32xf32>
    %484 = arith.subf %483, %477 : vector<2x32xf32>
    %485 = arith.mulf %484, %482 : vector<2x32xf32>
    %486 = arith.mulf %477, %455 : vector<2x32xf32>
    %487 = arith.addf %485, %486 : vector<2x32xf32>
    %488 = vector.extract_strided_slice %390 {offsets = [6, 0], sizes = [2, 96], strides = [1, 1]} : vector<10x96xf32> to vector<2x96xf32>
    %489 = arith.truncf %487 : vector<2x32xf32> to vector<2x32xbf16>
    %cst_142 = arith.constant dense<0.000000e+00> : vector<2x96xf32>
    %490 = tpu.matmul %489, %380, %cst_142 {dimension_numbers = #tpu.dot_dimension_numbers<[1], [0], [0], [1], [0, 0, 1, 1], [], []>} : vector<2x32xbf16>, vector<32x96xbf16>, vector<2x96xf32> -> vector<2x96xf32>
    %491 = arith.addf %490, %386 : vector<2x96xf32>
    %492 = vector.extract_strided_slice %488 {offsets = [0, 0], sizes = [2, 32], strides = [1, 1]} : vector<2x96xf32> to vector<2x32xf32>
    %493 = vector.extract_strided_slice %491 {offsets = [0, 0], sizes = [2, 32], strides = [1, 1]} : vector<2x96xf32> to vector<2x32xf32>
    %494 = arith.addf %492, %493 : vector<2x32xf32>
    %cst_143 = arith.constant 0.000000e+00 : f32
    %495 = vector.broadcast %cst_143 : f32 to vector<2x32xf32>
    %496 = arith.subf %495, %494 : vector<2x32xf32>
    %497 = math.exp %496 : vector<2x32xf32>
    %cst_144 = arith.constant 1.000000e+00 : f32
    %498 = vector.broadcast %cst_144 : f32 to vector<2x32xf32>
    %499 = arith.addf %498, %497 : vector<2x32xf32>
    %500 = tpu.reciprocal %499 {approx = true} : vector<2x32xf32> -> vector<2x32xf32>
    %501 = vector.extract_strided_slice %488 {offsets = [0, 32], sizes = [2, 32], strides = [1, 1]} : vector<2x96xf32> to vector<2x32xf32>
    %502 = vector.extract_strided_slice %491 {offsets = [0, 32], sizes = [2, 32], strides = [1, 1]} : vector<2x96xf32> to vector<2x32xf32>
    %503 = arith.addf %501, %502 : vector<2x32xf32>
    %cst_145 = arith.constant 0.000000e+00 : f32
    %504 = vector.broadcast %cst_145 : f32 to vector<2x32xf32>
    %505 = arith.subf %504, %503 : vector<2x32xf32>
    %506 = math.exp %505 : vector<2x32xf32>
    %cst_146 = arith.constant 1.000000e+00 : f32
    %507 = vector.broadcast %cst_146 : f32 to vector<2x32xf32>
    %508 = arith.addf %507, %506 : vector<2x32xf32>
    %509 = tpu.reciprocal %508 {approx = true} : vector<2x32xf32> -> vector<2x32xf32>
    %510 = vector.extract_strided_slice %488 {offsets = [0, 64], sizes = [2, 32], strides = [1, 1]} : vector<2x96xf32> to vector<2x32xf32>
    %511 = vector.extract_strided_slice %491 {offsets = [0, 64], sizes = [2, 32], strides = [1, 1]} : vector<2x96xf32> to vector<2x32xf32>
    %512 = arith.mulf %500, %511 : vector<2x32xf32>
    %513 = arith.addf %510, %512 : vector<2x32xf32>
    %514 = math.tanh %513 : vector<2x32xf32>
    %cst_147 = arith.constant 1.000000e+00 : f32
    %515 = vector.broadcast %cst_147 : f32 to vector<2x32xf32>
    %516 = arith.subf %515, %509 : vector<2x32xf32>
    %517 = arith.mulf %516, %514 : vector<2x32xf32>
    %518 = arith.mulf %509, %487 : vector<2x32xf32>
    %519 = arith.addf %517, %518 : vector<2x32xf32>
    %520 = vector.extract_strided_slice %390 {offsets = [8, 0], sizes = [2, 96], strides = [1, 1]} : vector<10x96xf32> to vector<2x96xf32>
    %521 = arith.truncf %519 : vector<2x32xf32> to vector<2x32xbf16>
    %cst_148 = arith.constant dense<0.000000e+00> : vector<2x96xf32>
    %522 = tpu.matmul %521, %380, %cst_148 {dimension_numbers = #tpu.dot_dimension_numbers<[1], [0], [0], [1], [0, 0, 1, 1], [], []>} : vector<2x32xbf16>, vector<32x96xbf16>, vector<2x96xf32> -> vector<2x96xf32>
    %523 = arith.addf %522, %386 : vector<2x96xf32>
    %524 = vector.extract_strided_slice %520 {offsets = [0, 0], sizes = [2, 32], strides = [1, 1]} : vector<2x96xf32> to vector<2x32xf32>
    %525 = vector.extract_strided_slice %523 {offsets = [0, 0], sizes = [2, 32], strides = [1, 1]} : vector<2x96xf32> to vector<2x32xf32>
    %526 = arith.addf %524, %525 : vector<2x32xf32>
    %cst_149 = arith.constant 0.000000e+00 : f32
    %527 = vector.broadcast %cst_149 : f32 to vector<2x32xf32>
    %528 = arith.subf %527, %526 : vector<2x32xf32>
    %529 = math.exp %528 : vector<2x32xf32>
    %cst_150 = arith.constant 1.000000e+00 : f32
    %530 = vector.broadcast %cst_150 : f32 to vector<2x32xf32>
    %531 = arith.addf %530, %529 : vector<2x32xf32>
    %532 = tpu.reciprocal %531 {approx = true} : vector<2x32xf32> -> vector<2x32xf32>
    %533 = vector.extract_strided_slice %520 {offsets = [0, 32], sizes = [2, 32], strides = [1, 1]} : vector<2x96xf32> to vector<2x32xf32>
    %534 = vector.extract_strided_slice %523 {offsets = [0, 32], sizes = [2, 32], strides = [1, 1]} : vector<2x96xf32> to vector<2x32xf32>
    %535 = arith.addf %533, %534 : vector<2x32xf32>
    %cst_151 = arith.constant 0.000000e+00 : f32
    %536 = vector.broadcast %cst_151 : f32 to vector<2x32xf32>
    %537 = arith.subf %536, %535 : vector<2x32xf32>
    %538 = math.exp %537 : vector<2x32xf32>
    %cst_152 = arith.constant 1.000000e+00 : f32
    %539 = vector.broadcast %cst_152 : f32 to vector<2x32xf32>
    %540 = arith.addf %539, %538 : vector<2x32xf32>
    %541 = tpu.reciprocal %540 {approx = true} : vector<2x32xf32> -> vector<2x32xf32>
    %542 = vector.extract_strided_slice %520 {offsets = [0, 64], sizes = [2, 32], strides = [1, 1]} : vector<2x96xf32> to vector<2x32xf32>
    %543 = vector.extract_strided_slice %523 {offsets = [0, 64], sizes = [2, 32], strides = [1, 1]} : vector<2x96xf32> to vector<2x32xf32>
    %544 = arith.mulf %532, %543 : vector<2x32xf32>
    %545 = arith.addf %542, %544 : vector<2x32xf32>
    %546 = math.tanh %545 : vector<2x32xf32>
    %cst_153 = arith.constant 1.000000e+00 : f32
    %547 = vector.broadcast %cst_153 : f32 to vector<2x32xf32>
    %548 = arith.subf %547, %541 : vector<2x32xf32>
    %549 = arith.mulf %548, %546 : vector<2x32xf32>
    %550 = arith.mulf %541, %519 : vector<2x32xf32>
    %551 = arith.addf %549, %550 : vector<2x32xf32>
    %552 = tpu.concatenate %423, %455, %487, %519, %551 in 0 : vector<2x32xf32>, vector<2x32xf32>, vector<2x32xf32>, vector<2x32xf32>, vector<2x32xf32> -> vector<10x32xf32>
    %c1_154 = arith.constant 1 : index
    %c1_155 = arith.constant 1 : index
    %c0_156 = arith.constant 0 : index
    %c0_157 = arith.constant 0 : index
    %553 = vector.load %arg4[%c1_154, %c1_155, %c0_156, %c0_157] : memref<3x2x32x96xbf16, #tpu.memory_space<vmem>>, vector<1x1x32x96xbf16>
    %554 = vector.shape_cast %553 : vector<1x1x32x96xbf16> to vector<32x96xbf16>
    %c1_158 = arith.constant 1 : index
    %c1_159 = arith.constant 1 : index
    %c0_160 = arith.constant 0 : index
    %c0_161 = arith.constant 0 : index
    %555 = vector.load %arg5[%c1_158, %c1_159, %c0_160, %c0_161] : memref<3x2x32x96xbf16, #tpu.memory_space<vmem>>, vector<1x1x32x96xbf16>
    %556 = vector.shape_cast %555 : vector<1x1x32x96xbf16> to vector<32x96xbf16>
    %c1_162 = arith.constant 1 : index
    %c1_163 = arith.constant 1 : index
    %c0_164 = arith.constant 0 : index
    %c0_165 = arith.constant 0 : index
    %c0_166 = arith.constant 0 : index
    %557 = vector.load %arg6[%c1_162, %c1_163, %c0_164, %c0_165, %c0_166] : memref<3x2x2x1x96xf32, #tpu.memory_space<vmem>>, vector<1x1x1x1x96xf32>
    %558 = vector.shape_cast %557 : vector<1x1x1x1x96xf32> to vector<1x96xf32>
    %c1_167 = arith.constant 1 : index
    %c1_168 = arith.constant 1 : index
    %c1_169 = arith.constant 1 : index
    %c0_170 = arith.constant 0 : index
    %c0_171 = arith.constant 0 : index
    %559 = vector.load %arg6[%c1_167, %c1_168, %c1_169, %c0_170, %c0_171] : memref<3x2x2x1x96xf32, #tpu.memory_space<vmem>>, vector<1x1x1x1x96xf32>
    %560 = vector.shape_cast %559 : vector<1x1x1x1x96xf32> to vector<1x96xf32>
    %561 = vector.shape_cast %560 : vector<1x96xf32> to vector<1x96xf32>
    %562 = vector.broadcast %561 : vector<1x96xf32> to vector<2x96xf32>
    %563 = arith.truncf %552 : vector<10x32xf32> to vector<10x32xbf16>
    %cst_172 = arith.constant dense<0.000000e+00> : vector<10x96xf32>
    %564 = tpu.matmul %563, %554, %cst_172 {dimension_numbers = #tpu.dot_dimension_numbers<[1], [0], [0], [1], [0, 0, 1, 1], [], []>} : vector<10x32xbf16>, vector<32x96xbf16>, vector<10x96xf32> -> vector<10x96xf32>
    %565 = vector.broadcast %558 : vector<1x96xf32> to vector<10x96xf32>
    %566 = arith.addf %564, %565 : vector<10x96xf32>
    %cst_173 = arith.constant 0.000000e+00 : f32
    %567 = vector.broadcast %cst_173 : f32 to vector<2x32xf32>
    %568 = vector.extract_strided_slice %566 {offsets = [0, 0], sizes = [2, 96], strides = [1, 1]} : vector<10x96xf32> to vector<2x96xf32>
    %569 = arith.truncf %567 : vector<2x32xf32> to vector<2x32xbf16>
    %cst_174 = arith.constant dense<0.000000e+00> : vector<2x96xf32>
    %570 = tpu.matmul %569, %556, %cst_174 {dimension_numbers = #tpu.dot_dimension_numbers<[1], [0], [0], [1], [0, 0, 1, 1], [], []>} : vector<2x32xbf16>, vector<32x96xbf16>, vector<2x96xf32> -> vector<2x96xf32>
    %571 = arith.addf %570, %562 : vector<2x96xf32>
    %572 = vector.extract_strided_slice %568 {offsets = [0, 0], sizes = [2, 32], strides = [1, 1]} : vector<2x96xf32> to vector<2x32xf32>
    %573 = vector.extract_strided_slice %571 {offsets = [0, 0], sizes = [2, 32], strides = [1, 1]} : vector<2x96xf32> to vector<2x32xf32>
    %574 = arith.addf %572, %573 : vector<2x32xf32>
    %cst_175 = arith.constant 0.000000e+00 : f32
    %575 = vector.broadcast %cst_175 : f32 to vector<2x32xf32>
    %576 = arith.subf %575, %574 : vector<2x32xf32>
    %577 = math.exp %576 : vector<2x32xf32>
    %cst_176 = arith.constant 1.000000e+00 : f32
    %578 = vector.broadcast %cst_176 : f32 to vector<2x32xf32>
    %579 = arith.addf %578, %577 : vector<2x32xf32>
    %580 = tpu.reciprocal %579 {approx = true} : vector<2x32xf32> -> vector<2x32xf32>
    %581 = vector.extract_strided_slice %568 {offsets = [0, 32], sizes = [2, 32], strides = [1, 1]} : vector<2x96xf32> to vector<2x32xf32>
    %582 = vector.extract_strided_slice %571 {offsets = [0, 32], sizes = [2, 32], strides = [1, 1]} : vector<2x96xf32> to vector<2x32xf32>
    %583 = arith.addf %581, %582 : vector<2x32xf32>
    %cst_177 = arith.constant 0.000000e+00 : f32
    %584 = vector.broadcast %cst_177 : f32 to vector<2x32xf32>
    %585 = arith.subf %584, %583 : vector<2x32xf32>
    %586 = math.exp %585 : vector<2x32xf32>
    %cst_178 = arith.constant 1.000000e+00 : f32
    %587 = vector.broadcast %cst_178 : f32 to vector<2x32xf32>
    %588 = arith.addf %587, %586 : vector<2x32xf32>
    %589 = tpu.reciprocal %588 {approx = true} : vector<2x32xf32> -> vector<2x32xf32>
    %590 = vector.extract_strided_slice %568 {offsets = [0, 64], sizes = [2, 32], strides = [1, 1]} : vector<2x96xf32> to vector<2x32xf32>
    %591 = vector.extract_strided_slice %571 {offsets = [0, 64], sizes = [2, 32], strides = [1, 1]} : vector<2x96xf32> to vector<2x32xf32>
    %592 = arith.mulf %580, %591 : vector<2x32xf32>
    %593 = arith.addf %590, %592 : vector<2x32xf32>
    %594 = math.tanh %593 : vector<2x32xf32>
    %cst_179 = arith.constant 1.000000e+00 : f32
    %595 = vector.broadcast %cst_179 : f32 to vector<2x32xf32>
    %596 = arith.subf %595, %589 : vector<2x32xf32>
    %597 = arith.mulf %596, %594 : vector<2x32xf32>
    %598 = arith.mulf %589, %567 : vector<2x32xf32>
    %599 = arith.addf %597, %598 : vector<2x32xf32>
    %600 = vector.extract_strided_slice %566 {offsets = [2, 0], sizes = [2, 96], strides = [1, 1]} : vector<10x96xf32> to vector<2x96xf32>
    %601 = arith.truncf %599 : vector<2x32xf32> to vector<2x32xbf16>
    %cst_180 = arith.constant dense<0.000000e+00> : vector<2x96xf32>
    %602 = tpu.matmul %601, %556, %cst_180 {dimension_numbers = #tpu.dot_dimension_numbers<[1], [0], [0], [1], [0, 0, 1, 1], [], []>} : vector<2x32xbf16>, vector<32x96xbf16>, vector<2x96xf32> -> vector<2x96xf32>
    %603 = arith.addf %602, %562 : vector<2x96xf32>
    %604 = vector.extract_strided_slice %600 {offsets = [0, 0], sizes = [2, 32], strides = [1, 1]} : vector<2x96xf32> to vector<2x32xf32>
    %605 = vector.extract_strided_slice %603 {offsets = [0, 0], sizes = [2, 32], strides = [1, 1]} : vector<2x96xf32> to vector<2x32xf32>
    %606 = arith.addf %604, %605 : vector<2x32xf32>
    %cst_181 = arith.constant 0.000000e+00 : f32
    %607 = vector.broadcast %cst_181 : f32 to vector<2x32xf32>
    %608 = arith.subf %607, %606 : vector<2x32xf32>
    %609 = math.exp %608 : vector<2x32xf32>
    %cst_182 = arith.constant 1.000000e+00 : f32
    %610 = vector.broadcast %cst_182 : f32 to vector<2x32xf32>
    %611 = arith.addf %610, %609 : vector<2x32xf32>
    %612 = tpu.reciprocal %611 {approx = true} : vector<2x32xf32> -> vector<2x32xf32>
    %613 = vector.extract_strided_slice %600 {offsets = [0, 32], sizes = [2, 32], strides = [1, 1]} : vector<2x96xf32> to vector<2x32xf32>
    %614 = vector.extract_strided_slice %603 {offsets = [0, 32], sizes = [2, 32], strides = [1, 1]} : vector<2x96xf32> to vector<2x32xf32>
    %615 = arith.addf %613, %614 : vector<2x32xf32>
    %cst_183 = arith.constant 0.000000e+00 : f32
    %616 = vector.broadcast %cst_183 : f32 to vector<2x32xf32>
    %617 = arith.subf %616, %615 : vector<2x32xf32>
    %618 = math.exp %617 : vector<2x32xf32>
    %cst_184 = arith.constant 1.000000e+00 : f32
    %619 = vector.broadcast %cst_184 : f32 to vector<2x32xf32>
    %620 = arith.addf %619, %618 : vector<2x32xf32>
    %621 = tpu.reciprocal %620 {approx = true} : vector<2x32xf32> -> vector<2x32xf32>
    %622 = vector.extract_strided_slice %600 {offsets = [0, 64], sizes = [2, 32], strides = [1, 1]} : vector<2x96xf32> to vector<2x32xf32>
    %623 = vector.extract_strided_slice %603 {offsets = [0, 64], sizes = [2, 32], strides = [1, 1]} : vector<2x96xf32> to vector<2x32xf32>
    %624 = arith.mulf %612, %623 : vector<2x32xf32>
    %625 = arith.addf %622, %624 : vector<2x32xf32>
    %626 = math.tanh %625 : vector<2x32xf32>
    %cst_185 = arith.constant 1.000000e+00 : f32
    %627 = vector.broadcast %cst_185 : f32 to vector<2x32xf32>
    %628 = arith.subf %627, %621 : vector<2x32xf32>
    %629 = arith.mulf %628, %626 : vector<2x32xf32>
    %630 = arith.mulf %621, %599 : vector<2x32xf32>
    %631 = arith.addf %629, %630 : vector<2x32xf32>
    %632 = vector.extract_strided_slice %566 {offsets = [4, 0], sizes = [2, 96], strides = [1, 1]} : vector<10x96xf32> to vector<2x96xf32>
    %633 = arith.truncf %631 : vector<2x32xf32> to vector<2x32xbf16>
    %cst_186 = arith.constant dense<0.000000e+00> : vector<2x96xf32>
    %634 = tpu.matmul %633, %556, %cst_186 {dimension_numbers = #tpu.dot_dimension_numbers<[1], [0], [0], [1], [0, 0, 1, 1], [], []>} : vector<2x32xbf16>, vector<32x96xbf16>, vector<2x96xf32> -> vector<2x96xf32>
    %635 = arith.addf %634, %562 : vector<2x96xf32>
    %636 = vector.extract_strided_slice %632 {offsets = [0, 0], sizes = [2, 32], strides = [1, 1]} : vector<2x96xf32> to vector<2x32xf32>
    %637 = vector.extract_strided_slice %635 {offsets = [0, 0], sizes = [2, 32], strides = [1, 1]} : vector<2x96xf32> to vector<2x32xf32>
    %638 = arith.addf %636, %637 : vector<2x32xf32>
    %cst_187 = arith.constant 0.000000e+00 : f32
    %639 = vector.broadcast %cst_187 : f32 to vector<2x32xf32>
    %640 = arith.subf %639, %638 : vector<2x32xf32>
    %641 = math.exp %640 : vector<2x32xf32>
    %cst_188 = arith.constant 1.000000e+00 : f32
    %642 = vector.broadcast %cst_188 : f32 to vector<2x32xf32>
    %643 = arith.addf %642, %641 : vector<2x32xf32>
    %644 = tpu.reciprocal %643 {approx = true} : vector<2x32xf32> -> vector<2x32xf32>
    %645 = vector.extract_strided_slice %632 {offsets = [0, 32], sizes = [2, 32], strides = [1, 1]} : vector<2x96xf32> to vector<2x32xf32>
    %646 = vector.extract_strided_slice %635 {offsets = [0, 32], sizes = [2, 32], strides = [1, 1]} : vector<2x96xf32> to vector<2x32xf32>
    %647 = arith.addf %645, %646 : vector<2x32xf32>
    %cst_189 = arith.constant 0.000000e+00 : f32
    %648 = vector.broadcast %cst_189 : f32 to vector<2x32xf32>
    %649 = arith.subf %648, %647 : vector<2x32xf32>
    %650 = math.exp %649 : vector<2x32xf32>
    %cst_190 = arith.constant 1.000000e+00 : f32
    %651 = vector.broadcast %cst_190 : f32 to vector<2x32xf32>
    %652 = arith.addf %651, %650 : vector<2x32xf32>
    %653 = tpu.reciprocal %652 {approx = true} : vector<2x32xf32> -> vector<2x32xf32>
    %654 = vector.extract_strided_slice %632 {offsets = [0, 64], sizes = [2, 32], strides = [1, 1]} : vector<2x96xf32> to vector<2x32xf32>
    %655 = vector.extract_strided_slice %635 {offsets = [0, 64], sizes = [2, 32], strides = [1, 1]} : vector<2x96xf32> to vector<2x32xf32>
    %656 = arith.mulf %644, %655 : vector<2x32xf32>
    %657 = arith.addf %654, %656 : vector<2x32xf32>
    %658 = math.tanh %657 : vector<2x32xf32>
    %cst_191 = arith.constant 1.000000e+00 : f32
    %659 = vector.broadcast %cst_191 : f32 to vector<2x32xf32>
    %660 = arith.subf %659, %653 : vector<2x32xf32>
    %661 = arith.mulf %660, %658 : vector<2x32xf32>
    %662 = arith.mulf %653, %631 : vector<2x32xf32>
    %663 = arith.addf %661, %662 : vector<2x32xf32>
    %664 = vector.extract_strided_slice %566 {offsets = [6, 0], sizes = [2, 96], strides = [1, 1]} : vector<10x96xf32> to vector<2x96xf32>
    %665 = arith.truncf %663 : vector<2x32xf32> to vector<2x32xbf16>
    %cst_192 = arith.constant dense<0.000000e+00> : vector<2x96xf32>
    %666 = tpu.matmul %665, %556, %cst_192 {dimension_numbers = #tpu.dot_dimension_numbers<[1], [0], [0], [1], [0, 0, 1, 1], [], []>} : vector<2x32xbf16>, vector<32x96xbf16>, vector<2x96xf32> -> vector<2x96xf32>
    %667 = arith.addf %666, %562 : vector<2x96xf32>
    %668 = vector.extract_strided_slice %664 {offsets = [0, 0], sizes = [2, 32], strides = [1, 1]} : vector<2x96xf32> to vector<2x32xf32>
    %669 = vector.extract_strided_slice %667 {offsets = [0, 0], sizes = [2, 32], strides = [1, 1]} : vector<2x96xf32> to vector<2x32xf32>
    %670 = arith.addf %668, %669 : vector<2x32xf32>
    %cst_193 = arith.constant 0.000000e+00 : f32
    %671 = vector.broadcast %cst_193 : f32 to vector<2x32xf32>
    %672 = arith.subf %671, %670 : vector<2x32xf32>
    %673 = math.exp %672 : vector<2x32xf32>
    %cst_194 = arith.constant 1.000000e+00 : f32
    %674 = vector.broadcast %cst_194 : f32 to vector<2x32xf32>
    %675 = arith.addf %674, %673 : vector<2x32xf32>
    %676 = tpu.reciprocal %675 {approx = true} : vector<2x32xf32> -> vector<2x32xf32>
    %677 = vector.extract_strided_slice %664 {offsets = [0, 32], sizes = [2, 32], strides = [1, 1]} : vector<2x96xf32> to vector<2x32xf32>
    %678 = vector.extract_strided_slice %667 {offsets = [0, 32], sizes = [2, 32], strides = [1, 1]} : vector<2x96xf32> to vector<2x32xf32>
    %679 = arith.addf %677, %678 : vector<2x32xf32>
    %cst_195 = arith.constant 0.000000e+00 : f32
    %680 = vector.broadcast %cst_195 : f32 to vector<2x32xf32>
    %681 = arith.subf %680, %679 : vector<2x32xf32>
    %682 = math.exp %681 : vector<2x32xf32>
    %cst_196 = arith.constant 1.000000e+00 : f32
    %683 = vector.broadcast %cst_196 : f32 to vector<2x32xf32>
    %684 = arith.addf %683, %682 : vector<2x32xf32>
    %685 = tpu.reciprocal %684 {approx = true} : vector<2x32xf32> -> vector<2x32xf32>
    %686 = vector.extract_strided_slice %664 {offsets = [0, 64], sizes = [2, 32], strides = [1, 1]} : vector<2x96xf32> to vector<2x32xf32>
    %687 = vector.extract_strided_slice %667 {offsets = [0, 64], sizes = [2, 32], strides = [1, 1]} : vector<2x96xf32> to vector<2x32xf32>
    %688 = arith.mulf %676, %687 : vector<2x32xf32>
    %689 = arith.addf %686, %688 : vector<2x32xf32>
    %690 = math.tanh %689 : vector<2x32xf32>
    %cst_197 = arith.constant 1.000000e+00 : f32
    %691 = vector.broadcast %cst_197 : f32 to vector<2x32xf32>
    %692 = arith.subf %691, %685 : vector<2x32xf32>
    %693 = arith.mulf %692, %690 : vector<2x32xf32>
    %694 = arith.mulf %685, %663 : vector<2x32xf32>
    %695 = arith.addf %693, %694 : vector<2x32xf32>
    %696 = vector.extract_strided_slice %566 {offsets = [8, 0], sizes = [2, 96], strides = [1, 1]} : vector<10x96xf32> to vector<2x96xf32>
    %697 = arith.truncf %695 : vector<2x32xf32> to vector<2x32xbf16>
    %cst_198 = arith.constant dense<0.000000e+00> : vector<2x96xf32>
    %698 = tpu.matmul %697, %556, %cst_198 {dimension_numbers = #tpu.dot_dimension_numbers<[1], [0], [0], [1], [0, 0, 1, 1], [], []>} : vector<2x32xbf16>, vector<32x96xbf16>, vector<2x96xf32> -> vector<2x96xf32>
    %699 = arith.addf %698, %562 : vector<2x96xf32>
    %700 = vector.extract_strided_slice %696 {offsets = [0, 0], sizes = [2, 32], strides = [1, 1]} : vector<2x96xf32> to vector<2x32xf32>
    %701 = vector.extract_strided_slice %699 {offsets = [0, 0], sizes = [2, 32], strides = [1, 1]} : vector<2x96xf32> to vector<2x32xf32>
    %702 = arith.addf %700, %701 : vector<2x32xf32>
    %cst_199 = arith.constant 0.000000e+00 : f32
    %703 = vector.broadcast %cst_199 : f32 to vector<2x32xf32>
    %704 = arith.subf %703, %702 : vector<2x32xf32>
    %705 = math.exp %704 : vector<2x32xf32>
    %cst_200 = arith.constant 1.000000e+00 : f32
    %706 = vector.broadcast %cst_200 : f32 to vector<2x32xf32>
    %707 = arith.addf %706, %705 : vector<2x32xf32>
    %708 = tpu.reciprocal %707 {approx = true} : vector<2x32xf32> -> vector<2x32xf32>
    %709 = vector.extract_strided_slice %696 {offsets = [0, 32], sizes = [2, 32], strides = [1, 1]} : vector<2x96xf32> to vector<2x32xf32>
    %710 = vector.extract_strided_slice %699 {offsets = [0, 32], sizes = [2, 32], strides = [1, 1]} : vector<2x96xf32> to vector<2x32xf32>
    %711 = arith.addf %709, %710 : vector<2x32xf32>
    %cst_201 = arith.constant 0.000000e+00 : f32
    %712 = vector.broadcast %cst_201 : f32 to vector<2x32xf32>
    %713 = arith.subf %712, %711 : vector<2x32xf32>
    %714 = math.exp %713 : vector<2x32xf32>
    %cst_202 = arith.constant 1.000000e+00 : f32
    %715 = vector.broadcast %cst_202 : f32 to vector<2x32xf32>
    %716 = arith.addf %715, %714 : vector<2x32xf32>
    %717 = tpu.reciprocal %716 {approx = true} : vector<2x32xf32> -> vector<2x32xf32>
    %718 = vector.extract_strided_slice %696 {offsets = [0, 64], sizes = [2, 32], strides = [1, 1]} : vector<2x96xf32> to vector<2x32xf32>
    %719 = vector.extract_strided_slice %699 {offsets = [0, 64], sizes = [2, 32], strides = [1, 1]} : vector<2x96xf32> to vector<2x32xf32>
    %720 = arith.mulf %708, %719 : vector<2x32xf32>
    %721 = arith.addf %718, %720 : vector<2x32xf32>
    %722 = math.tanh %721 : vector<2x32xf32>
    %cst_203 = arith.constant 1.000000e+00 : f32
    %723 = vector.broadcast %cst_203 : f32 to vector<2x32xf32>
    %724 = arith.subf %723, %717 : vector<2x32xf32>
    %725 = arith.mulf %724, %722 : vector<2x32xf32>
    %726 = arith.mulf %717, %695 : vector<2x32xf32>
    %727 = arith.addf %725, %726 : vector<2x32xf32>
    %c2_i32_204 = arith.constant 2 : i32
    %728 = vector.broadcast %c2_i32_204 : i32 to vector<2x1xi32>
    %729 = arith.cmpi eq, %376, %728 : vector<2x1xi32>
    %730 = vector.shape_cast %729 : vector<2x1xi1> to vector<2x1xi1>
    %731 = vector.broadcast %730 : vector<2x1xi1> to vector<2x32xi1>
    %732 = arith.select %731, %631, %599 : vector<2x32xi1>, vector<2x32xf32>
    %c3_i32_205 = arith.constant 3 : i32
    %733 = vector.broadcast %c3_i32_205 : i32 to vector<2x1xi32>
    %734 = arith.cmpi eq, %376, %733 : vector<2x1xi32>
    %735 = vector.shape_cast %734 : vector<2x1xi1> to vector<2x1xi1>
    %736 = vector.broadcast %735 : vector<2x1xi1> to vector<2x32xi1>
    %737 = arith.select %736, %663, %732 : vector<2x32xi1>, vector<2x32xf32>
    %c4_i32_206 = arith.constant 4 : i32
    %738 = vector.broadcast %c4_i32_206 : i32 to vector<2x1xi32>
    %739 = arith.cmpi eq, %376, %738 : vector<2x1xi32>
    %740 = vector.shape_cast %739 : vector<2x1xi1> to vector<2x1xi1>
    %741 = vector.broadcast %740 : vector<2x1xi1> to vector<2x32xi1>
    %742 = arith.select %741, %695, %737 : vector<2x32xi1>, vector<2x32xf32>
    %c5_i32_207 = arith.constant 5 : i32
    %743 = vector.broadcast %c5_i32_207 : i32 to vector<2x1xi32>
    %744 = arith.cmpi eq, %376, %743 : vector<2x1xi32>
    %745 = vector.shape_cast %744 : vector<2x1xi1> to vector<2x1xi1>
    %746 = vector.broadcast %745 : vector<2x1xi1> to vector<2x32xi1>
    %747 = arith.select %746, %727, %742 : vector<2x32xi1>, vector<2x32xf32>
    %c1_208 = arith.constant 1 : index
    %c0_209 = arith.constant 0 : index
    %c0_210 = arith.constant 0 : index
    %748 = vector.load %arg2[%c1_208, %c0_209, %c0_210] : memref<2x10x32xf32, #tpu.memory_space<vmem>>, vector<1x10x32xf32>
    %749 = vector.shape_cast %748 : vector<1x10x32xf32> to vector<10x32xf32>
    %750 = vector.extract_strided_slice %0 {offsets = [8, 0], sizes = [2, 1], strides = [1, 1]} : vector<10x1xi32> to vector<2x1xi32>
    %c2 = arith.constant 2 : index
    %c0_211 = arith.constant 0 : index
    %c0_212 = arith.constant 0 : index
    %c0_213 = arith.constant 0 : index
    %751 = vector.load %arg4[%c2, %c0_211, %c0_212, %c0_213] : memref<3x2x32x96xbf16, #tpu.memory_space<vmem>>, vector<1x1x32x96xbf16>
    %752 = vector.shape_cast %751 : vector<1x1x32x96xbf16> to vector<32x96xbf16>
    %c2_214 = arith.constant 2 : index
    %c0_215 = arith.constant 0 : index
    %c0_216 = arith.constant 0 : index
    %c0_217 = arith.constant 0 : index
    %753 = vector.load %arg5[%c2_214, %c0_215, %c0_216, %c0_217] : memref<3x2x32x96xbf16, #tpu.memory_space<vmem>>, vector<1x1x32x96xbf16>
    %754 = vector.shape_cast %753 : vector<1x1x32x96xbf16> to vector<32x96xbf16>
    %c2_218 = arith.constant 2 : index
    %c0_219 = arith.constant 0 : index
    %c0_220 = arith.constant 0 : index
    %c0_221 = arith.constant 0 : index
    %c0_222 = arith.constant 0 : index
    %755 = vector.load %arg6[%c2_218, %c0_219, %c0_220, %c0_221, %c0_222] : memref<3x2x2x1x96xf32, #tpu.memory_space<vmem>>, vector<1x1x1x1x96xf32>
    %756 = vector.shape_cast %755 : vector<1x1x1x1x96xf32> to vector<1x96xf32>
    %c2_223 = arith.constant 2 : index
    %c0_224 = arith.constant 0 : index
    %c1_225 = arith.constant 1 : index
    %c0_226 = arith.constant 0 : index
    %c0_227 = arith.constant 0 : index
    %757 = vector.load %arg6[%c2_223, %c0_224, %c1_225, %c0_226, %c0_227] : memref<3x2x2x1x96xf32, #tpu.memory_space<vmem>>, vector<1x1x1x1x96xf32>
    %758 = vector.shape_cast %757 : vector<1x1x1x1x96xf32> to vector<1x96xf32>
    %759 = vector.shape_cast %758 : vector<1x96xf32> to vector<1x96xf32>
    %760 = vector.broadcast %759 : vector<1x96xf32> to vector<2x96xf32>
    %761 = arith.truncf %749 : vector<10x32xf32> to vector<10x32xbf16>
    %cst_228 = arith.constant dense<0.000000e+00> : vector<10x96xf32>
    %762 = tpu.matmul %761, %752, %cst_228 {dimension_numbers = #tpu.dot_dimension_numbers<[1], [0], [0], [1], [0, 0, 1, 1], [], []>} : vector<10x32xbf16>, vector<32x96xbf16>, vector<10x96xf32> -> vector<10x96xf32>
    %763 = vector.broadcast %756 : vector<1x96xf32> to vector<10x96xf32>
    %764 = arith.addf %762, %763 : vector<10x96xf32>
    %cst_229 = arith.constant 0.000000e+00 : f32
    %765 = vector.broadcast %cst_229 : f32 to vector<2x32xf32>
    %766 = vector.extract_strided_slice %764 {offsets = [0, 0], sizes = [2, 96], strides = [1, 1]} : vector<10x96xf32> to vector<2x96xf32>
    %767 = arith.truncf %765 : vector<2x32xf32> to vector<2x32xbf16>
    %cst_230 = arith.constant dense<0.000000e+00> : vector<2x96xf32>
    %768 = tpu.matmul %767, %754, %cst_230 {dimension_numbers = #tpu.dot_dimension_numbers<[1], [0], [0], [1], [0, 0, 1, 1], [], []>} : vector<2x32xbf16>, vector<32x96xbf16>, vector<2x96xf32> -> vector<2x96xf32>
    %769 = arith.addf %768, %760 : vector<2x96xf32>
    %770 = vector.extract_strided_slice %766 {offsets = [0, 0], sizes = [2, 32], strides = [1, 1]} : vector<2x96xf32> to vector<2x32xf32>
    %771 = vector.extract_strided_slice %769 {offsets = [0, 0], sizes = [2, 32], strides = [1, 1]} : vector<2x96xf32> to vector<2x32xf32>
    %772 = arith.addf %770, %771 : vector<2x32xf32>
    %cst_231 = arith.constant 0.000000e+00 : f32
    %773 = vector.broadcast %cst_231 : f32 to vector<2x32xf32>
    %774 = arith.subf %773, %772 : vector<2x32xf32>
    %775 = math.exp %774 : vector<2x32xf32>
    %cst_232 = arith.constant 1.000000e+00 : f32
    %776 = vector.broadcast %cst_232 : f32 to vector<2x32xf32>
    %777 = arith.addf %776, %775 : vector<2x32xf32>
    %778 = tpu.reciprocal %777 {approx = true} : vector<2x32xf32> -> vector<2x32xf32>
    %779 = vector.extract_strided_slice %766 {offsets = [0, 32], sizes = [2, 32], strides = [1, 1]} : vector<2x96xf32> to vector<2x32xf32>
    %780 = vector.extract_strided_slice %769 {offsets = [0, 32], sizes = [2, 32], strides = [1, 1]} : vector<2x96xf32> to vector<2x32xf32>
    %781 = arith.addf %779, %780 : vector<2x32xf32>
    %cst_233 = arith.constant 0.000000e+00 : f32
    %782 = vector.broadcast %cst_233 : f32 to vector<2x32xf32>
    %783 = arith.subf %782, %781 : vector<2x32xf32>
    %784 = math.exp %783 : vector<2x32xf32>
    %cst_234 = arith.constant 1.000000e+00 : f32
    %785 = vector.broadcast %cst_234 : f32 to vector<2x32xf32>
    %786 = arith.addf %785, %784 : vector<2x32xf32>
    %787 = tpu.reciprocal %786 {approx = true} : vector<2x32xf32> -> vector<2x32xf32>
    %788 = vector.extract_strided_slice %766 {offsets = [0, 64], sizes = [2, 32], strides = [1, 1]} : vector<2x96xf32> to vector<2x32xf32>
    %789 = vector.extract_strided_slice %769 {offsets = [0, 64], sizes = [2, 32], strides = [1, 1]} : vector<2x96xf32> to vector<2x32xf32>
    %790 = arith.mulf %778, %789 : vector<2x32xf32>
    %791 = arith.addf %788, %790 : vector<2x32xf32>
    %792 = math.tanh %791 : vector<2x32xf32>
    %cst_235 = arith.constant 1.000000e+00 : f32
    %793 = vector.broadcast %cst_235 : f32 to vector<2x32xf32>
    %794 = arith.subf %793, %787 : vector<2x32xf32>
    %795 = arith.mulf %794, %792 : vector<2x32xf32>
    %796 = arith.mulf %787, %765 : vector<2x32xf32>
    %797 = arith.addf %795, %796 : vector<2x32xf32>
    %798 = vector.extract_strided_slice %764 {offsets = [2, 0], sizes = [2, 96], strides = [1, 1]} : vector<10x96xf32> to vector<2x96xf32>
    %799 = arith.truncf %797 : vector<2x32xf32> to vector<2x32xbf16>
    %cst_236 = arith.constant dense<0.000000e+00> : vector<2x96xf32>
    %800 = tpu.matmul %799, %754, %cst_236 {dimension_numbers = #tpu.dot_dimension_numbers<[1], [0], [0], [1], [0, 0, 1, 1], [], []>} : vector<2x32xbf16>, vector<32x96xbf16>, vector<2x96xf32> -> vector<2x96xf32>
    %801 = arith.addf %800, %760 : vector<2x96xf32>
    %802 = vector.extract_strided_slice %798 {offsets = [0, 0], sizes = [2, 32], strides = [1, 1]} : vector<2x96xf32> to vector<2x32xf32>
    %803 = vector.extract_strided_slice %801 {offsets = [0, 0], sizes = [2, 32], strides = [1, 1]} : vector<2x96xf32> to vector<2x32xf32>
    %804 = arith.addf %802, %803 : vector<2x32xf32>
    %cst_237 = arith.constant 0.000000e+00 : f32
    %805 = vector.broadcast %cst_237 : f32 to vector<2x32xf32>
    %806 = arith.subf %805, %804 : vector<2x32xf32>
    %807 = math.exp %806 : vector<2x32xf32>
    %cst_238 = arith.constant 1.000000e+00 : f32
    %808 = vector.broadcast %cst_238 : f32 to vector<2x32xf32>
    %809 = arith.addf %808, %807 : vector<2x32xf32>
    %810 = tpu.reciprocal %809 {approx = true} : vector<2x32xf32> -> vector<2x32xf32>
    %811 = vector.extract_strided_slice %798 {offsets = [0, 32], sizes = [2, 32], strides = [1, 1]} : vector<2x96xf32> to vector<2x32xf32>
    %812 = vector.extract_strided_slice %801 {offsets = [0, 32], sizes = [2, 32], strides = [1, 1]} : vector<2x96xf32> to vector<2x32xf32>
    %813 = arith.addf %811, %812 : vector<2x32xf32>
    %cst_239 = arith.constant 0.000000e+00 : f32
    %814 = vector.broadcast %cst_239 : f32 to vector<2x32xf32>
    %815 = arith.subf %814, %813 : vector<2x32xf32>
    %816 = math.exp %815 : vector<2x32xf32>
    %cst_240 = arith.constant 1.000000e+00 : f32
    %817 = vector.broadcast %cst_240 : f32 to vector<2x32xf32>
    %818 = arith.addf %817, %816 : vector<2x32xf32>
    %819 = tpu.reciprocal %818 {approx = true} : vector<2x32xf32> -> vector<2x32xf32>
    %820 = vector.extract_strided_slice %798 {offsets = [0, 64], sizes = [2, 32], strides = [1, 1]} : vector<2x96xf32> to vector<2x32xf32>
    %821 = vector.extract_strided_slice %801 {offsets = [0, 64], sizes = [2, 32], strides = [1, 1]} : vector<2x96xf32> to vector<2x32xf32>
    %822 = arith.mulf %810, %821 : vector<2x32xf32>
    %823 = arith.addf %820, %822 : vector<2x32xf32>
    %824 = math.tanh %823 : vector<2x32xf32>
    %cst_241 = arith.constant 1.000000e+00 : f32
    %825 = vector.broadcast %cst_241 : f32 to vector<2x32xf32>
    %826 = arith.subf %825, %819 : vector<2x32xf32>
    %827 = arith.mulf %826, %824 : vector<2x32xf32>
    %828 = arith.mulf %819, %797 : vector<2x32xf32>
    %829 = arith.addf %827, %828 : vector<2x32xf32>
    %830 = vector.extract_strided_slice %764 {offsets = [4, 0], sizes = [2, 96], strides = [1, 1]} : vector<10x96xf32> to vector<2x96xf32>
    %831 = arith.truncf %829 : vector<2x32xf32> to vector<2x32xbf16>
    %cst_242 = arith.constant dense<0.000000e+00> : vector<2x96xf32>
    %832 = tpu.matmul %831, %754, %cst_242 {dimension_numbers = #tpu.dot_dimension_numbers<[1], [0], [0], [1], [0, 0, 1, 1], [], []>} : vector<2x32xbf16>, vector<32x96xbf16>, vector<2x96xf32> -> vector<2x96xf32>
    %833 = arith.addf %832, %760 : vector<2x96xf32>
    %834 = vector.extract_strided_slice %830 {offsets = [0, 0], sizes = [2, 32], strides = [1, 1]} : vector<2x96xf32> to vector<2x32xf32>
    %835 = vector.extract_strided_slice %833 {offsets = [0, 0], sizes = [2, 32], strides = [1, 1]} : vector<2x96xf32> to vector<2x32xf32>
    %836 = arith.addf %834, %835 : vector<2x32xf32>
    %cst_243 = arith.constant 0.000000e+00 : f32
    %837 = vector.broadcast %cst_243 : f32 to vector<2x32xf32>
    %838 = arith.subf %837, %836 : vector<2x32xf32>
    %839 = math.exp %838 : vector<2x32xf32>
    %cst_244 = arith.constant 1.000000e+00 : f32
    %840 = vector.broadcast %cst_244 : f32 to vector<2x32xf32>
    %841 = arith.addf %840, %839 : vector<2x32xf32>
    %842 = tpu.reciprocal %841 {approx = true} : vector<2x32xf32> -> vector<2x32xf32>
    %843 = vector.extract_strided_slice %830 {offsets = [0, 32], sizes = [2, 32], strides = [1, 1]} : vector<2x96xf32> to vector<2x32xf32>
    %844 = vector.extract_strided_slice %833 {offsets = [0, 32], sizes = [2, 32], strides = [1, 1]} : vector<2x96xf32> to vector<2x32xf32>
    %845 = arith.addf %843, %844 : vector<2x32xf32>
    %cst_245 = arith.constant 0.000000e+00 : f32
    %846 = vector.broadcast %cst_245 : f32 to vector<2x32xf32>
    %847 = arith.subf %846, %845 : vector<2x32xf32>
    %848 = math.exp %847 : vector<2x32xf32>
    %cst_246 = arith.constant 1.000000e+00 : f32
    %849 = vector.broadcast %cst_246 : f32 to vector<2x32xf32>
    %850 = arith.addf %849, %848 : vector<2x32xf32>
    %851 = tpu.reciprocal %850 {approx = true} : vector<2x32xf32> -> vector<2x32xf32>
    %852 = vector.extract_strided_slice %830 {offsets = [0, 64], sizes = [2, 32], strides = [1, 1]} : vector<2x96xf32> to vector<2x32xf32>
    %853 = vector.extract_strided_slice %833 {offsets = [0, 64], sizes = [2, 32], strides = [1, 1]} : vector<2x96xf32> to vector<2x32xf32>
    %854 = arith.mulf %842, %853 : vector<2x32xf32>
    %855 = arith.addf %852, %854 : vector<2x32xf32>
    %856 = math.tanh %855 : vector<2x32xf32>
    %cst_247 = arith.constant 1.000000e+00 : f32
    %857 = vector.broadcast %cst_247 : f32 to vector<2x32xf32>
    %858 = arith.subf %857, %851 : vector<2x32xf32>
    %859 = arith.mulf %858, %856 : vector<2x32xf32>
    %860 = arith.mulf %851, %829 : vector<2x32xf32>
    %861 = arith.addf %859, %860 : vector<2x32xf32>
    %862 = vector.extract_strided_slice %764 {offsets = [6, 0], sizes = [2, 96], strides = [1, 1]} : vector<10x96xf32> to vector<2x96xf32>
    %863 = arith.truncf %861 : vector<2x32xf32> to vector<2x32xbf16>
    %cst_248 = arith.constant dense<0.000000e+00> : vector<2x96xf32>
    %864 = tpu.matmul %863, %754, %cst_248 {dimension_numbers = #tpu.dot_dimension_numbers<[1], [0], [0], [1], [0, 0, 1, 1], [], []>} : vector<2x32xbf16>, vector<32x96xbf16>, vector<2x96xf32> -> vector<2x96xf32>
    %865 = arith.addf %864, %760 : vector<2x96xf32>
    %866 = vector.extract_strided_slice %862 {offsets = [0, 0], sizes = [2, 32], strides = [1, 1]} : vector<2x96xf32> to vector<2x32xf32>
    %867 = vector.extract_strided_slice %865 {offsets = [0, 0], sizes = [2, 32], strides = [1, 1]} : vector<2x96xf32> to vector<2x32xf32>
    %868 = arith.addf %866, %867 : vector<2x32xf32>
    %cst_249 = arith.constant 0.000000e+00 : f32
    %869 = vector.broadcast %cst_249 : f32 to vector<2x32xf32>
    %870 = arith.subf %869, %868 : vector<2x32xf32>
    %871 = math.exp %870 : vector<2x32xf32>
    %cst_250 = arith.constant 1.000000e+00 : f32
    %872 = vector.broadcast %cst_250 : f32 to vector<2x32xf32>
    %873 = arith.addf %872, %871 : vector<2x32xf32>
    %874 = tpu.reciprocal %873 {approx = true} : vector<2x32xf32> -> vector<2x32xf32>
    %875 = vector.extract_strided_slice %862 {offsets = [0, 32], sizes = [2, 32], strides = [1, 1]} : vector<2x96xf32> to vector<2x32xf32>
    %876 = vector.extract_strided_slice %865 {offsets = [0, 32], sizes = [2, 32], strides = [1, 1]} : vector<2x96xf32> to vector<2x32xf32>
    %877 = arith.addf %875, %876 : vector<2x32xf32>
    %cst_251 = arith.constant 0.000000e+00 : f32
    %878 = vector.broadcast %cst_251 : f32 to vector<2x32xf32>
    %879 = arith.subf %878, %877 : vector<2x32xf32>
    %880 = math.exp %879 : vector<2x32xf32>
    %cst_252 = arith.constant 1.000000e+00 : f32
    %881 = vector.broadcast %cst_252 : f32 to vector<2x32xf32>
    %882 = arith.addf %881, %880 : vector<2x32xf32>
    %883 = tpu.reciprocal %882 {approx = true} : vector<2x32xf32> -> vector<2x32xf32>
    %884 = vector.extract_strided_slice %862 {offsets = [0, 64], sizes = [2, 32], strides = [1, 1]} : vector<2x96xf32> to vector<2x32xf32>
    %885 = vector.extract_strided_slice %865 {offsets = [0, 64], sizes = [2, 32], strides = [1, 1]} : vector<2x96xf32> to vector<2x32xf32>
    %886 = arith.mulf %874, %885 : vector<2x32xf32>
    %887 = arith.addf %884, %886 : vector<2x32xf32>
    %888 = math.tanh %887 : vector<2x32xf32>
    %cst_253 = arith.constant 1.000000e+00 : f32
    %889 = vector.broadcast %cst_253 : f32 to vector<2x32xf32>
    %890 = arith.subf %889, %883 : vector<2x32xf32>
    %891 = arith.mulf %890, %888 : vector<2x32xf32>
    %892 = arith.mulf %883, %861 : vector<2x32xf32>
    %893 = arith.addf %891, %892 : vector<2x32xf32>
    %894 = vector.extract_strided_slice %764 {offsets = [8, 0], sizes = [2, 96], strides = [1, 1]} : vector<10x96xf32> to vector<2x96xf32>
    %895 = arith.truncf %893 : vector<2x32xf32> to vector<2x32xbf16>
    %cst_254 = arith.constant dense<0.000000e+00> : vector<2x96xf32>
    %896 = tpu.matmul %895, %754, %cst_254 {dimension_numbers = #tpu.dot_dimension_numbers<[1], [0], [0], [1], [0, 0, 1, 1], [], []>} : vector<2x32xbf16>, vector<32x96xbf16>, vector<2x96xf32> -> vector<2x96xf32>
    %897 = arith.addf %896, %760 : vector<2x96xf32>
    %898 = vector.extract_strided_slice %894 {offsets = [0, 0], sizes = [2, 32], strides = [1, 1]} : vector<2x96xf32> to vector<2x32xf32>
    %899 = vector.extract_strided_slice %897 {offsets = [0, 0], sizes = [2, 32], strides = [1, 1]} : vector<2x96xf32> to vector<2x32xf32>
    %900 = arith.addf %898, %899 : vector<2x32xf32>
    %cst_255 = arith.constant 0.000000e+00 : f32
    %901 = vector.broadcast %cst_255 : f32 to vector<2x32xf32>
    %902 = arith.subf %901, %900 : vector<2x32xf32>
    %903 = math.exp %902 : vector<2x32xf32>
    %cst_256 = arith.constant 1.000000e+00 : f32
    %904 = vector.broadcast %cst_256 : f32 to vector<2x32xf32>
    %905 = arith.addf %904, %903 : vector<2x32xf32>
    %906 = tpu.reciprocal %905 {approx = true} : vector<2x32xf32> -> vector<2x32xf32>
    %907 = vector.extract_strided_slice %894 {offsets = [0, 32], sizes = [2, 32], strides = [1, 1]} : vector<2x96xf32> to vector<2x32xf32>
    %908 = vector.extract_strided_slice %897 {offsets = [0, 32], sizes = [2, 32], strides = [1, 1]} : vector<2x96xf32> to vector<2x32xf32>
    %909 = arith.addf %907, %908 : vector<2x32xf32>
    %cst_257 = arith.constant 0.000000e+00 : f32
    %910 = vector.broadcast %cst_257 : f32 to vector<2x32xf32>
    %911 = arith.subf %910, %909 : vector<2x32xf32>
    %912 = math.exp %911 : vector<2x32xf32>
    %cst_258 = arith.constant 1.000000e+00 : f32
    %913 = vector.broadcast %cst_258 : f32 to vector<2x32xf32>
    %914 = arith.addf %913, %912 : vector<2x32xf32>
    %915 = tpu.reciprocal %914 {approx = true} : vector<2x32xf32> -> vector<2x32xf32>
    %916 = vector.extract_strided_slice %894 {offsets = [0, 64], sizes = [2, 32], strides = [1, 1]} : vector<2x96xf32> to vector<2x32xf32>
    %917 = vector.extract_strided_slice %897 {offsets = [0, 64], sizes = [2, 32], strides = [1, 1]} : vector<2x96xf32> to vector<2x32xf32>
    %918 = arith.mulf %906, %917 : vector<2x32xf32>
    %919 = arith.addf %916, %918 : vector<2x32xf32>
    %920 = math.tanh %919 : vector<2x32xf32>
    %cst_259 = arith.constant 1.000000e+00 : f32
    %921 = vector.broadcast %cst_259 : f32 to vector<2x32xf32>
    %922 = arith.subf %921, %915 : vector<2x32xf32>
    %923 = arith.mulf %922, %920 : vector<2x32xf32>
    %924 = arith.mulf %915, %893 : vector<2x32xf32>
    %925 = arith.addf %923, %924 : vector<2x32xf32>
    %926 = tpu.concatenate %797, %829, %861, %893, %925 in 0 : vector<2x32xf32>, vector<2x32xf32>, vector<2x32xf32>, vector<2x32xf32>, vector<2x32xf32> -> vector<10x32xf32>
    %c2_260 = arith.constant 2 : index
    %c1_261 = arith.constant 1 : index
    %c0_262 = arith.constant 0 : index
    %c0_263 = arith.constant 0 : index
    %927 = vector.load %arg4[%c2_260, %c1_261, %c0_262, %c0_263] : memref<3x2x32x96xbf16, #tpu.memory_space<vmem>>, vector<1x1x32x96xbf16>
    %928 = vector.shape_cast %927 : vector<1x1x32x96xbf16> to vector<32x96xbf16>
    %c2_264 = arith.constant 2 : index
    %c1_265 = arith.constant 1 : index
    %c0_266 = arith.constant 0 : index
    %c0_267 = arith.constant 0 : index
    %929 = vector.load %arg5[%c2_264, %c1_265, %c0_266, %c0_267] : memref<3x2x32x96xbf16, #tpu.memory_space<vmem>>, vector<1x1x32x96xbf16>
    %930 = vector.shape_cast %929 : vector<1x1x32x96xbf16> to vector<32x96xbf16>
    %c2_268 = arith.constant 2 : index
    %c1_269 = arith.constant 1 : index
    %c0_270 = arith.constant 0 : index
    %c0_271 = arith.constant 0 : index
    %c0_272 = arith.constant 0 : index
    %931 = vector.load %arg6[%c2_268, %c1_269, %c0_270, %c0_271, %c0_272] : memref<3x2x2x1x96xf32, #tpu.memory_space<vmem>>, vector<1x1x1x1x96xf32>
    %932 = vector.shape_cast %931 : vector<1x1x1x1x96xf32> to vector<1x96xf32>
    %c2_273 = arith.constant 2 : index
    %c1_274 = arith.constant 1 : index
    %c1_275 = arith.constant 1 : index
    %c0_276 = arith.constant 0 : index
    %c0_277 = arith.constant 0 : index
    %933 = vector.load %arg6[%c2_273, %c1_274, %c1_275, %c0_276, %c0_277] : memref<3x2x2x1x96xf32, #tpu.memory_space<vmem>>, vector<1x1x1x1x96xf32>
    %934 = vector.shape_cast %933 : vector<1x1x1x1x96xf32> to vector<1x96xf32>
    %935 = vector.shape_cast %934 : vector<1x96xf32> to vector<1x96xf32>
    %936 = vector.broadcast %935 : vector<1x96xf32> to vector<2x96xf32>
    %937 = arith.truncf %926 : vector<10x32xf32> to vector<10x32xbf16>
    %cst_278 = arith.constant dense<0.000000e+00> : vector<10x96xf32>
    %938 = tpu.matmul %937, %928, %cst_278 {dimension_numbers = #tpu.dot_dimension_numbers<[1], [0], [0], [1], [0, 0, 1, 1], [], []>} : vector<10x32xbf16>, vector<32x96xbf16>, vector<10x96xf32> -> vector<10x96xf32>
    %939 = vector.broadcast %932 : vector<1x96xf32> to vector<10x96xf32>
    %940 = arith.addf %938, %939 : vector<10x96xf32>
    %cst_279 = arith.constant 0.000000e+00 : f32
    %941 = vector.broadcast %cst_279 : f32 to vector<2x32xf32>
    %942 = vector.extract_strided_slice %940 {offsets = [0, 0], sizes = [2, 96], strides = [1, 1]} : vector<10x96xf32> to vector<2x96xf32>
    %943 = arith.truncf %941 : vector<2x32xf32> to vector<2x32xbf16>
    %cst_280 = arith.constant dense<0.000000e+00> : vector<2x96xf32>
    %944 = tpu.matmul %943, %930, %cst_280 {dimension_numbers = #tpu.dot_dimension_numbers<[1], [0], [0], [1], [0, 0, 1, 1], [], []>} : vector<2x32xbf16>, vector<32x96xbf16>, vector<2x96xf32> -> vector<2x96xf32>
    %945 = arith.addf %944, %936 : vector<2x96xf32>
    %946 = vector.extract_strided_slice %942 {offsets = [0, 0], sizes = [2, 32], strides = [1, 1]} : vector<2x96xf32> to vector<2x32xf32>
    %947 = vector.extract_strided_slice %945 {offsets = [0, 0], sizes = [2, 32], strides = [1, 1]} : vector<2x96xf32> to vector<2x32xf32>
    %948 = arith.addf %946, %947 : vector<2x32xf32>
    %cst_281 = arith.constant 0.000000e+00 : f32
    %949 = vector.broadcast %cst_281 : f32 to vector<2x32xf32>
    %950 = arith.subf %949, %948 : vector<2x32xf32>
    %951 = math.exp %950 : vector<2x32xf32>
    %cst_282 = arith.constant 1.000000e+00 : f32
    %952 = vector.broadcast %cst_282 : f32 to vector<2x32xf32>
    %953 = arith.addf %952, %951 : vector<2x32xf32>
    %954 = tpu.reciprocal %953 {approx = true} : vector<2x32xf32> -> vector<2x32xf32>
    %955 = vector.extract_strided_slice %942 {offsets = [0, 32], sizes = [2, 32], strides = [1, 1]} : vector<2x96xf32> to vector<2x32xf32>
    %956 = vector.extract_strided_slice %945 {offsets = [0, 32], sizes = [2, 32], strides = [1, 1]} : vector<2x96xf32> to vector<2x32xf32>
    %957 = arith.addf %955, %956 : vector<2x32xf32>
    %cst_283 = arith.constant 0.000000e+00 : f32
    %958 = vector.broadcast %cst_283 : f32 to vector<2x32xf32>
    %959 = arith.subf %958, %957 : vector<2x32xf32>
    %960 = math.exp %959 : vector<2x32xf32>
    %cst_284 = arith.constant 1.000000e+00 : f32
    %961 = vector.broadcast %cst_284 : f32 to vector<2x32xf32>
    %962 = arith.addf %961, %960 : vector<2x32xf32>
    %963 = tpu.reciprocal %962 {approx = true} : vector<2x32xf32> -> vector<2x32xf32>
    %964 = vector.extract_strided_slice %942 {offsets = [0, 64], sizes = [2, 32], strides = [1, 1]} : vector<2x96xf32> to vector<2x32xf32>
    %965 = vector.extract_strided_slice %945 {offsets = [0, 64], sizes = [2, 32], strides = [1, 1]} : vector<2x96xf32> to vector<2x32xf32>
    %966 = arith.mulf %954, %965 : vector<2x32xf32>
    %967 = arith.addf %964, %966 : vector<2x32xf32>
    %968 = math.tanh %967 : vector<2x32xf32>
    %cst_285 = arith.constant 1.000000e+00 : f32
    %969 = vector.broadcast %cst_285 : f32 to vector<2x32xf32>
    %970 = arith.subf %969, %963 : vector<2x32xf32>
    %971 = arith.mulf %970, %968 : vector<2x32xf32>
    %972 = arith.mulf %963, %941 : vector<2x32xf32>
    %973 = arith.addf %971, %972 : vector<2x32xf32>
    %974 = vector.extract_strided_slice %940 {offsets = [2, 0], sizes = [2, 96], strides = [1, 1]} : vector<10x96xf32> to vector<2x96xf32>
    %975 = arith.truncf %973 : vector<2x32xf32> to vector<2x32xbf16>
    %cst_286 = arith.constant dense<0.000000e+00> : vector<2x96xf32>
    %976 = tpu.matmul %975, %930, %cst_286 {dimension_numbers = #tpu.dot_dimension_numbers<[1], [0], [0], [1], [0, 0, 1, 1], [], []>} : vector<2x32xbf16>, vector<32x96xbf16>, vector<2x96xf32> -> vector<2x96xf32>
    %977 = arith.addf %976, %936 : vector<2x96xf32>
    %978 = vector.extract_strided_slice %974 {offsets = [0, 0], sizes = [2, 32], strides = [1, 1]} : vector<2x96xf32> to vector<2x32xf32>
    %979 = vector.extract_strided_slice %977 {offsets = [0, 0], sizes = [2, 32], strides = [1, 1]} : vector<2x96xf32> to vector<2x32xf32>
    %980 = arith.addf %978, %979 : vector<2x32xf32>
    %cst_287 = arith.constant 0.000000e+00 : f32
    %981 = vector.broadcast %cst_287 : f32 to vector<2x32xf32>
    %982 = arith.subf %981, %980 : vector<2x32xf32>
    %983 = math.exp %982 : vector<2x32xf32>
    %cst_288 = arith.constant 1.000000e+00 : f32
    %984 = vector.broadcast %cst_288 : f32 to vector<2x32xf32>
    %985 = arith.addf %984, %983 : vector<2x32xf32>
    %986 = tpu.reciprocal %985 {approx = true} : vector<2x32xf32> -> vector<2x32xf32>
    %987 = vector.extract_strided_slice %974 {offsets = [0, 32], sizes = [2, 32], strides = [1, 1]} : vector<2x96xf32> to vector<2x32xf32>
    %988 = vector.extract_strided_slice %977 {offsets = [0, 32], sizes = [2, 32], strides = [1, 1]} : vector<2x96xf32> to vector<2x32xf32>
    %989 = arith.addf %987, %988 : vector<2x32xf32>
    %cst_289 = arith.constant 0.000000e+00 : f32
    %990 = vector.broadcast %cst_289 : f32 to vector<2x32xf32>
    %991 = arith.subf %990, %989 : vector<2x32xf32>
    %992 = math.exp %991 : vector<2x32xf32>
    %cst_290 = arith.constant 1.000000e+00 : f32
    %993 = vector.broadcast %cst_290 : f32 to vector<2x32xf32>
    %994 = arith.addf %993, %992 : vector<2x32xf32>
    %995 = tpu.reciprocal %994 {approx = true} : vector<2x32xf32> -> vector<2x32xf32>
    %996 = vector.extract_strided_slice %974 {offsets = [0, 64], sizes = [2, 32], strides = [1, 1]} : vector<2x96xf32> to vector<2x32xf32>
    %997 = vector.extract_strided_slice %977 {offsets = [0, 64], sizes = [2, 32], strides = [1, 1]} : vector<2x96xf32> to vector<2x32xf32>
    %998 = arith.mulf %986, %997 : vector<2x32xf32>
    %999 = arith.addf %996, %998 : vector<2x32xf32>
    %1000 = math.tanh %999 : vector<2x32xf32>
    %cst_291 = arith.constant 1.000000e+00 : f32
    %1001 = vector.broadcast %cst_291 : f32 to vector<2x32xf32>
    %1002 = arith.subf %1001, %995 : vector<2x32xf32>
    %1003 = arith.mulf %1002, %1000 : vector<2x32xf32>
    %1004 = arith.mulf %995, %973 : vector<2x32xf32>
    %1005 = arith.addf %1003, %1004 : vector<2x32xf32>
    %1006 = vector.extract_strided_slice %940 {offsets = [4, 0], sizes = [2, 96], strides = [1, 1]} : vector<10x96xf32> to vector<2x96xf32>
    %1007 = arith.truncf %1005 : vector<2x32xf32> to vector<2x32xbf16>
    %cst_292 = arith.constant dense<0.000000e+00> : vector<2x96xf32>
    %1008 = tpu.matmul %1007, %930, %cst_292 {dimension_numbers = #tpu.dot_dimension_numbers<[1], [0], [0], [1], [0, 0, 1, 1], [], []>} : vector<2x32xbf16>, vector<32x96xbf16>, vector<2x96xf32> -> vector<2x96xf32>
    %1009 = arith.addf %1008, %936 : vector<2x96xf32>
    %1010 = vector.extract_strided_slice %1006 {offsets = [0, 0], sizes = [2, 32], strides = [1, 1]} : vector<2x96xf32> to vector<2x32xf32>
    %1011 = vector.extract_strided_slice %1009 {offsets = [0, 0], sizes = [2, 32], strides = [1, 1]} : vector<2x96xf32> to vector<2x32xf32>
    %1012 = arith.addf %1010, %1011 : vector<2x32xf32>
    %cst_293 = arith.constant 0.000000e+00 : f32
    %1013 = vector.broadcast %cst_293 : f32 to vector<2x32xf32>
    %1014 = arith.subf %1013, %1012 : vector<2x32xf32>
    %1015 = math.exp %1014 : vector<2x32xf32>
    %cst_294 = arith.constant 1.000000e+00 : f32
    %1016 = vector.broadcast %cst_294 : f32 to vector<2x32xf32>
    %1017 = arith.addf %1016, %1015 : vector<2x32xf32>
    %1018 = tpu.reciprocal %1017 {approx = true} : vector<2x32xf32> -> vector<2x32xf32>
    %1019 = vector.extract_strided_slice %1006 {offsets = [0, 32], sizes = [2, 32], strides = [1, 1]} : vector<2x96xf32> to vector<2x32xf32>
    %1020 = vector.extract_strided_slice %1009 {offsets = [0, 32], sizes = [2, 32], strides = [1, 1]} : vector<2x96xf32> to vector<2x32xf32>
    %1021 = arith.addf %1019, %1020 : vector<2x32xf32>
    %cst_295 = arith.constant 0.000000e+00 : f32
    %1022 = vector.broadcast %cst_295 : f32 to vector<2x32xf32>
    %1023 = arith.subf %1022, %1021 : vector<2x32xf32>
    %1024 = math.exp %1023 : vector<2x32xf32>
    %cst_296 = arith.constant 1.000000e+00 : f32
    %1025 = vector.broadcast %cst_296 : f32 to vector<2x32xf32>
    %1026 = arith.addf %1025, %1024 : vector<2x32xf32>
    %1027 = tpu.reciprocal %1026 {approx = true} : vector<2x32xf32> -> vector<2x32xf32>
    %1028 = vector.extract_strided_slice %1006 {offsets = [0, 64], sizes = [2, 32], strides = [1, 1]} : vector<2x96xf32> to vector<2x32xf32>
    %1029 = vector.extract_strided_slice %1009 {offsets = [0, 64], sizes = [2, 32], strides = [1, 1]} : vector<2x96xf32> to vector<2x32xf32>
    %1030 = arith.mulf %1018, %1029 : vector<2x32xf32>
    %1031 = arith.addf %1028, %1030 : vector<2x32xf32>
    %1032 = math.tanh %1031 : vector<2x32xf32>
    %cst_297 = arith.constant 1.000000e+00 : f32
    %1033 = vector.broadcast %cst_297 : f32 to vector<2x32xf32>
    %1034 = arith.subf %1033, %1027 : vector<2x32xf32>
    %1035 = arith.mulf %1034, %1032 : vector<2x32xf32>
    %1036 = arith.mulf %1027, %1005 : vector<2x32xf32>
    %1037 = arith.addf %1035, %1036 : vector<2x32xf32>
    %1038 = vector.extract_strided_slice %940 {offsets = [6, 0], sizes = [2, 96], strides = [1, 1]} : vector<10x96xf32> to vector<2x96xf32>
    %1039 = arith.truncf %1037 : vector<2x32xf32> to vector<2x32xbf16>
    %cst_298 = arith.constant dense<0.000000e+00> : vector<2x96xf32>
    %1040 = tpu.matmul %1039, %930, %cst_298 {dimension_numbers = #tpu.dot_dimension_numbers<[1], [0], [0], [1], [0, 0, 1, 1], [], []>} : vector<2x32xbf16>, vector<32x96xbf16>, vector<2x96xf32> -> vector<2x96xf32>
    %1041 = arith.addf %1040, %936 : vector<2x96xf32>
    %1042 = vector.extract_strided_slice %1038 {offsets = [0, 0], sizes = [2, 32], strides = [1, 1]} : vector<2x96xf32> to vector<2x32xf32>
    %1043 = vector.extract_strided_slice %1041 {offsets = [0, 0], sizes = [2, 32], strides = [1, 1]} : vector<2x96xf32> to vector<2x32xf32>
    %1044 = arith.addf %1042, %1043 : vector<2x32xf32>
    %cst_299 = arith.constant 0.000000e+00 : f32
    %1045 = vector.broadcast %cst_299 : f32 to vector<2x32xf32>
    %1046 = arith.subf %1045, %1044 : vector<2x32xf32>
    %1047 = math.exp %1046 : vector<2x32xf32>
    %cst_300 = arith.constant 1.000000e+00 : f32
    %1048 = vector.broadcast %cst_300 : f32 to vector<2x32xf32>
    %1049 = arith.addf %1048, %1047 : vector<2x32xf32>
    %1050 = tpu.reciprocal %1049 {approx = true} : vector<2x32xf32> -> vector<2x32xf32>
    %1051 = vector.extract_strided_slice %1038 {offsets = [0, 32], sizes = [2, 32], strides = [1, 1]} : vector<2x96xf32> to vector<2x32xf32>
    %1052 = vector.extract_strided_slice %1041 {offsets = [0, 32], sizes = [2, 32], strides = [1, 1]} : vector<2x96xf32> to vector<2x32xf32>
    %1053 = arith.addf %1051, %1052 : vector<2x32xf32>
    %cst_301 = arith.constant 0.000000e+00 : f32
    %1054 = vector.broadcast %cst_301 : f32 to vector<2x32xf32>
    %1055 = arith.subf %1054, %1053 : vector<2x32xf32>
    %1056 = math.exp %1055 : vector<2x32xf32>
    %cst_302 = arith.constant 1.000000e+00 : f32
    %1057 = vector.broadcast %cst_302 : f32 to vector<2x32xf32>
    %1058 = arith.addf %1057, %1056 : vector<2x32xf32>
    %1059 = tpu.reciprocal %1058 {approx = true} : vector<2x32xf32> -> vector<2x32xf32>
    %1060 = vector.extract_strided_slice %1038 {offsets = [0, 64], sizes = [2, 32], strides = [1, 1]} : vector<2x96xf32> to vector<2x32xf32>
    %1061 = vector.extract_strided_slice %1041 {offsets = [0, 64], sizes = [2, 32], strides = [1, 1]} : vector<2x96xf32> to vector<2x32xf32>
    %1062 = arith.mulf %1050, %1061 : vector<2x32xf32>
    %1063 = arith.addf %1060, %1062 : vector<2x32xf32>
    %1064 = math.tanh %1063 : vector<2x32xf32>
    %cst_303 = arith.constant 1.000000e+00 : f32
    %1065 = vector.broadcast %cst_303 : f32 to vector<2x32xf32>
    %1066 = arith.subf %1065, %1059 : vector<2x32xf32>
    %1067 = arith.mulf %1066, %1064 : vector<2x32xf32>
    %1068 = arith.mulf %1059, %1037 : vector<2x32xf32>
    %1069 = arith.addf %1067, %1068 : vector<2x32xf32>
    %1070 = vector.extract_strided_slice %940 {offsets = [8, 0], sizes = [2, 96], strides = [1, 1]} : vector<10x96xf32> to vector<2x96xf32>
    %1071 = arith.truncf %1069 : vector<2x32xf32> to vector<2x32xbf16>
    %cst_304 = arith.constant dense<0.000000e+00> : vector<2x96xf32>
    %1072 = tpu.matmul %1071, %930, %cst_304 {dimension_numbers = #tpu.dot_dimension_numbers<[1], [0], [0], [1], [0, 0, 1, 1], [], []>} : vector<2x32xbf16>, vector<32x96xbf16>, vector<2x96xf32> -> vector<2x96xf32>
    %1073 = arith.addf %1072, %936 : vector<2x96xf32>
    %1074 = vector.extract_strided_slice %1070 {offsets = [0, 0], sizes = [2, 32], strides = [1, 1]} : vector<2x96xf32> to vector<2x32xf32>
    %1075 = vector.extract_strided_slice %1073 {offsets = [0, 0], sizes = [2, 32], strides = [1, 1]} : vector<2x96xf32> to vector<2x32xf32>
    %1076 = arith.addf %1074, %1075 : vector<2x32xf32>
    %cst_305 = arith.constant 0.000000e+00 : f32
    %1077 = vector.broadcast %cst_305 : f32 to vector<2x32xf32>
    %1078 = arith.subf %1077, %1076 : vector<2x32xf32>
    %1079 = math.exp %1078 : vector<2x32xf32>
    %cst_306 = arith.constant 1.000000e+00 : f32
    %1080 = vector.broadcast %cst_306 : f32 to vector<2x32xf32>
    %1081 = arith.addf %1080, %1079 : vector<2x32xf32>
    %1082 = tpu.reciprocal %1081 {approx = true} : vector<2x32xf32> -> vector<2x32xf32>
    %1083 = vector.extract_strided_slice %1070 {offsets = [0, 32], sizes = [2, 32], strides = [1, 1]} : vector<2x96xf32> to vector<2x32xf32>
    %1084 = vector.extract_strided_slice %1073 {offsets = [0, 32], sizes = [2, 32], strides = [1, 1]} : vector<2x96xf32> to vector<2x32xf32>
    %1085 = arith.addf %1083, %1084 : vector<2x32xf32>
    %cst_307 = arith.constant 0.000000e+00 : f32
    %1086 = vector.broadcast %cst_307 : f32 to vector<2x32xf32>
    %1087 = arith.subf %1086, %1085 : vector<2x32xf32>
    %1088 = math.exp %1087 : vector<2x32xf32>
    %cst_308 = arith.constant 1.000000e+00 : f32
    %1089 = vector.broadcast %cst_308 : f32 to vector<2x32xf32>
    %1090 = arith.addf %1089, %1088 : vector<2x32xf32>
    %1091 = tpu.reciprocal %1090 {approx = true} : vector<2x32xf32> -> vector<2x32xf32>
    %1092 = vector.extract_strided_slice %1070 {offsets = [0, 64], sizes = [2, 32], strides = [1, 1]} : vector<2x96xf32> to vector<2x32xf32>
    %1093 = vector.extract_strided_slice %1073 {offsets = [0, 64], sizes = [2, 32], strides = [1, 1]} : vector<2x96xf32> to vector<2x32xf32>
    %1094 = arith.mulf %1082, %1093 : vector<2x32xf32>
    %1095 = arith.addf %1092, %1094 : vector<2x32xf32>
    %1096 = math.tanh %1095 : vector<2x32xf32>
    %cst_309 = arith.constant 1.000000e+00 : f32
    %1097 = vector.broadcast %cst_309 : f32 to vector<2x32xf32>
    %1098 = arith.subf %1097, %1091 : vector<2x32xf32>
    %1099 = arith.mulf %1098, %1096 : vector<2x32xf32>
    %1100 = arith.mulf %1091, %1069 : vector<2x32xf32>
    %1101 = arith.addf %1099, %1100 : vector<2x32xf32>
    %c2_i32_310 = arith.constant 2 : i32
    %1102 = vector.broadcast %c2_i32_310 : i32 to vector<2x1xi32>
    %1103 = arith.cmpi eq, %750, %1102 : vector<2x1xi32>
    %1104 = vector.shape_cast %1103 : vector<2x1xi1> to vector<2x1xi1>
    %1105 = vector.broadcast %1104 : vector<2x1xi1> to vector<2x32xi1>
    %1106 = arith.select %1105, %1005, %973 : vector<2x32xi1>, vector<2x32xf32>
    %c3_i32_311 = arith.constant 3 : i32
    %1107 = vector.broadcast %c3_i32_311 : i32 to vector<2x1xi32>
    %1108 = arith.cmpi eq, %750, %1107 : vector<2x1xi32>
    %1109 = vector.shape_cast %1108 : vector<2x1xi1> to vector<2x1xi1>
    %1110 = vector.broadcast %1109 : vector<2x1xi1> to vector<2x32xi1>
    %1111 = arith.select %1110, %1037, %1106 : vector<2x32xi1>, vector<2x32xf32>
    %c4_i32_312 = arith.constant 4 : i32
    %1112 = vector.broadcast %c4_i32_312 : i32 to vector<2x1xi32>
    %1113 = arith.cmpi eq, %750, %1112 : vector<2x1xi32>
    %1114 = vector.shape_cast %1113 : vector<2x1xi1> to vector<2x1xi1>
    %1115 = vector.broadcast %1114 : vector<2x1xi1> to vector<2x32xi1>
    %1116 = arith.select %1115, %1069, %1111 : vector<2x32xi1>, vector<2x32xf32>
    %c5_i32_313 = arith.constant 5 : i32
    %1117 = vector.broadcast %c5_i32_313 : i32 to vector<2x1xi32>
    %1118 = arith.cmpi eq, %750, %1117 : vector<2x1xi32>
    %1119 = vector.shape_cast %1118 : vector<2x1xi1> to vector<2x1xi1>
    %1120 = vector.broadcast %1119 : vector<2x1xi1> to vector<2x32xi1>
    %1121 = arith.select %1120, %1101, %1116 : vector<2x32xi1>, vector<2x32xf32>
    %c0_314 = arith.constant 0 : index
    %c0_315 = arith.constant 0 : index
    %c0_316 = arith.constant 0 : index
    %1122 = vector.load %arg7[%c0_314, %c0_315, %c0_316] : memref<3x32x64xbf16, #tpu.memory_space<vmem>>, vector<1x32x64xbf16>
    %1123 = vector.shape_cast %1122 : vector<1x32x64xbf16> to vector<32x64xbf16>
    %1124 = arith.truncf %373 : vector<6x32xf32> to vector<6x32xbf16>
    %cst_317 = arith.constant dense<0.000000e+00> : vector<6x64xf32>
    %1125 = tpu.matmul %1124, %1123, %cst_317 {dimension_numbers = #tpu.dot_dimension_numbers<[1], [0], [0], [1], [0, 0, 1, 1], [], []>} : vector<6x32xbf16>, vector<32x64xbf16>, vector<6x64xf32> -> vector<6x64xf32>
    %c0_318 = arith.constant 0 : index
    %c0_319 = arith.constant 0 : index
    %c0_320 = arith.constant 0 : index
    %c0_321 = arith.constant 0 : index
    %1126 = vector.load %arg9[%c0_318, %c0_319, %c0_320, %c0_321] : memref<3x2x1x64xf32, #tpu.memory_space<vmem>>, vector<1x1x1x64xf32>
    %1127 = vector.shape_cast %1126 : vector<1x1x1x64xf32> to vector<1x64xf32>
    %1128 = vector.broadcast %1127 : vector<1x64xf32> to vector<6x64xf32>
    %1129 = arith.addf %1125, %1128 : vector<6x64xf32>
    %cst_322 = arith.constant 0.000000e+00 : f32
    %1130 = vector.broadcast %cst_322 : f32 to vector<6x64xf32>
    %1131 = arith.cmpf ogt, %1129, %1130 : vector<6x64xf32>
    %cst_323 = arith.constant 0.00999999977 : f32
    %1132 = vector.broadcast %cst_323 : f32 to vector<6x64xf32>
    %1133 = arith.mulf %1132, %1129 : vector<6x64xf32>
    %1134 = arith.select %1131, %1129, %1133 : vector<6x64xi1>, vector<6x64xf32>
    %c0_324 = arith.constant 0 : index
    %c0_325 = arith.constant 0 : index
    %c0_326 = arith.constant 0 : index
    %1135 = vector.load %arg8[%c0_324, %c0_325, %c0_326] : memref<3x64x16xbf16, #tpu.memory_space<vmem>>, vector<1x64x16xbf16>
    %1136 = vector.shape_cast %1135 : vector<1x64x16xbf16> to vector<64x16xbf16>
    %1137 = arith.truncf %1134 : vector<6x64xf32> to vector<6x64xbf16>
    %cst_327 = arith.constant dense<0.000000e+00> : vector<6x16xf32>
    %1138 = tpu.matmul %1137, %1136, %cst_327 {dimension_numbers = #tpu.dot_dimension_numbers<[1], [0], [0], [1], [0, 0, 1, 1], [], []>} : vector<6x64xbf16>, vector<64x16xbf16>, vector<6x16xf32> -> vector<6x16xf32>
    %c0_328 = arith.constant 0 : index
    %c1_329 = arith.constant 1 : index
    %c0_330 = arith.constant 0 : index
    %c0_331 = arith.constant 0 : index
    %1139 = vector.load %arg9[%c0_328, %c1_329, %c0_330, %c0_331] : memref<3x2x1x64xf32, #tpu.memory_space<vmem>>, vector<1x1x1x64xf32>
    %1140 = vector.shape_cast %1139 : vector<1x1x1x64xf32> to vector<1x64xf32>
    %1141 = vector.extract_strided_slice %1140 {offsets = [0, 0], sizes = [1, 16], strides = [1, 1]} : vector<1x64xf32> to vector<1x16xf32>
    %1142 = vector.broadcast %1141 : vector<1x16xf32> to vector<6x16xf32>
    %1143 = arith.addf %1138, %1142 : vector<6x16xf32>
    %c1_332 = arith.constant 1 : index
    %c0_333 = arith.constant 0 : index
    %c0_334 = arith.constant 0 : index
    %1144 = vector.load %arg7[%c1_332, %c0_333, %c0_334] : memref<3x32x64xbf16, #tpu.memory_space<vmem>>, vector<1x32x64xbf16>
    %1145 = vector.shape_cast %1144 : vector<1x32x64xbf16> to vector<32x64xbf16>
    %1146 = arith.truncf %747 : vector<2x32xf32> to vector<2x32xbf16>
    %cst_335 = arith.constant dense<0.000000e+00> : vector<2x64xf32>
    %1147 = tpu.matmul %1146, %1145, %cst_335 {dimension_numbers = #tpu.dot_dimension_numbers<[1], [0], [0], [1], [0, 0, 1, 1], [], []>} : vector<2x32xbf16>, vector<32x64xbf16>, vector<2x64xf32> -> vector<2x64xf32>
    %c1_336 = arith.constant 1 : index
    %c0_337 = arith.constant 0 : index
    %c0_338 = arith.constant 0 : index
    %c0_339 = arith.constant 0 : index
    %1148 = vector.load %arg9[%c1_336, %c0_337, %c0_338, %c0_339] : memref<3x2x1x64xf32, #tpu.memory_space<vmem>>, vector<1x1x1x64xf32>
    %1149 = vector.shape_cast %1148 : vector<1x1x1x64xf32> to vector<1x64xf32>
    %1150 = vector.broadcast %1149 : vector<1x64xf32> to vector<2x64xf32>
    %1151 = arith.addf %1147, %1150 : vector<2x64xf32>
    %cst_340 = arith.constant 0.000000e+00 : f32
    %1152 = vector.broadcast %cst_340 : f32 to vector<2x64xf32>
    %1153 = arith.cmpf ogt, %1151, %1152 : vector<2x64xf32>
    %cst_341 = arith.constant 0.00999999977 : f32
    %1154 = vector.broadcast %cst_341 : f32 to vector<2x64xf32>
    %1155 = arith.mulf %1154, %1151 : vector<2x64xf32>
    %1156 = arith.select %1153, %1151, %1155 : vector<2x64xi1>, vector<2x64xf32>
    %c1_342 = arith.constant 1 : index
    %c0_343 = arith.constant 0 : index
    %c0_344 = arith.constant 0 : index
    %1157 = vector.load %arg8[%c1_342, %c0_343, %c0_344] : memref<3x64x16xbf16, #tpu.memory_space<vmem>>, vector<1x64x16xbf16>
    %1158 = vector.shape_cast %1157 : vector<1x64x16xbf16> to vector<64x16xbf16>
    %1159 = arith.truncf %1156 : vector<2x64xf32> to vector<2x64xbf16>
    %cst_345 = arith.constant dense<0.000000e+00> : vector<2x16xf32>
    %1160 = tpu.matmul %1159, %1158, %cst_345 {dimension_numbers = #tpu.dot_dimension_numbers<[1], [0], [0], [1], [0, 0, 1, 1], [], []>} : vector<2x64xbf16>, vector<64x16xbf16>, vector<2x16xf32> -> vector<2x16xf32>
    %c1_346 = arith.constant 1 : index
    %c1_347 = arith.constant 1 : index
    %c0_348 = arith.constant 0 : index
    %c0_349 = arith.constant 0 : index
    %1161 = vector.load %arg9[%c1_346, %c1_347, %c0_348, %c0_349] : memref<3x2x1x64xf32, #tpu.memory_space<vmem>>, vector<1x1x1x64xf32>
    %1162 = vector.shape_cast %1161 : vector<1x1x1x64xf32> to vector<1x64xf32>
    %1163 = vector.extract_strided_slice %1162 {offsets = [0, 0], sizes = [1, 16], strides = [1, 1]} : vector<1x64xf32> to vector<1x16xf32>
    %1164 = vector.broadcast %1163 : vector<1x16xf32> to vector<2x16xf32>
    %1165 = arith.addf %1160, %1164 : vector<2x16xf32>
    %c2_350 = arith.constant 2 : index
    %c0_351 = arith.constant 0 : index
    %c0_352 = arith.constant 0 : index
    %1166 = vector.load %arg7[%c2_350, %c0_351, %c0_352] : memref<3x32x64xbf16, #tpu.memory_space<vmem>>, vector<1x32x64xbf16>
    %1167 = vector.shape_cast %1166 : vector<1x32x64xbf16> to vector<32x64xbf16>
    %1168 = arith.truncf %1121 : vector<2x32xf32> to vector<2x32xbf16>
    %cst_353 = arith.constant dense<0.000000e+00> : vector<2x64xf32>
    %1169 = tpu.matmul %1168, %1167, %cst_353 {dimension_numbers = #tpu.dot_dimension_numbers<[1], [0], [0], [1], [0, 0, 1, 1], [], []>} : vector<2x32xbf16>, vector<32x64xbf16>, vector<2x64xf32> -> vector<2x64xf32>
    %c2_354 = arith.constant 2 : index
    %c0_355 = arith.constant 0 : index
    %c0_356 = arith.constant 0 : index
    %c0_357 = arith.constant 0 : index
    %1170 = vector.load %arg9[%c2_354, %c0_355, %c0_356, %c0_357] : memref<3x2x1x64xf32, #tpu.memory_space<vmem>>, vector<1x1x1x64xf32>
    %1171 = vector.shape_cast %1170 : vector<1x1x1x64xf32> to vector<1x64xf32>
    %1172 = vector.broadcast %1171 : vector<1x64xf32> to vector<2x64xf32>
    %1173 = arith.addf %1169, %1172 : vector<2x64xf32>
    %cst_358 = arith.constant 0.000000e+00 : f32
    %1174 = vector.broadcast %cst_358 : f32 to vector<2x64xf32>
    %1175 = arith.cmpf ogt, %1173, %1174 : vector<2x64xf32>
    %cst_359 = arith.constant 0.00999999977 : f32
    %1176 = vector.broadcast %cst_359 : f32 to vector<2x64xf32>
    %1177 = arith.mulf %1176, %1173 : vector<2x64xf32>
    %1178 = arith.select %1175, %1173, %1177 : vector<2x64xi1>, vector<2x64xf32>
    %c2_360 = arith.constant 2 : index
    %c0_361 = arith.constant 0 : index
    %c0_362 = arith.constant 0 : index
    %1179 = vector.load %arg8[%c2_360, %c0_361, %c0_362] : memref<3x64x16xbf16, #tpu.memory_space<vmem>>, vector<1x64x16xbf16>
    %1180 = vector.shape_cast %1179 : vector<1x64x16xbf16> to vector<64x16xbf16>
    %1181 = arith.truncf %1178 : vector<2x64xf32> to vector<2x64xbf16>
    %cst_363 = arith.constant dense<0.000000e+00> : vector<2x16xf32>
    %1182 = tpu.matmul %1181, %1180, %cst_363 {dimension_numbers = #tpu.dot_dimension_numbers<[1], [0], [0], [1], [0, 0, 1, 1], [], []>} : vector<2x64xbf16>, vector<64x16xbf16>, vector<2x16xf32> -> vector<2x16xf32>
    %c2_364 = arith.constant 2 : index
    %c1_365 = arith.constant 1 : index
    %c0_366 = arith.constant 0 : index
    %c0_367 = arith.constant 0 : index
    %1183 = vector.load %arg9[%c2_364, %c1_365, %c0_366, %c0_367] : memref<3x2x1x64xf32, #tpu.memory_space<vmem>>, vector<1x1x1x64xf32>
    %1184 = vector.shape_cast %1183 : vector<1x1x1x64xf32> to vector<1x64xf32>
    %1185 = vector.extract_strided_slice %1184 {offsets = [0, 0], sizes = [1, 16], strides = [1, 1]} : vector<1x64xf32> to vector<1x16xf32>
    %1186 = vector.broadcast %1185 : vector<1x16xf32> to vector<2x16xf32>
    %1187 = arith.addf %1182, %1186 : vector<2x16xf32>
    %c0_368 = arith.constant 0 : index
    %c0_369 = arith.constant 0 : index
    %1188 = vector.load %arg0[%c0_368, %c0_369] : memref<2x16xf32, #tpu.memory_space<vmem>>, vector<2x16xf32>
    %cst_370 = arith.constant 1.000000e-03 : f32
    %1189 = vector.broadcast %cst_370 : f32 to vector<2x16xf32>
    %1190 = arith.mulf %1188, %1189 : vector<2x16xf32>
    %c0_371 = arith.constant 0 : index
    %c0_372 = arith.constant 0 : index
    %1191 = vector.load %arg11[%c0_371, %c0_372] : memref<5x64xf32, #tpu.memory_space<vmem>>, vector<1x64xf32>
    %c1_373 = arith.constant 1 : index
    %c0_374 = arith.constant 0 : index
    %1192 = vector.load %arg11[%c1_373, %c0_374] : memref<5x64xf32, #tpu.memory_space<vmem>>, vector<1x64xf32>
    %c2_375 = arith.constant 2 : index
    %c0_376 = arith.constant 0 : index
    %1193 = vector.load %arg11[%c2_375, %c0_376] : memref<5x64xf32, #tpu.memory_space<vmem>>, vector<1x64xf32>
    %c3 = arith.constant 3 : index
    %c0_377 = arith.constant 0 : index
    %1194 = vector.load %arg11[%c3, %c0_377] : memref<5x64xf32, #tpu.memory_space<vmem>>, vector<1x64xf32>
    %c4 = arith.constant 4 : index
    %c0_378 = arith.constant 0 : index
    %1195 = vector.load %arg11[%c4, %c0_378] : memref<5x64xf32, #tpu.memory_space<vmem>>, vector<1x64xf32>
    %1196 = vector.extract_strided_slice %1195 {offsets = [0, 0], sizes = [1, 1], strides = [1, 1]} : vector<1x64xf32> to vector<1x1xf32>
    %1197 = vector.extract_strided_slice %1195 {offsets = [0, 1], sizes = [1, 1], strides = [1, 1]} : vector<1x64xf32> to vector<1x1xf32>
    %c0_379 = arith.constant 0 : index
    %c0_380 = arith.constant 0 : index
    %c0_381 = arith.constant 0 : index
    %1198 = vector.load %arg10[%c0_379, %c0_380, %c0_381] : memref<7x16x64xbf16, #tpu.memory_space<vmem>>, vector<1x16x64xbf16>
    %1199 = vector.shape_cast %1198 : vector<1x16x64xbf16> to vector<16x64xbf16>
    %1200 = arith.truncf %1190 : vector<2x16xf32> to vector<2x16xbf16>
    %cst_382 = arith.constant dense<0.000000e+00> : vector<2x64xf32>
    %1201 = tpu.matmul %1200, %1199, %cst_382 {dimension_numbers = #tpu.dot_dimension_numbers<[1], [0], [0], [1], [0, 0, 1, 1], [], []>} : vector<2x16xbf16>, vector<16x64xbf16>, vector<2x64xf32> -> vector<2x64xf32>
    %c2_383 = arith.constant 2 : index
    %c0_384 = arith.constant 0 : index
    %c0_385 = arith.constant 0 : index
    %1202 = vector.load %arg10[%c2_383, %c0_384, %c0_385] : memref<7x16x64xbf16, #tpu.memory_space<vmem>>, vector<1x16x64xbf16>
    %1203 = vector.shape_cast %1202 : vector<1x16x64xbf16> to vector<16x64xbf16>
    %1204 = arith.truncf %1165 : vector<2x16xf32> to vector<2x16xbf16>
    %cst_386 = arith.constant dense<0.000000e+00> : vector<2x64xf32>
    %1205 = tpu.matmul %1204, %1203, %cst_386 {dimension_numbers = #tpu.dot_dimension_numbers<[1], [0], [0], [1], [0, 0, 1, 1], [], []>} : vector<2x16xbf16>, vector<16x64xbf16>, vector<2x64xf32> -> vector<2x64xf32>
    %1206 = arith.addf %1201, %1205 : vector<2x64xf32>
    %c3_387 = arith.constant 3 : index
    %c0_388 = arith.constant 0 : index
    %c0_389 = arith.constant 0 : index
    %1207 = vector.load %arg10[%c3_387, %c0_388, %c0_389] : memref<7x16x64xbf16, #tpu.memory_space<vmem>>, vector<1x16x64xbf16>
    %1208 = vector.shape_cast %1207 : vector<1x16x64xbf16> to vector<16x64xbf16>
    %1209 = arith.truncf %1187 : vector<2x16xf32> to vector<2x16xbf16>
    %cst_390 = arith.constant dense<0.000000e+00> : vector<2x64xf32>
    %1210 = tpu.matmul %1209, %1208, %cst_390 {dimension_numbers = #tpu.dot_dimension_numbers<[1], [0], [0], [1], [0, 0, 1, 1], [], []>} : vector<2x16xbf16>, vector<16x64xbf16>, vector<2x64xf32> -> vector<2x64xf32>
    %1211 = arith.addf %1206, %1210 : vector<2x64xf32>
    %1212 = vector.broadcast %1191 : vector<1x64xf32> to vector<2x64xf32>
    %1213 = arith.addf %1211, %1212 : vector<2x64xf32>
    %1214 = tpu.concatenate %1213, %1213, %1213 in 0 : vector<2x64xf32>, vector<2x64xf32>, vector<2x64xf32> -> vector<6x64xf32>
    %c1_391 = arith.constant 1 : index
    %c0_392 = arith.constant 0 : index
    %c0_393 = arith.constant 0 : index
    %1215 = vector.load %arg10[%c1_391, %c0_392, %c0_393] : memref<7x16x64xbf16, #tpu.memory_space<vmem>>, vector<1x16x64xbf16>
    %1216 = vector.shape_cast %1215 : vector<1x16x64xbf16> to vector<16x64xbf16>
    %1217 = arith.truncf %1143 : vector<6x16xf32> to vector<6x16xbf16>
    %cst_394 = arith.constant dense<0.000000e+00> : vector<6x64xf32>
    %1218 = tpu.matmul %1217, %1216, %cst_394 {dimension_numbers = #tpu.dot_dimension_numbers<[1], [0], [0], [1], [0, 0, 1, 1], [], []>} : vector<6x16xbf16>, vector<16x64xbf16>, vector<6x64xf32> -> vector<6x64xf32>
    %1219 = arith.addf %1214, %1218 : vector<6x64xf32>
    %cst_395 = arith.constant 0.000000e+00 : f32
    %1220 = vector.broadcast %cst_395 : f32 to vector<6x64xf32>
    %1221 = arith.cmpf ogt, %1219, %1220 : vector<6x64xf32>
    %cst_396 = arith.constant 0.00999999977 : f32
    %1222 = vector.broadcast %cst_396 : f32 to vector<6x64xf32>
    %1223 = arith.mulf %1222, %1219 : vector<6x64xf32>
    %1224 = arith.select %1221, %1219, %1223 : vector<6x64xi1>, vector<6x64xf32>
    %1225 = vector.broadcast %1192 : vector<1x64xf32> to vector<6x64xf32>
    %1226 = arith.mulf %1224, %1225 : vector<6x64xf32>
    %cst_397 = arith.constant dense<0.000000e+00> : vector<6xf32>
    %1227 = vector.multi_reduction <add>, %1226, %cst_397 [1] : vector<6x64xf32> to vector<6xf32>
    %1228 = vector.shape_cast %1227 : vector<6xf32> to vector<6x1xf32>
    %1229 = vector.broadcast %1196 : vector<1x1xf32> to vector<6x1xf32>
    %1230 = arith.addf %1228, %1229 : vector<6x1xf32>
    %c4_398 = arith.constant 4 : index
    %c0_399 = arith.constant 0 : index
    %c0_400 = arith.constant 0 : index
    %1231 = vector.load %arg10[%c4_398, %c0_399, %c0_400] : memref<7x16x64xbf16, #tpu.memory_space<vmem>>, vector<1x16x64xbf16>
    %1232 = vector.shape_cast %1231 : vector<1x16x64xbf16> to vector<16x64xbf16>
    %1233 = arith.truncf %1190 : vector<2x16xf32> to vector<2x16xbf16>
    %cst_401 = arith.constant dense<0.000000e+00> : vector<2x64xf32>
    %1234 = tpu.matmul %1233, %1232, %cst_401 {dimension_numbers = #tpu.dot_dimension_numbers<[1], [0], [0], [1], [0, 0, 1, 1], [], []>} : vector<2x16xbf16>, vector<16x64xbf16>, vector<2x64xf32> -> vector<2x64xf32>
    %c5 = arith.constant 5 : index
    %c0_402 = arith.constant 0 : index
    %c0_403 = arith.constant 0 : index
    %1235 = vector.load %arg10[%c5, %c0_402, %c0_403] : memref<7x16x64xbf16, #tpu.memory_space<vmem>>, vector<1x16x64xbf16>
    %1236 = vector.shape_cast %1235 : vector<1x16x64xbf16> to vector<16x64xbf16>
    %1237 = arith.truncf %1165 : vector<2x16xf32> to vector<2x16xbf16>
    %cst_404 = arith.constant dense<0.000000e+00> : vector<2x64xf32>
    %1238 = tpu.matmul %1237, %1236, %cst_404 {dimension_numbers = #tpu.dot_dimension_numbers<[1], [0], [0], [1], [0, 0, 1, 1], [], []>} : vector<2x16xbf16>, vector<16x64xbf16>, vector<2x64xf32> -> vector<2x64xf32>
    %1239 = arith.addf %1234, %1238 : vector<2x64xf32>
    %c6 = arith.constant 6 : index
    %c0_405 = arith.constant 0 : index
    %c0_406 = arith.constant 0 : index
    %1240 = vector.load %arg10[%c6, %c0_405, %c0_406] : memref<7x16x64xbf16, #tpu.memory_space<vmem>>, vector<1x16x64xbf16>
    %1241 = vector.shape_cast %1240 : vector<1x16x64xbf16> to vector<16x64xbf16>
    %1242 = arith.truncf %1187 : vector<2x16xf32> to vector<2x16xbf16>
    %cst_407 = arith.constant dense<0.000000e+00> : vector<2x64xf32>
    %1243 = tpu.matmul %1242, %1241, %cst_407 {dimension_numbers = #tpu.dot_dimension_numbers<[1], [0], [0], [1], [0, 0, 1, 1], [], []>} : vector<2x16xbf16>, vector<16x64xbf16>, vector<2x64xf32> -> vector<2x64xf32>
    %1244 = arith.addf %1239, %1243 : vector<2x64xf32>
    %1245 = vector.broadcast %1193 : vector<1x64xf32> to vector<2x64xf32>
    %1246 = arith.addf %1244, %1245 : vector<2x64xf32>
    %cst_408 = arith.constant 0.000000e+00 : f32
    %1247 = vector.broadcast %cst_408 : f32 to vector<2x64xf32>
    %1248 = arith.cmpf ogt, %1246, %1247 : vector<2x64xf32>
    %cst_409 = arith.constant 0.00999999977 : f32
    %1249 = vector.broadcast %cst_409 : f32 to vector<2x64xf32>
    %1250 = arith.mulf %1249, %1246 : vector<2x64xf32>
    %1251 = arith.select %1248, %1246, %1250 : vector<2x64xi1>, vector<2x64xf32>
    %1252 = vector.broadcast %1194 : vector<1x64xf32> to vector<2x64xf32>
    %1253 = arith.mulf %1251, %1252 : vector<2x64xf32>
    %cst_410 = arith.constant dense<0.000000e+00> : vector<2xf32>
    %1254 = vector.multi_reduction <add>, %1253, %cst_410 [1] : vector<2x64xf32> to vector<2xf32>
    %1255 = vector.shape_cast %1254 : vector<2xf32> to vector<2x1xf32>
    %1256 = vector.broadcast %1197 : vector<1x1xf32> to vector<2x1xf32>
    %1257 = arith.addf %1255, %1256 : vector<2x1xf32>
    %1258 = vector.extract_strided_slice %1230 {offsets = [0, 0], sizes = [2, 1], strides = [1, 1]} : vector<6x1xf32> to vector<2x1xf32>
    %1259 = vector.extract_strided_slice %1230 {offsets = [2, 0], sizes = [2, 1], strides = [1, 1]} : vector<6x1xf32> to vector<2x1xf32>
    %1260 = vector.extract_strided_slice %1230 {offsets = [4, 0], sizes = [2, 1], strides = [1, 1]} : vector<6x1xf32> to vector<2x1xf32>
    %1261 = arith.addf %1258, %1259 : vector<2x1xf32>
    %1262 = arith.addf %1261, %1260 : vector<2x1xf32>
    %cst_411 = arith.constant 0.333333343 : f32
    %1263 = vector.broadcast %cst_411 : f32 to vector<2x1xf32>
    %1264 = arith.mulf %1262, %1263 : vector<2x1xf32>
    %1265 = arith.addf %1258, %1257 : vector<2x1xf32>
    %1266 = arith.subf %1265, %1264 : vector<2x1xf32>
    %1267 = arith.addf %1259, %1257 : vector<2x1xf32>
    %1268 = arith.subf %1267, %1264 : vector<2x1xf32>
    %1269 = arith.addf %1260, %1257 : vector<2x1xf32>
    %1270 = arith.subf %1269, %1264 : vector<2x1xf32>
    %cst_412 = arith.constant 0.000000e+00 : f32
    %1271 = vector.broadcast %cst_412 : f32 to vector<2x125xf32>
    %1272 = tpu.concatenate %1266, %1268, %1270, %1271 in 1 : vector<2x1xf32>, vector<2x1xf32>, vector<2x1xf32>, vector<2x125xf32> -> vector<2x128xf32>
    %c0_413 = arith.constant 0 : index
    %c0_414 = arith.constant 0 : index
    %1273 = vector.load %arg12[%c0_413, %c0_414] : memref<2x128xf32, #tpu.memory_space<vmem>>, vector<2x128xf32>
    tpu.vector_store %arg12[%c0_413, %c0_414], %1272 {strides = array<i32>} : memref<2x128xf32, #tpu.memory_space<vmem>>, vector<2x128xf32>,
    return
  }
}

</mosaic_0001>

<llo_original>
// kernel: tpu_custom_call.1
$region0: #{tpu_custom_call.1}
  #allocation0 [shape = 'u32[]', space=smem, size = 0x4, offset = 0x4, fixed_abs, tag = 'smem constant byte address 0x4 - core index']
  #allocation1 [shape = 'u32[72,128]{1,0:T(1,128)}', space=vmem, size = 0x9000, scoped, tag = 'internal scratch']
  %s0 = inlined_call_operand.hbm [shape: f32[2,16], index: 0, kind: input, shape index: {}]
  %s1 = inlined_call_operand.hbm [shape: f32[30,32], index: 1, kind: input, shape index: {}]
  %s2 = inlined_call_operand.vmem [shape: f32[2,10,32], index: 2, kind: input, shape index: {}]
  %s3 = inlined_call_operand.vmem [shape: s32[10,1], index: 3, kind: input, shape index: {}]
  %s4 = inlined_call_operand.vmem [shape: bf16[3,2,32,96], index: 4, kind: input, shape index: {}]
  %s5 = inlined_call_operand.vmem [shape: bf16[3,2,32,96], index: 5, kind: input, shape index: {}]
  %s6 = inlined_call_operand.hbm [shape: f32[3,2,2,1,96], index: 6, kind: input, shape index: {}]
  %s7 = inlined_call_operand.hbm [shape: bf16[3,32,64], index: 7, kind: input, shape index: {}]
  %s8 = inlined_call_operand.vmem [shape: bf16[3,64,16], index: 8, kind: input, shape index: {}]
  %s9 = inlined_call_operand.hbm [shape: f32[3,2,1,64], index: 9, kind: input, shape index: {}]
  %s10 = inlined_call_operand.hbm [shape: bf16[7,16,64], index: 10, kind: input, shape index: {}]
  %s11 = inlined_call_operand.hbm [shape: f32[5,64], index: 11, kind: input, shape index: {}]
  %s12 = inlined_call_operand.hbm [shape: f32[2,128], index: 12, kind: output, shape index: {}]
  %s13 = sld [smem:[#allocation0]]
  $region86: #{tpu_custom_call.1} parent=0
    _
  %s15 = ssub.s32 1, %s13
  %s16 = scalar_select 0, %s15, %s13
  $region1: #{tpu_custom_call.1} parent=0
    #allocation2 [shape = 'u8[1024]{0}', space=vmem, size = 0x400, scoped, tag = 'input window, operand 0, single buffered']
    #allocation3 [shape = 's32[1]{0}', space=sflag, size = 0x4, scoped, tag = 'scoped memory for tpu_custom_call.1']
    #allocation4 [shape = 's32[1]{0}', space=sflag, size = 0x4, scoped, tag = 'scoped memory for tpu_custom_call.1']
    #allocation5 [shape = 'u8[16384]{0}', space=vmem, size = 0x4000, scoped, tag = 'input window, operand 1, single buffered']
    #allocation6 [shape = 's32[1]{0}', space=sflag, size = 0x4, scoped, tag = 'scoped memory for tpu_custom_call.1']
    #allocation7 [shape = 'u8[6144]{0}', space=vmem, size = 0x1800, scoped, tag = 'input window, operand 6, single buffered']
    #allocation8 [shape = 'u8[24576]{0}', space=vmem, size = 0x6000, scoped, tag = 'input window, operand 7, single buffered']
    #allocation9 [shape = 's32[1]{0}', space=sflag, size = 0x4, scoped, tag = 'scoped memory for tpu_custom_call.1']
    #allocation10 [shape = 'u8[3072]{0}', space=vmem, size = 0xc00, scoped, tag = 'input window, operand 9, single buffered']
    #allocation11 [shape = 'u8[28672]{0}', space=vmem, size = 0x7000, scoped, tag = 'input window, operand 10, single buffered']
    #allocation12 [shape = 's32[1]{0}', space=sflag, size = 0x4, scoped, tag = 'scoped memory for tpu_custom_call.1']
    #allocation13 [shape = 'u8[4096]{0}', space=vmem, size = 0x1000, scoped, tag = 'input window, operand 11, single buffered']
    #allocation14 [shape = 'u8[1024]{0}', space=vmem, size = 0x400, scoped, tag = 'output window, operand 0, single buffered']
    %17 = vsyncpa [#allocation3], 0
    %18 = vsyncpa [#allocation6], 0
    %19 = vsyncpa [#allocation9], 0
    %20 = vsyncpa [#allocation12], 0
    %21 = vsyncpa [#allocation4], 0
    // Predicated region
    $region2: #{tpu_custom_call.1} parent=1 // pred_check
      _
    $region3: #{tpu_custom_call.1} parent=1 // pred_check_branch
      %23 = sbr.rel (0) target = $region5
    $region4: #{tpu_custom_call.1} parent=1 // pred_region
      %25 = vsyncadd [#allocation3], 0
      %s27 = sshll.u32 %s0, 4
      %s28 = int_to_ptr.hbm [resolvable:$true] %s27
      %s29 = sshll.u32 [#allocation2], 4
      %s30 = int_to_ptr.vmem [resolvable:$true] %s29
      %32 = dma.hbm_to_vmem [thread:$0]  %s28, 32, %s30, [#allocation3]
    $region5: #{tpu_custom_call.1} parent=1 // pred_fallthru
      _
    // Predicated region
    $region6: #{tpu_custom_call.1} parent=1 // pred_check
      _
    $region7: #{tpu_custom_call.1} parent=1 // pred_check_branch
      %34 = sbr.rel (0) target = $region9
    $region8: #{tpu_custom_call.1} parent=1 // pred_region
      %36 = vsyncadd [#allocation6], 0
      %s37 = sshll.u32 %s1, 4
      %s38 = int_to_ptr.hbm [resolvable:$true] %s37
      %s39 = sshll.u32 [#allocation5], 4
      %s40 = int_to_ptr.vmem [resolvable:$true] %s39
      %45 = dma.hbm_to_vmem [thread:$0]  %s38, 512, %s40, [#allocation6], 128, 128, 8
    $region9: #{tpu_custom_call.1} parent=1 // pred_fallthru
      _
    // Predicated region
    $region10: #{tpu_custom_call.1} parent=1 // pred_check
      _
    $region11: #{tpu_custom_call.1} parent=1 // pred_check_branch
      %47 = sbr.rel (0) target = $region13
    $region12: #{tpu_custom_call.1} parent=1 // pred_region
      _
    $region13: #{tpu_custom_call.1} parent=1 // pred_fallthru
      _
    // Predicated region
    $region14: #{tpu_custom_call.1} parent=1 // pred_check
      _
    $region15: #{tpu_custom_call.1} parent=1 // pred_check_branch
      %49 = sbr.rel (0) target = $region17
    $region16: #{tpu_custom_call.1} parent=1 // pred_region
      _
    $region17: #{tpu_custom_call.1} parent=1 // pred_fallthru
      _
    // Predicated region
    $region18: #{tpu_custom_call.1} parent=1 // pred_check
      _
    $region19: #{tpu_custom_call.1} parent=1 // pred_check_branch
      %51 = sbr.rel (0) target = $region21
    $region20: #{tpu_custom_call.1} parent=1 // pred_region
      _
    $region21: #{tpu_custom_call.1} parent=1 // pred_fallthru
      _
    // Predicated region
    $region22: #{tpu_custom_call.1} parent=1 // pred_check
      _
    $region23: #{tpu_custom_call.1} parent=1 // pred_check_branch
      %53 = sbr.rel (0) target = $region25
    $region24: #{tpu_custom_call.1} parent=1 // pred_region
      _
    $region25: #{tpu_custom_call.1} parent=1 // pred_fallthru
      _
    // Predicated region
    $region26: #{tpu_custom_call.1} parent=1 // pred_check
      _
    $region27: #{tpu_custom_call.1} parent=1 // pred_check_branch
      %55 = sbr.rel (0) target = $region29
    $region28: #{tpu_custom_call.1} parent=1 // pred_region
      %57 = vsyncadd [#allocation6], 0
      %s58 = sshll.u32 %s6, 4
      %s59 = int_to_ptr.hbm [resolvable:$true] %s58
      %s60 = sshll.u32 [#allocation7], 4
      %s61 = int_to_ptr.vmem [resolvable:$true] %s60
      %66 = dma.hbm_to_vmem [thread:$0]  %s59, 192, %s61, [#allocation6], 16, 16, 1
    $region29: #{tpu_custom_call.1} parent=1 // pred_fallthru
      _
    // Predicated region
    $region30: #{tpu_custom_call.1} parent=1 // pred_check
      _
    $region31: #{tpu_custom_call.1} parent=1 // pred_check_branch
      %68 = sbr.rel (0) target = $region33
    $region32: #{tpu_custom_call.1} parent=1 // pred_region
      %70 = vsyncadd [#allocation9], 0
      %s71 = sshll.u32 %s7, 4
      %s72 = int_to_ptr.hbm [resolvable:$true] %s71
      %s73 = sshll.u32 [#allocation8], 4
      %s74 = int_to_ptr.vmem [resolvable:$true] %s73
      %79 = dma.hbm_to_vmem [thread:$0]  %s72, 768, %s74, [#allocation9], 64, 64, 4
    $region33: #{tpu_custom_call.1} parent=1 // pred_fallthru
      _
    // Predicated region
    $region34: #{tpu_custom_call.1} parent=1 // pred_check
      _
    $region35: #{tpu_custom_call.1} parent=1 // pred_check_branch
      %81 = sbr.rel (0) target = $region37
    $region36: #{tpu_custom_call.1} parent=1 // pred_region
      _
    $region37: #{tpu_custom_call.1} parent=1 // pred_fallthru
      _
    // Predicated region
    $region38: #{tpu_custom_call.1} parent=1 // pred_check
      _
    $region39: #{tpu_custom_call.1} parent=1 // pred_check_branch
      %83 = sbr.rel (0) target = $region41
    $region40: #{tpu_custom_call.1} parent=1 // pred_region
      %85 = vsyncadd [#allocation9], 0
      %s86 = sshll.u32 %s9, 4
      %s87 = int_to_ptr.hbm [resolvable:$true] %s86
      %s88 = sshll.u32 [#allocation10], 4
      %s89 = int_to_ptr.vmem [resolvable:$true] %s88
      %94 = dma.hbm_to_vmem [thread:$0]  %s87, 96, %s89, [#allocation9], 16, 16, 1
    $region41: #{tpu_custom_call.1} parent=1 // pred_fallthru
      _
    // Predicated region
    $region42: #{tpu_custom_call.1} parent=1 // pred_check
      _
    $region43: #{tpu_custom_call.1} parent=1 // pred_check_branch
      %96 = sbr.rel (0) target = $region45
    $region44: #{tpu_custom_call.1} parent=1 // pred_region
      %98 = vsyncadd [#allocation12], 0
      %s99 = sshll.u32 %s10, 4
      %s100 = int_to_ptr.hbm [resolvable:$true] %s99
      %s101 = sshll.u32 [#allocation11], 4
      %s102 = int_to_ptr.vmem [resolvable:$true] %s101
      %107 = dma.hbm_to_vmem [thread:$0]  %s100, 896, %s102, [#allocation12], 64, 64, 4
    $region45: #{tpu_custom_call.1} parent=1 // pred_fallthru
      _
    // Predicated region
    $region46: #{tpu_custom_call.1} parent=1 // pred_check
      _
    $region47: #{tpu_custom_call.1} parent=1 // pred_check_branch
      %109 = sbr.rel (0) target = $region49
    $region48: #{tpu_custom_call.1} parent=1 // pred_region
      %111 = vsyncadd [#allocation12], 0
      %s113 = sshll.u32 %s11, 4
      %s114 = int_to_ptr.hbm [resolvable:$true] %s113
      %s115 = sshll.u32 [#allocation13], 4
      %s116 = int_to_ptr.vmem [resolvable:$true] %s115
      %118 = dma.hbm_to_vmem [thread:$0]  %s114, 128, %s116, [#allocation12]
    $region49: #{tpu_custom_call.1} parent=1 // pred_fallthru
      _
    // Predicated region
    $region50: #{tpu_custom_call.1} parent=1 // pred_check
      _
    $region51: #{tpu_custom_call.1} parent=1 // pred_check_branch
      %120 = sbr.rel (0) target = $region53
    $region52: #{tpu_custom_call.1} parent=1 // pred_region
      %122 = dma.done [#allocation3], 32
    $region53: #{tpu_custom_call.1} parent=1 // pred_fallthru
      _
    // Predicated region
    $region54: #{tpu_custom_call.1} parent=1 // pred_check
      _
    $region55: #{tpu_custom_call.1} parent=1 // pred_check_branch
      %124 = sbr.rel (0) target = $region57
    $region56: #{tpu_custom_call.1} parent=1 // pred_region
      %126 = dma.done [#allocation6], 512
    $region57: #{tpu_custom_call.1} parent=1 // pred_fallthru
      _
    // Predicated region
    $region58: #{tpu_custom_call.1} parent=1 // pred_check
      _
    $region59: #{tpu_custom_call.1} parent=1 // pred_check_branch
      %128 = sbr.rel (0) target = $region61
    $region60: #{tpu_custom_call.1} parent=1 // pred_region
      %130 = dma.done [#allocation6], 192
    $region61: #{tpu_custom_call.1} parent=1 // pred_fallthru
      _
    // Predicated region
    $region62: #{tpu_custom_call.1} parent=1 // pred_check
      _
    $region63: #{tpu_custom_call.1} parent=1 // pred_check_branch
      %132 = sbr.rel (0) target = $region65
    $region64: #{tpu_custom_call.1} parent=1 // pred_region
      %134 = dma.done [#allocation9], 768
    $region65: #{tpu_custom_call.1} parent=1 // pred_fallthru
      _
    // Predicated region
    $region66: #{tpu_custom_call.1} parent=1 // pred_check
      _
    $region67: #{tpu_custom_call.1} parent=1 // pred_check_branch
      %136 = sbr.rel (0) target = $region69
    $region68: #{tpu_custom_call.1} parent=1 // pred_region
      %138 = dma.done [#allocation9], 96
    $region69: #{tpu_custom_call.1} parent=1 // pred_fallthru
      _
    // Predicated region
    $region70: #{tpu_custom_call.1} parent=1 // pred_check
      _
    $region71: #{tpu_custom_call.1} parent=1 // pred_check_branch
      %140 = sbr.rel (0) target = $region73
    $region72: #{tpu_custom_call.1} parent=1 // pred_region
      %142 = dma.done [#allocation12], 896
    $region73: #{tpu_custom_call.1} parent=1 // pred_fallthru
      _
    // Predicated region
    $region74: #{tpu_custom_call.1} parent=1 // pred_check
      _
    $region75: #{tpu_custom_call.1} parent=1 // pred_check_branch
      %144 = sbr.rel (0) target = $region77
    $region76: #{tpu_custom_call.1} parent=1 // pred_region
      %146 = dma.done [#allocation12], 128
    $region77: #{tpu_custom_call.1} parent=1 // pred_fallthru
      _
    %v148 = vld [vmem:[%s3] sm:$0xff]
    %v149 = vld [vmem:[%s3 + $0x8] sm:$0x3]
    %v150 = vld [vmem:[#allocation5] sm:$0xff]
    %v151 = vld [vmem:[#allocation5 + $0x8] sm:$0xff]
    %v152 = vld [vmem:[#allocation5 + $0x10] sm:$0xff]
    %v153 = vld [vmem:[#allocation5 + $0x18] sm:$0x3f]
    %v154 = vld [vmem:[%s4] sm:$0xf]
    %v155 = vld [vmem:[%s4 + $0x4] sm:$0xf]
    %v156 = vld [vmem:[%s4 + $0x8] sm:$0xf]
    %v157 = vld [vmem:[%s4 + $0xc] sm:$0xf]
    %v158 = vld [vmem:[%s5] sm:$0xf]
    %v159 = vld [vmem:[%s5 + $0x4] sm:$0xf]
    %v160 = vld [vmem:[%s5 + $0x8] sm:$0xf]
    %v161 = vld [vmem:[%s5 + $0xc] sm:$0xf]
    %v162 = vld [vmem:[#allocation7] sm:$0x1]
    %s163 = scalar_lea.vmem [#allocation7], 1
    %v164 = vld [vmem:[%s163] sm:$0x1]
    %v166 = vperm.slane %v164, 0
    %v168 = vpack.c.bf16 %v151, %v150
    %v169 = vpack.c.bf16 %v153, %v152
    %v171 = vperm.slane %v162, 0
    %v177 = vunpack.c.l.b16 %v154
    %v178 = vunpack.c.l.b16 %v155
    %v179 = vunpack.c.l.b16 %v156
    %v180 = vunpack.c.l.b16 %v157
    %v181 = vpack.c.b16 %v178, %v177
    %v182 = vpack.c.b16 %v180, %v179
    %vm185 = vcmask 261120
    %v187 = vsel %vm185, %v168, 0
    %v190 = vsel %vm185, %v169, 0
    %192 = vmatpush.bf16.msra.mxu0 0
    %193 = vmatpush.bf16.msra.mxu0 0
    %194 = vmatpush.bf16.msra.mxu0 0
    %195 = vmatpush.bf16.msra.mxu0 0
    %196 = vmatpush.bf16.msra.mxu0 0
    %197 = vmatpush.bf16.msra.mxu0 0
    %198 = vmatpush.bf16.msra.mxu0 %v182
    %199 = vmatpush.bf16.msra.mxu0 %v181
    %200 = vmatmul.bf16.gmra.mxu0 %v187
    %v201 = vpop.f32.mrf.mxu0
    %v202 = vadd.f32 %v171, %v201
    %v203 = vpop.f32.mrf.mxu0
    %v204 = vadd.f32 %v171, %v203
    %205 = vmatmul.bf16.gmra.mxu0 %v190
    %v206 = vpop.f32.mrf.mxu0
    %v207 = vadd.f32 %v171, %v206
    %v208 = vpop.f32.mrf.mxu0
    %v209 = vadd.f32 %v171, %v208
    %210 = vdwg.mxu0
    %v215 = vunpack.c.l.b16 %v158
    %v216 = vunpack.c.l.b16 %v159
    %v217 = vunpack.c.l.b16 %v160
    %v218 = vunpack.c.l.b16 %v161
    %v219 = vpack.c.b16 %v216, %v215
    %v220 = vpack.c.b16 %v218, %v217
    %v224 = vsel %vm185, 0, 0
    %226 = vmatpush.bf16.msra.mxu0 0
    %227 = vmatpush.bf16.msra.mxu0 0
    %228 = vmatpush.bf16.msra.mxu0 0
    %229 = vmatpush.bf16.msra.mxu0 0
    %230 = vmatpush.bf16.msra.mxu0 0
    %231 = vmatpush.bf16.msra.mxu0 0
    %232 = vmatpush.bf16.msra.mxu0 %v220
    %233 = vmatpush.bf16.msra.mxu0 %v219
    %234 = vmatmul.bf16.gmra.mxu0 %v224
    %v235 = vpop.f32.mrf.mxu0
    %v236 = vadd.f32 %v166, %v235
    %v237 = vpop.f32.mrf.mxu0
    %238 = vdwg.mxu0
    %v239 = vadd.f32 %v202, %v236
    %v240 = vsub.f32 0.0, %v239
    %v241 = vmul.f32 %v240, 1.442695
    %v242 = vpow.pop %v241
    %v243 = vadd.f32 %v242, 1.0
    %v244 = vrcp.pop %v243
    %246 = vrot.lane.b32.xlu0 %v236, 64
    %v247 = vpop.permute.xlu0 %246
    %v249 = vmul.f32 %v244, %v247
    %251 = vrot.lane.b32.xlu0 %v249, 64
    %v252 = vpop.permute.xlu0 %251
    %v254 = vadd.f32 %v202, %v252
    %v255 = vtanh.pop %v254
    %v256 = vsub.f32 1.0, %v244
    %258 = vrot.lane.b32.xlu0 %v255, 96
    %v259 = vpop.permute.xlu0 %258
    %v261 = vmul.f32 %v256, %v259
    %v262 = vmul.f32 %v244, 0.0
    %v263 = vadd.f32 %v261, %v262
    %v264 = vpack.c.bf16 %v263, %v263
    %266 = vrot.lane.b32.xlu0 %v264, 96
    %v267 = vpop.permute.xlu0 %266
    %v269 = vsel %vm185, %v267, 0
    %271 = vmatpush.bf16.msra.mxu0 0
    %272 = vmatpush.bf16.msra.mxu0 0
    %273 = vmatpush.bf16.msra.mxu0 0
    %274 = vmatpush.bf16.msra.mxu0 0
    %275 = vmatpush.bf16.msra.mxu0 0
    %276 = vmatpush.bf16.msra.mxu0 0
    %277 = vmatpush.bf16.msra.mxu0 %v220
    %278 = vmatpush.bf16.msra.mxu0 %v219
    %279 = vmatmul.bf16.gmra.mxu0 %v269
    %v280 = vpop.f32.mrf.mxu0
    %v281 = vadd.f32 %v166, %v280
    %v282 = vpop.f32.mrf.mxu0
    %283 = vdwg.mxu0
    %v285 = vrot.slane %v281, 2
    %v287 = vadd.f32 %v202, %v285
    %v288 = vadd.f32 %v204, %v285
    %v289 = vsub.f32 0.0, %v287
    %v290 = vsub.f32 0.0, %v288
    %v291 = vmul.f32 %v289, 1.442695
    %v292 = vpow.pop %v291
    %v293 = vmul.f32 %v290, 1.442695
    %v294 = vpow.pop %v293
    %v295 = vadd.f32 %v292, 1.0
    %v296 = vadd.f32 %v294, 1.0
    %v297 = vrcp.pop %v295
    %v298 = vrcp.pop %v296
    %299 = vrot.lane.b32.xlu0 %v285, 64
    %v300 = vpop.permute.xlu0 %299
    %v302 = vmul.f32 %v297, %v300
    %v303 = vmul.f32 %v298, %v300
    %306 = vrot.lane.b32.xlu0 %v302, 64
    %v307 = vpop.permute.xlu0 %306
    %308 = vrot.lane.b32.xlu0 %v303, 64
    %v309 = vpop.permute.xlu0 %308
    %v312 = vadd.f32 %v202, %v307
    %v313 = vadd.f32 %v204, %v309
    %v314 = vtanh.pop %v312
    %v315 = vtanh.pop %v313
    %v316 = vsub.f32 1.0, %v297
    %v317 = vsub.f32 1.0, %v298
    %320 = vrot.lane.b32.xlu0 %v314, 96
    %v321 = vpop.permute.xlu0 %320
    %322 = vrot.lane.b32.xlu0 %v315, 96
    %v323 = vpop.permute.xlu0 %322
    %v326 = vmul.f32 %v316, %v321
    %v327 = vmul.f32 %v317, %v323
    %v329 = vrot.slane %v263, 2
    %v331 = vmul.f32 %v297, %v329
    %v332 = vmul.f32 %v298, %v329
    %v333 = vadd.f32 %v326, %v331
    %v334 = vadd.f32 %v327, %v332
    %v335 = vpack.c.bf16 %v334, %v333
    %v337 = vrot.slane %v335, 3
    %338 = vrot.lane.b32.xlu0 %v337, 96
    %v339 = vpop.permute.xlu0 %338
    %v341 = vsel %vm185, %v339, 0
    %343 = vmatpush.bf16.msra.mxu0 0
    %344 = vmatpush.bf16.msra.mxu0 0
    %345 = vmatpush.bf16.msra.mxu0 0
    %346 = vmatpush.bf16.msra.mxu0 0
    %347 = vmatpush.bf16.msra.mxu0 0
    %348 = vmatpush.bf16.msra.mxu0 0
    %349 = vmatpush.bf16.msra.mxu0 %v220
    %350 = vmatpush.bf16.msra.mxu0 %v219
    %351 = vmatmul.bf16.gmra.mxu0 %v341
    %v352 = vpop.f32.mrf.mxu0
    %v353 = vadd.f32 %v166, %v352
    %v354 = vpop.f32.mrf.mxu0
    %355 = vdwg.mxu0
    %v357 = vrot.slane %v353, 4
    %v359 = vadd.f32 %v204, %v357
    %v360 = vadd.f32 %v207, %v357
    %v361 = vsub.f32 0.0, %v359
    %v362 = vsub.f32 0.0, %v360
    %v363 = vmul.f32 %v361, 1.442695
    %v364 = vpow.pop %v363
    %v365 = vmul.f32 %v362, 1.442695
    %v366 = vpow.pop %v365
    %v367 = vadd.f32 %v364, 1.0
    %v368 = vadd.f32 %v366, 1.0
    %v369 = vrcp.pop %v367
    %v370 = vrcp.pop %v368
    %371 = vrot.lane.b32.xlu0 %v357, 64
    %v372 = vpop.permute.xlu0 %371
    %v374 = vmul.f32 %v369, %v372
    %v375 = vmul.f32 %v370, %v372
    %378 = vrot.lane.b32.xlu0 %v374, 64
    %v379 = vpop.permute.xlu0 %378
    %380 = vrot.lane.b32.xlu0 %v375, 64
    %v381 = vpop.permute.xlu0 %380
    %v384 = vadd.f32 %v204, %v379
    %v385 = vadd.f32 %v207, %v381
    %v386 = vtanh.pop %v384
    %v387 = vtanh.pop %v385
    %v388 = vsub.f32 1.0, %v369
    %v389 = vsub.f32 1.0, %v370
    %392 = vrot.lane.b32.xlu0 %v386, 96
    %v393 = vpop.permute.xlu0 %392
    %394 = vrot.lane.b32.xlu0 %v387, 96
    %v395 = vpop.permute.xlu0 %394
    %v398 = vmul.f32 %v388, %v393
    %v399 = vmul.f32 %v389, %v395
    %vm402 = vcmask 1045504
    %v403 = vrot.slane %v333, 2
    %v404 = vrot.slane %v334, 2
    %v405 = vsel %vm402, %v403, %v404
    %v408 = vmul.f32 %v369, %v405
    %v409 = vmul.f32 %v370, %v404
    %v410 = vadd.f32 %v398, %v408
    %v411 = vadd.f32 %v399, %v409
    %v412 = vpack.c.bf16 %v411, %v410
    %v414 = vrot.slane %v412, 2
    %415 = vrot.lane.b32.xlu0 %v414, 96
    %v416 = vpop.permute.xlu0 %415
    %v418 = vsel %vm185, %v416, 0
    %420 = vmatpush.bf16.msra.mxu0 0
    %421 = vmatpush.bf16.msra.mxu0 0
    %422 = vmatpush.bf16.msra.mxu0 0
    %423 = vmatpush.bf16.msra.mxu0 0
    %424 = vmatpush.bf16.msra.mxu0 0
    %425 = vmatpush.bf16.msra.mxu0 0
    %426 = vmatpush.bf16.msra.mxu0 %v220
    %427 = vmatpush.bf16.msra.mxu0 %v219
    %428 = vmatmul.bf16.gmra.mxu0 %v418
    %v429 = vpop.f32.mrf.mxu0
    %v430 = vadd.f32 %v166, %v429
    %v431 = vpop.f32.mrf.mxu0
    %432 = vdwg.mxu0
    %v434 = vrot.slane %v430, 6
    %v436 = vadd.f32 %v207, %v434
    %v437 = vsub.f32 0.0, %v436
    %v438 = vmul.f32 %v437, 1.442695
    %v439 = vpow.pop %v438
    %v440 = vadd.f32 %v439, 1.0
    %v441 = vrcp.pop %v440
    %442 = vrot.lane.b32.xlu0 %v434, 64
    %v443 = vpop.permute.xlu0 %442
    %v445 = vmul.f32 %v441, %v443
    %447 = vrot.lane.b32.xlu0 %v445, 64
    %v448 = vpop.permute.xlu0 %447
    %v450 = vadd.f32 %v207, %v448
    %v451 = vtanh.pop %v450
    %v452 = vsub.f32 1.0, %v441
    %454 = vrot.lane.b32.xlu0 %v451, 96
    %v455 = vpop.permute.xlu0 %454
    %v457 = vmul.f32 %v452, %v455
    %v460 = vrot.slane %v410, 2
    %v461 = vrot.slane %v411, 2
    %v462 = vsel %vm402, %v460, %v461
    %v464 = vmul.f32 %v441, %v462
    %v465 = vadd.f32 %v457, %v464
    %v466 = vpack.c.bf16 %v465, %v465
    %v468 = vrot.slane %v466, 1
    %469 = vrot.lane.b32.xlu0 %v468, 96
    %v470 = vpop.permute.xlu0 %469
    %v472 = vsel %vm185, %v470, 0
    %474 = vmatpush.bf16.msra.mxu0 0
    %475 = vmatpush.bf16.msra.mxu0 0
    %476 = vmatpush.bf16.msra.mxu0 0
    %477 = vmatpush.bf16.msra.mxu0 0
    %478 = vmatpush.bf16.msra.mxu0 0
    %479 = vmatpush.bf16.msra.mxu0 0
    %480 = vmatpush.bf16.msra.mxu0 %v220
    %481 = vmatpush.bf16.msra.mxu0 %v219
    %482 = vmatmul.bf16.gmra.mxu0 %v472
    %v483 = vpop.f32.mrf.mxu0
    %v484 = vadd.f32 %v166, %v483
    %v485 = vpop.f32.mrf.mxu0
    %486 = vdwg.mxu0
    %v487 = vadd.f32 %v209, %v484
    %v488 = vsub.f32 0.0, %v487
    %v489 = vmul.f32 %v488, 1.442695
    %v490 = vpow.pop %v489
    %v491 = vadd.f32 %v490, 1.0
    %v492 = vrcp.pop %v491
    %494 = vrot.lane.b32.xlu0 %v484, 64
    %v495 = vpop.permute.xlu0 %494
    %v497 = vmul.f32 %v492, %v495
    %499 = vrot.lane.b32.xlu0 %v497, 64
    %v500 = vpop.permute.xlu0 %499
    %v502 = vadd.f32 %v209, %v500
    %v503 = vtanh.pop %v502
    %v504 = vsub.f32 1.0, %v492
    %506 = vrot.lane.b32.xlu0 %v503, 96
    %v507 = vpop.permute.xlu0 %506
    %v509 = vmul.f32 %v504, %v507
    %v511 = vrot.slane %v465, 2
    %v513 = vmul.f32 %v492, %v511
    %v514 = vadd.f32 %v509, %v513
    %v515 = vsel %vm402, %v263, %v333
    %vm516 = vcmask 1043456
    %v517 = vsel %vm516, %v334, %v410
    %vm518 = vcmask 1041408
    %v519 = vsel %vm518, %v411, %v465
    %s520 = scalar_lea.vmem %s4, 16
    %v521 = vld [vmem:[%s520] sm:$0xf]
    %v522 = vld [vmem:[%s520 + $0x4] sm:$0xf]
    %v523 = vld [vmem:[%s520 + $0x8] sm:$0xf]
    %v524 = vld [vmem:[%s520 + $0xc] sm:$0xf]
    %s525 = scalar_lea.vmem %s5, 16
    %v526 = vld [vmem:[%s525] sm:$0xf]
    %v527 = vld [vmem:[%s525 + $0x4] sm:$0xf]
    %v528 = vld [vmem:[%s525 + $0x8] sm:$0xf]
    %v529 = vld [vmem:[%s525 + $0xc] sm:$0xf]
    %s530 = scalar_lea.vmem [#allocation7], 2
    %v531 = vld [vmem:[%s530] sm:$0x1]
    %s532 = scalar_lea.vmem [#allocation7], 3
    %v533 = vld [vmem:[%s532] sm:$0x1]
    %v535 = vperm.slane %v533, 0
    %v537 = vpack.c.bf16 %v517, %v515
    %v538 = vpack.c.bf16 %v514, %v519
    %v540 = vperm.slane %v531, 0
    %544 = vrot.lane.b32.xlu0 %v537, 96
    %v545 = vpop.permute.xlu0 %544
    %546 = vrot.lane.b32.xlu0 %v538, 96
    %v547 = vpop.permute.xlu0 %546
    %v552 = vunpack.c.l.b16 %v521
    %v553 = vunpack.c.l.b16 %v522
    %v554 = vunpack.c.l.b16 %v523
    %v555 = vunpack.c.l.b16 %v524
    %v556 = vpack.c.b16 %v553, %v552
    %v557 = vpack.c.b16 %v555, %v554
    %v561 = vsel %vm185, %v545, 0
    %v564 = vsel %vm185, %v547, 0
    %566 = vmatpush.bf16.msra.mxu0 0
    %567 = vmatpush.bf16.msra.mxu0 0
    %568 = vmatpush.bf16.msra.mxu0 0
    %569 = vmatpush.bf16.msra.mxu0 0
    %570 = vmatpush.bf16.msra.mxu0 0
    %571 = vmatpush.bf16.msra.mxu0 0
    %572 = vmatpush.bf16.msra.mxu0 %v557
    %573 = vmatpush.bf16.msra.mxu0 %v556
    %574 = vmatmul.bf16.gmra.mxu0 %v561
    %v575 = vpop.f32.mrf.mxu0
    %v576 = vadd.f32 %v540, %v575
    %v577 = vpop.f32.mrf.mxu0
    %v578 = vadd.f32 %v540, %v577
    %579 = vmatmul.bf16.gmra.mxu0 %v564
    %v580 = vpop.f32.mrf.mxu0
    %v581 = vadd.f32 %v540, %v580
    %v582 = vpop.f32.mrf.mxu0
    %v583 = vadd.f32 %v540, %v582
    %584 = vdwg.mxu0
    %v589 = vunpack.c.l.b16 %v526
    %v590 = vunpack.c.l.b16 %v527
    %v591 = vunpack.c.l.b16 %v528
    %v592 = vunpack.c.l.b16 %v529
    %v593 = vpack.c.b16 %v590, %v589
    %v594 = vpack.c.b16 %v592, %v591
    %597 = vmatpush.bf16.msra.mxu0 0
    %598 = vmatpush.bf16.msra.mxu0 0
    %599 = vmatpush.bf16.msra.mxu0 0
    %600 = vmatpush.bf16.msra.mxu0 0
    %601 = vmatpush.bf16.msra.mxu0 0
    %602 = vmatpush.bf16.msra.mxu0 0
    %603 = vmatpush.bf16.msra.mxu0 %v594
    %604 = vmatpush.bf16.msra.mxu0 %v593
    %605 = vmatmul.bf16.gmra.mxu0 %v224
    %v606 = vpop.f32.mrf.mxu0
    %v607 = vadd.f32 %v535, %v606
    %v608 = vpop.f32.mrf.mxu0
    %609 = vdwg.mxu0
    %v610 = vadd.f32 %v576, %v607
    %v611 = vsub.f32 0.0, %v610
    %v612 = vmul.f32 %v611, 1.442695
    %v613 = vpow.pop %v612
    %v614 = vadd.f32 %v613, 1.0
    %v615 = vrcp.pop %v614
    %617 = vrot.lane.b32.xlu0 %v607, 64
    %v618 = vpop.permute.xlu0 %617
    %v620 = vmul.f32 %v615, %v618
    %622 = vrot.lane.b32.xlu0 %v620, 64
    %v623 = vpop.permute.xlu0 %622
    %v625 = vadd.f32 %v576, %v623
    %v626 = vtanh.pop %v625
    %v627 = vsub.f32 1.0, %v615
    %629 = vrot.lane.b32.xlu0 %v626, 96
    %v630 = vpop.permute.xlu0 %629
    %v632 = vmul.f32 %v627, %v630
    %v633 = vmul.f32 %v615, 0.0
    %v634 = vadd.f32 %v632, %v633
    %v635 = vpack.c.bf16 %v634, %v634
    %637 = vrot.lane.b32.xlu0 %v635, 96
    %v638 = vpop.permute.xlu0 %637
    %v640 = vsel %vm185, %v638, 0
    %642 = vmatpush.bf16.msra.mxu0 0
    %643 = vmatpush.bf16.msra.mxu0 0
    %644 = vmatpush.bf16.msra.mxu0 0
    %645 = vmatpush.bf16.msra.mxu0 0
    %646 = vmatpush.bf16.msra.mxu0 0
    %647 = vmatpush.bf16.msra.mxu0 0
    %648 = vmatpush.bf16.msra.mxu0 %v594
    %649 = vmatpush.bf16.msra.mxu0 %v593
    %650 = vmatmul.bf16.gmra.mxu0 %v640
    %v651 = vpop.f32.mrf.mxu0
    %v652 = vadd.f32 %v535, %v651
    %v653 = vpop.f32.mrf.mxu0
    %654 = vdwg.mxu0
    %v656 = vrot.slane %v652, 2
    %v658 = vadd.f32 %v576, %v656
    %v659 = vadd.f32 %v578, %v656
    %v660 = vsub.f32 0.0, %v658
    %v661 = vsub.f32 0.0, %v659
    %v662 = vmul.f32 %v660, 1.442695
    %v663 = vpow.pop %v662
    %v664 = vmul.f32 %v661, 1.442695
    %v665 = vpow.pop %v664
    %v666 = vadd.f32 %v663, 1.0
    %v667 = vadd.f32 %v665, 1.0
    %v668 = vrcp.pop %v666
    %v669 = vrcp.pop %v667
    %670 = vrot.lane.b32.xlu0 %v656, 64
    %v671 = vpop.permute.xlu0 %670
    %v673 = vmul.f32 %v668, %v671
    %v674 = vmul.f32 %v669, %v671
    %677 = vrot.lane.b32.xlu0 %v673, 64
    %v678 = vpop.permute.xlu0 %677
    %679 = vrot.lane.b32.xlu0 %v674, 64
    %v680 = vpop.permute.xlu0 %679
    %v683 = vadd.f32 %v576, %v678
    %v684 = vadd.f32 %v578, %v680
    %v685 = vtanh.pop %v683
    %v686 = vtanh.pop %v684
    %v687 = vsub.f32 1.0, %v668
    %v688 = vsub.f32 1.0, %v669
    %691 = vrot.lane.b32.xlu0 %v685, 96
    %v692 = vpop.permute.xlu0 %691
    %693 = vrot.lane.b32.xlu0 %v686, 96
    %v694 = vpop.permute.xlu0 %693
    %v697 = vmul.f32 %v687, %v692
    %v698 = vmul.f32 %v688, %v694
    %v700 = vrot.slane %v634, 2
    %v702 = vmul.f32 %v668, %v700
    %v703 = vmul.f32 %v669, %v700
    %v704 = vadd.f32 %v697, %v702
    %v705 = vadd.f32 %v698, %v703
    %v706 = vpack.c.bf16 %v705, %v704
    %v708 = vrot.slane %v706, 3
    %709 = vrot.lane.b32.xlu0 %v708, 96
    %v710 = vpop.permute.xlu0 %709
    %v712 = vsel %vm185, %v710, 0
    %714 = vmatpush.bf16.msra.mxu0 0
    %715 = vmatpush.bf16.msra.mxu0 0
    %716 = vmatpush.bf16.msra.mxu0 0
    %717 = vmatpush.bf16.msra.mxu0 0
    %718 = vmatpush.bf16.msra.mxu0 0
    %719 = vmatpush.bf16.msra.mxu0 0
    %720 = vmatpush.bf16.msra.mxu0 %v594
    %721 = vmatpush.bf16.msra.mxu0 %v593
    %722 = vmatmul.bf16.gmra.mxu0 %v712
    %v723 = vpop.f32.mrf.mxu0
    %v724 = vadd.f32 %v535, %v723
    %v725 = vpop.f32.mrf.mxu0
    %726 = vdwg.mxu0
    %v728 = vrot.slane %v724, 4
    %v730 = vadd.f32 %v578, %v728
    %v731 = vadd.f32 %v581, %v728
    %v732 = vsub.f32 0.0, %v730
    %v733 = vsub.f32 0.0, %v731
    %v734 = vmul.f32 %v732, 1.442695
    %v735 = vpow.pop %v734
    %v736 = vmul.f32 %v733, 1.442695
    %v737 = vpow.pop %v736
    %v738 = vadd.f32 %v735, 1.0
    %v739 = vadd.f32 %v737, 1.0
    %v740 = vrcp.pop %v738
    %v741 = vrcp.pop %v739
    %742 = vrot.lane.b32.xlu0 %v728, 64
    %v743 = vpop.permute.xlu0 %742
    %v745 = vmul.f32 %v740, %v743
    %v746 = vmul.f32 %v741, %v743
    %749 = vrot.lane.b32.xlu0 %v745, 64
    %v750 = vpop.permute.xlu0 %749
    %751 = vrot.lane.b32.xlu0 %v746, 64
    %v752 = vpop.permute.xlu0 %751
    %v755 = vadd.f32 %v578, %v750
    %v756 = vadd.f32 %v581, %v752
    %v757 = vtanh.pop %v755
    %v758 = vtanh.pop %v756
    %v759 = vsub.f32 1.0, %v740
    %v760 = vsub.f32 1.0, %v741
    %763 = vrot.lane.b32.xlu0 %v757, 96
    %v764 = vpop.permute.xlu0 %763
    %765 = vrot.lane.b32.xlu0 %v758, 96
    %v766 = vpop.permute.xlu0 %765
    %v769 = vmul.f32 %v759, %v764
    %v770 = vmul.f32 %v760, %v766
    %v773 = vrot.slane %v704, 2
    %v774 = vrot.slane %v705, 2
    %v775 = vsel %vm402, %v773, %v774
    %v778 = vmul.f32 %v740, %v775
    %v779 = vmul.f32 %v741, %v774
    %v780 = vadd.f32 %v769, %v778
    %v781 = vadd.f32 %v770, %v779
    %v782 = vpack.c.bf16 %v781, %v780
    %v784 = vrot.slane %v782, 2
    %785 = vrot.lane.b32.xlu0 %v784, 96
    %v786 = vpop.permute.xlu0 %785
    %v788 = vsel %vm185, %v786, 0
    %790 = vmatpush.bf16.msra.mxu0 0
    %791 = vmatpush.bf16.msra.mxu0 0
    %792 = vmatpush.bf16.msra.mxu0 0
    %793 = vmatpush.bf16.msra.mxu0 0
    %794 = vmatpush.bf16.msra.mxu0 0
    %795 = vmatpush.bf16.msra.mxu0 0
    %796 = vmatpush.bf16.msra.mxu0 %v594
    %797 = vmatpush.bf16.msra.mxu0 %v593
    %798 = vmatmul.bf16.gmra.mxu0 %v788
    %v799 = vpop.f32.mrf.mxu0
    %v800 = vadd.f32 %v535, %v799
    %v801 = vpop.f32.mrf.mxu0
    %802 = vdwg.mxu0
    %v804 = vrot.slane %v800, 6
    %v806 = vadd.f32 %v581, %v804
    %v807 = vsub.f32 0.0, %v806
    %v808 = vmul.f32 %v807, 1.442695
    %v809 = vpow.pop %v808
    %v810 = vadd.f32 %v809, 1.0
    %v811 = vrcp.pop %v810
    %812 = vrot.lane.b32.xlu0 %v804, 64
    %v813 = vpop.permute.xlu0 %812
    %v815 = vmul.f32 %v811, %v813
    %817 = vrot.lane.b32.xlu0 %v815, 64
    %v818 = vpop.permute.xlu0 %817
    %v820 = vadd.f32 %v581, %v818
    %v821 = vtanh.pop %v820
    %v822 = vsub.f32 1.0, %v811
    %824 = vrot.lane.b32.xlu0 %v821, 96
    %v825 = vpop.permute.xlu0 %824
    %v827 = vmul.f32 %v822, %v825
    %v830 = vrot.slane %v780, 2
    %v831 = vrot.slane %v781, 2
    %v832 = vsel %vm402, %v830, %v831
    %v834 = vmul.f32 %v811, %v832
    %v835 = vadd.f32 %v827, %v834
    %v836 = vpack.c.bf16 %v835, %v835
    %v838 = vrot.slane %v836, 1
    %839 = vrot.lane.b32.xlu0 %v838, 96
    %v840 = vpop.permute.xlu0 %839
    %v842 = vsel %vm185, %v840, 0
    %844 = vmatpush.bf16.msra.mxu0 0
    %845 = vmatpush.bf16.msra.mxu0 0
    %846 = vmatpush.bf16.msra.mxu0 0
    %847 = vmatpush.bf16.msra.mxu0 0
    %848 = vmatpush.bf16.msra.mxu0 0
    %849 = vmatpush.bf16.msra.mxu0 0
    %850 = vmatpush.bf16.msra.mxu0 %v594
    %851 = vmatpush.bf16.msra.mxu0 %v593
    %852 = vmatmul.bf16.gmra.mxu0 %v842
    %v853 = vpop.f32.mrf.mxu0
    %v854 = vadd.f32 %v535, %v853
    %v855 = vpop.f32.mrf.mxu0
    %856 = vdwg.mxu0
    %v857 = vadd.f32 %v583, %v854
    %v858 = vsub.f32 0.0, %v857
    %v859 = vmul.f32 %v858, 1.442695
    %v860 = vpow.pop %v859
    %v861 = vadd.f32 %v860, 1.0
    %v862 = vrcp.pop %v861
    %864 = vrot.lane.b32.xlu0 %v854, 64
    %v865 = vpop.permute.xlu0 %864
    %v867 = vmul.f32 %v862, %v865
    %869 = vrot.lane.b32.xlu0 %v867, 64
    %v870 = vpop.permute.xlu0 %869
    %v872 = vadd.f32 %v583, %v870
    %v873 = vtanh.pop %v872
    %v874 = vsub.f32 1.0, %v862
    %876 = vrot.lane.b32.xlu0 %v873, 96
    %v877 = vpop.permute.xlu0 %876
    %v879 = vmul.f32 %v874, %v877
    %v881 = vrot.slane %v835, 2
    %v883 = vmul.f32 %v862, %v881
    %v884 = vadd.f32 %v879, %v883
    %vm885 = vcmp.eq.s32.totalorder %v148, 2
    %v886 = vsel %vm885, 1, 0
    %887 = vset.pattern.permute.xlu0 0
    %888 = vperm.xlu0 %887, %v886
    %v889 = vpop.permute.xlu0 %888
    %vm890 = vcmp.eq.s32.totalorder %v889, 1
    %v891 = vrot.slane %v704, 6
    %v892 = vrot.slane %v705, 6
    %v893 = vsel %vm518, %v891, %v892
    %894 = vrot.lane.b32.xlu0 %v893, 96
    %v895 = vpop.permute.xlu0 %894
    %897 = vrot.lane.b32.xlu0 %v634, 96
    %v898 = vpop.permute.xlu0 %897
    %v900 = vsel %vm890, %v895, %v898
    %vm901 = vcmp.eq.s32.totalorder %v148, 3
    %v902 = vsel %vm901, 1, 0
    %903 = vset.pattern.permute.xlu0 0
    %904 = vperm.xlu0 %903, %v902
    %v905 = vpop.permute.xlu0 %904
    %vm906 = vcmp.eq.s32.totalorder %v905, 1
    %v907 = vrot.slane %v780, 4
    %v908 = vrot.slane %v781, 4
    %v909 = vsel %vm516, %v907, %v908
    %910 = vrot.lane.b32.xlu0 %v909, 96
    %v911 = vpop.permute.xlu0 %910
    %v913 = vsel %vm906, %v911, %v900
    %vm914 = vcmp.eq.s32.totalorder %v148, 4
    %v915 = vsel %vm914, 1, 0
    %916 = vset.pattern.permute.xlu0 0
    %917 = vperm.xlu0 %916, %v915
    %v918 = vpop.permute.xlu0 %917
    %vm919 = vcmp.eq.s32.totalorder %v918, 1
    %920 = vrot.lane.b32.xlu0 %v881, 96
    %v921 = vpop.permute.xlu0 %920
    %v923 = vsel %vm919, %v921, %v913
    %vm924 = vcmp.eq.s32.totalorder %v148, 5
    %v925 = vsel %vm924, 1, 0
    %926 = vset.pattern.permute.xlu0 0
    %927 = vperm.xlu0 %926, %v925
    %v928 = vpop.permute.xlu0 %927
    %vm929 = vcmp.eq.s32.totalorder %v928, 1
    %931 = vrot.lane.b32.xlu0 %v923, 32
    %v932 = vpop.permute.xlu0 %931
    %v934 = vsel %vm929, %v884, %v932
    %v935 = vld [vmem:[%s2] sm:$0xff]
    %v936 = vld [vmem:[%s2 + $0x8] sm:$0x3]
    %s937 = scalar_lea.vmem %s4, 32
    %v938 = vld [vmem:[%s937] sm:$0xf]
    %v939 = vld [vmem:[%s937 + $0x4] sm:$0xf]
    %v940 = vld [vmem:[%s937 + $0x8] sm:$0xf]
    %v941 = vld [vmem:[%s937 + $0xc] sm:$0xf]
    %s942 = scalar_lea.vmem %s5, 32
    %v943 = vld [vmem:[%s942] sm:$0xf]
    %v944 = vld [vmem:[%s942 + $0x4] sm:$0xf]
    %v945 = vld [vmem:[%s942 + $0x8] sm:$0xf]
    %v946 = vld [vmem:[%s942 + $0xc] sm:$0xf]
    %s947 = scalar_lea.vmem [#allocation7], 4
    %v948 = vld [vmem:[%s947] sm:$0x1]
    %s949 = scalar_lea.vmem [#allocation7], 5
    %v950 = vld [vmem:[%s949] sm:$0x1]
    %v952 = vperm.slane %v950, 0
    %v954 = vpack.c.bf16 %v936, %v935
    %v956 = vperm.slane %v948, 0
    %v962 = vunpack.c.l.b16 %v938
    %v963 = vunpack.c.l.b16 %v939
    %v964 = vunpack.c.l.b16 %v940
    %v965 = vunpack.c.l.b16 %v941
    %v966 = vpack.c.b16 %v963, %v962
    %v967 = vpack.c.b16 %v965, %v964
    %v971 = vsel %vm185, %v954, 0
    %973 = vmatpush.bf16.msra.mxu0 0
    %974 = vmatpush.bf16.msra.mxu0 0
    %975 = vmatpush.bf16.msra.mxu0 0
    %976 = vmatpush.bf16.msra.mxu0 0
    %977 = vmatpush.bf16.msra.mxu0 0
    %978 = vmatpush.bf16.msra.mxu0 0
    %979 = vmatpush.bf16.msra.mxu0 %v967
    %980 = vmatpush.bf16.msra.mxu0 %v966
    %981 = vmatmul.bf16.gmra.mxu0 %v971
    %v982 = vpop.f32.mrf.mxu0
    %v983 = vadd.f32 %v956, %v982
    %v984 = vpop.f32.mrf.mxu0
    %v985 = vadd.f32 %v956, %v984
    %986 = vdwg.mxu0
    %v991 = vunpack.c.l.b16 %v943
    %v992 = vunpack.c.l.b16 %v944
    %v993 = vunpack.c.l.b16 %v945
    %v994 = vunpack.c.l.b16 %v946
    %v995 = vpack.c.b16 %v992, %v991
    %v996 = vpack.c.b16 %v994, %v993
    %999 = vmatpush.bf16.msra.mxu0 0
    %1000 = vmatpush.bf16.msra.mxu0 0
    %1001 = vmatpush.bf16.msra.mxu0 0
    %1002 = vmatpush.bf16.msra.mxu0 0
    %1003 = vmatpush.bf16.msra.mxu0 0
    %1004 = vmatpush.bf16.msra.mxu0 0
    %1005 = vmatpush.bf16.msra.mxu0 %v996
    %1006 = vmatpush.bf16.msra.mxu0 %v995
    %1007 = vmatmul.bf16.gmra.mxu0 %v224
    %v1008 = vpop.f32.mrf.mxu0
    %v1009 = vadd.f32 %v952, %v1008
    %v1010 = vpop.f32.mrf.mxu0
    %1011 = vdwg.mxu0
    %v1012 = vadd.f32 %v983, %v1009
    %v1013 = vsub.f32 0.0, %v1012
    %v1014 = vmul.f32 %v1013, 1.442695
    %v1015 = vpow.pop %v1014
    %v1016 = vadd.f32 %v1015, 1.0
    %v1017 = vrcp.pop %v1016
    %1019 = vrot.lane.b32.xlu0 %v1009, 64
    %v1020 = vpop.permute.xlu0 %1019
    %v1022 = vmul.f32 %v1017, %v1020
    %1024 = vrot.lane.b32.xlu0 %v1022, 64
    %v1025 = vpop.permute.xlu0 %1024
    %v1027 = vadd.f32 %v983, %v1025
    %v1028 = vtanh.pop %v1027
    %v1029 = vsub.f32 1.0, %v1017
    %1031 = vrot.lane.b32.xlu0 %v1028, 96
    %v1032 = vpop.permute.xlu0 %1031
    %v1034 = vmul.f32 %v1029, %v1032
    %v1035 = vmul.f32 %v1017, 0.0
    %v1036 = vadd.f32 %v1034, %v1035
    %v1037 = vpack.c.bf16 %v1036, %v1036
    %1039 = vrot.lane.b32.xlu0 %v1037, 96
    %v1040 = vpop.permute.xlu0 %1039
    %v1042 = vsel %vm185, %v1040, 0
    %1044 = vmatpush.bf16.msra.mxu0 0
    %1045 = vmatpush.bf16.msra.mxu0 0
    %1046 = vmatpush.bf16.msra.mxu0 0
    %1047 = vmatpush.bf16.msra.mxu0 0
    %1048 = vmatpush.bf16.msra.mxu0 0
    %1049 = vmatpush.bf16.msra.mxu0 0
    %1050 = vmatpush.bf16.msra.mxu0 %v996
    %1051 = vmatpush.bf16.msra.mxu0 %v995
    %1052 = vmatmul.bf16.gmra.mxu0 %v1042
    %v1053 = vpop.f32.mrf.mxu0
    %v1054 = vadd.f32 %v952, %v1053
    %v1055 = vpop.f32.mrf.mxu0
    %1056 = vdwg.mxu0
    %v1058 = vrot.slane %v1054, 6
    %v1060 = vadd.f32 %v983, %v1058
    %v1061 = vsub.f32 0.0, %v1060
    %v1062 = vmul.f32 %v1061, 1.442695
    %v1063 = vpow.pop %v1062
    %v1064 = vadd.f32 %v1063, 1.0
    %v1065 = vrcp.pop %v1064
    %1066 = vrot.lane.b32.xlu0 %v1058, 64
    %v1067 = vpop.permute.xlu0 %1066
    %v1069 = vmul.f32 %v1065, %v1067
    %1071 = vrot.lane.b32.xlu0 %v1069, 64
    %v1072 = vpop.permute.xlu0 %1071
    %v1074 = vadd.f32 %v983, %v1072
    %v1075 = vtanh.pop %v1074
    %v1076 = vsub.f32 1.0, %v1065
    %1078 = vrot.lane.b32.xlu0 %v1075, 96
    %v1079 = vpop.permute.xlu0 %1078
    %v1081 = vmul.f32 %v1076, %v1079
    %v1083 = vrot.slane %v1036, 6
    %v1085 = vmul.f32 %v1065, %v1083
    %v1086 = vadd.f32 %v1081, %v1085
    %v1087 = vpack.c.bf16 %v1086, %v1086
    %v1089 = vrot.slane %v1087, 1
    %1090 = vrot.lane.b32.xlu0 %v1089, 96
    %v1091 = vpop.permute.xlu0 %1090
    %v1093 = vsel %vm185, %v1091, 0
    %1095 = vmatpush.bf16.msra.mxu0 0
    %1096 = vmatpush.bf16.msra.mxu0 0
    %1097 = vmatpush.bf16.msra.mxu0 0
    %1098 = vmatpush.bf16.msra.mxu0 0
    %1099 = vmatpush.bf16.msra.mxu0 0
    %1100 = vmatpush.bf16.msra.mxu0 0
    %1101 = vmatpush.bf16.msra.mxu0 %v996
    %1102 = vmatpush.bf16.msra.mxu0 %v995
    %1103 = vmatmul.bf16.gmra.mxu0 %v1093
    %v1104 = vpop.f32.mrf.mxu0
    %v1105 = vadd.f32 %v952, %v1104
    %v1106 = vpop.f32.mrf.mxu0
    %1107 = vdwg.mxu0
    %v1109 = vrot.slane %v1105, 4
    %v1111 = vadd.f32 %v983, %v1109
    %v1112 = vsub.f32 0.0, %v1111
    %v1113 = vmul.f32 %v1112, 1.442695
    %v1114 = vpow.pop %v1113
    %v1115 = vadd.f32 %v1114, 1.0
    %v1116 = vrcp.pop %v1115
    %1117 = vrot.lane.b32.xlu0 %v1109, 64
    %v1118 = vpop.permute.xlu0 %1117
    %v1120 = vmul.f32 %v1116, %v1118
    %1122 = vrot.lane.b32.xlu0 %v1120, 64
    %v1123 = vpop.permute.xlu0 %1122
    %v1125 = vadd.f32 %v983, %v1123
    %v1126 = vtanh.pop %v1125
    %v1127 = vsub.f32 1.0, %v1116
    %1129 = vrot.lane.b32.xlu0 %v1126, 96
    %v1130 = vpop.permute.xlu0 %1129
    %v1132 = vmul.f32 %v1127, %v1130
    %v1134 = vrot.slane %v1086, 6
    %v1136 = vmul.f32 %v1116, %v1134
    %v1137 = vadd.f32 %v1132, %v1136
    %v1138 = vpack.c.bf16 %v1137, %v1137
    %v1140 = vrot.slane %v1138, 2
    %1141 = vrot.lane.b32.xlu0 %v1140, 96
    %v1142 = vpop.permute.xlu0 %1141
    %v1144 = vsel %vm185, %v1142, 0
    %1146 = vmatpush.bf16.msra.mxu0 0
    %1147 = vmatpush.bf16.msra.mxu0 0
    %1148 = vmatpush.bf16.msra.mxu0 0
    %1149 = vmatpush.bf16.msra.mxu0 0
    %1150 = vmatpush.bf16.msra.mxu0 0
    %1151 = vmatpush.bf16.msra.mxu0 0
    %1152 = vmatpush.bf16.msra.mxu0 %v996
    %1153 = vmatpush.bf16.msra.mxu0 %v995
    %1154 = vmatmul.bf16.gmra.mxu0 %v1144
    %v1155 = vpop.f32.mrf.mxu0
    %v1156 = vadd.f32 %v952, %v1155
    %v1157 = vpop.f32.mrf.mxu0
    %1158 = vdwg.mxu0
    %v1160 = vrot.slane %v1156, 2
    %v1162 = vadd.f32 %v983, %v1160
    %v1163 = vsub.f32 0.0, %v1162
    %v1164 = vmul.f32 %v1163, 1.442695
    %v1165 = vpow.pop %v1164
    %v1166 = vadd.f32 %v1165, 1.0
    %v1167 = vrcp.pop %v1166
    %1168 = vrot.lane.b32.xlu0 %v1160, 64
    %v1169 = vpop.permute.xlu0 %1168
    %v1171 = vmul.f32 %v1167, %v1169
    %1173 = vrot.lane.b32.xlu0 %v1171, 64
    %v1174 = vpop.permute.xlu0 %1173
    %v1176 = vadd.f32 %v983, %v1174
    %v1177 = vtanh.pop %v1176
    %v1178 = vsub.f32 1.0, %v1167
    %1180 = vrot.lane.b32.xlu0 %v1177, 96
    %v1181 = vpop.permute.xlu0 %1180
    %v1183 = vmul.f32 %v1178, %v1181
    %v1185 = vrot.slane %v1137, 6
    %v1187 = vmul.f32 %v1167, %v1185
    %v1188 = vadd.f32 %v1183, %v1187
    %v1189 = vpack.c.bf16 %v1188, %v1188
    %v1191 = vrot.slane %v1189, 3
    %1192 = vrot.lane.b32.xlu0 %v1191, 96
    %v1193 = vpop.permute.xlu0 %1192
    %v1195 = vsel %vm185, %v1193, 0
    %1197 = vmatpush.bf16.msra.mxu0 0
    %1198 = vmatpush.bf16.msra.mxu0 0
    %1199 = vmatpush.bf16.msra.mxu0 0
    %1200 = vmatpush.bf16.msra.mxu0 0
    %1201 = vmatpush.bf16.msra.mxu0 0
    %1202 = vmatpush.bf16.msra.mxu0 0
    %1203 = vmatpush.bf16.msra.mxu0 %v996
    %1204 = vmatpush.bf16.msra.mxu0 %v995
    %1205 = vmatmul.bf16.gmra.mxu0 %v1195
    %v1206 = vpop.f32.mrf.mxu0
    %v1207 = vadd.f32 %v952, %v1206
    %v1208 = vpop.f32.mrf.mxu0
    %1209 = vdwg.mxu0
    %v1210 = vadd.f32 %v985, %v1207
    %v1211 = vsub.f32 0.0, %v1210
    %v1212 = vmul.f32 %v1211, 1.442695
    %v1213 = vpow.pop %v1212
    %v1214 = vadd.f32 %v1213, 1.0
    %v1215 = vrcp.pop %v1214
    %1217 = vrot.lane.b32.xlu0 %v1207, 64
    %v1218 = vpop.permute.xlu0 %1217
    %v1220 = vmul.f32 %v1215, %v1218
    %1222 = vrot.lane.b32.xlu0 %v1220, 64
    %v1223 = vpop.permute.xlu0 %1222
    %v1225 = vadd.f32 %v985, %v1223
    %v1226 = vtanh.pop %v1225
    %v1227 = vsub.f32 1.0, %v1215
    %1229 = vrot.lane.b32.xlu0 %v1226, 96
    %v1230 = vpop.permute.xlu0 %1229
    %v1232 = vmul.f32 %v1227, %v1230
    %v1234 = vrot.slane %v1188, 6
    %v1236 = vmul.f32 %v1215, %v1234
    %v1237 = vadd.f32 %v1232, %v1236
    %v1238 = vsel %vm518, %v1036, %v1086
    %v1239 = vsel %vm516, %v1238, %v1137
    %v1240 = vsel %vm402, %v1239, %v1188
    %s1241 = scalar_lea.vmem %s4, 48
    %v1242 = vld [vmem:[%s1241] sm:$0xf]
    %v1243 = vld [vmem:[%s1241 + $0x4] sm:$0xf]
    %v1244 = vld [vmem:[%s1241 + $0x8] sm:$0xf]
    %v1245 = vld [vmem:[%s1241 + $0xc] sm:$0xf]
    %s1246 = scalar_lea.vmem %s5, 48
    %v1247 = vld [vmem:[%s1246] sm:$0xf]
    %v1248 = vld [vmem:[%s1246 + $0x4] sm:$0xf]
    %v1249 = vld [vmem:[%s1246 + $0x8] sm:$0xf]
    %v1250 = vld [vmem:[%s1246 + $0xc] sm:$0xf]
    %s1251 = scalar_lea.vmem [#allocation7], 6
    %v1252 = vld [vmem:[%s1251] sm:$0x1]
    %s1253 = scalar_lea.vmem [#allocation7], 7
    %v1254 = vld [vmem:[%s1253] sm:$0x1]
    %v1256 = vperm.slane %v1254, 0
    %v1258 = vpack.c.bf16 %v1237, %v1240
    %v1260 = vperm.slane %v1252, 0
    %1263 = vrot.lane.b32.xlu0 %v1258, 96
    %v1264 = vpop.permute.xlu0 %1263
    %v1269 = vunpack.c.l.b16 %v1242
    %v1270 = vunpack.c.l.b16 %v1243
    %v1271 = vunpack.c.l.b16 %v1244
    %v1272 = vunpack.c.l.b16 %v1245
    %v1273 = vpack.c.b16 %v1270, %v1269
    %v1274 = vpack.c.b16 %v1272, %v1271
    %v1278 = vsel %vm185, %v1264, 0
    %1280 = vmatpush.bf16.msra.mxu0 0
    %1281 = vmatpush.bf16.msra.mxu0 0
    %1282 = vmatpush.bf16.msra.mxu0 0
    %1283 = vmatpush.bf16.msra.mxu0 0
    %1284 = vmatpush.bf16.msra.mxu0 0
    %1285 = vmatpush.bf16.msra.mxu0 0
    %1286 = vmatpush.bf16.msra.mxu0 %v1274
    %1287 = vmatpush.bf16.msra.mxu0 %v1273
    %1288 = vmatmul.bf16.gmra.mxu0 %v1278
    %v1289 = vpop.f32.mrf.mxu0
    %v1290 = vadd.f32 %v1260, %v1289
    %v1291 = vpop.f32.mrf.mxu0
    %v1292 = vadd.f32 %v1260, %v1291
    %1293 = vdwg.mxu0
    %v1298 = vunpack.c.l.b16 %v1247
    %v1299 = vunpack.c.l.b16 %v1248
    %v1300 = vunpack.c.l.b16 %v1249
    %v1301 = vunpack.c.l.b16 %v1250
    %v1302 = vpack.c.b16 %v1299, %v1298
    %v1303 = vpack.c.b16 %v1301, %v1300
    %1306 = vmatpush.bf16.msra.mxu0 0
    %1307 = vmatpush.bf16.msra.mxu0 0
    %1308 = vmatpush.bf16.msra.mxu0 0
    %1309 = vmatpush.bf16.msra.mxu0 0
    %1310 = vmatpush.bf16.msra.mxu0 0
    %1311 = vmatpush.bf16.msra.mxu0 0
    %1312 = vmatpush.bf16.msra.mxu0 %v1303
    %1313 = vmatpush.bf16.msra.mxu0 %v1302
    %1314 = vmatmul.bf16.gmra.mxu0 %v224
    %v1315 = vpop.f32.mrf.mxu0
    %v1316 = vadd.f32 %v1256, %v1315
    %v1317 = vpop.f32.mrf.mxu0
    %1318 = vdwg.mxu0
    %v1319 = vadd.f32 %v1290, %v1316
    %v1320 = vsub.f32 0.0, %v1319
    %v1321 = vmul.f32 %v1320, 1.442695
    %v1322 = vpow.pop %v1321
    %v1323 = vadd.f32 %v1322, 1.0
    %v1324 = vrcp.pop %v1323
    %1326 = vrot.lane.b32.xlu0 %v1316, 64
    %v1327 = vpop.permute.xlu0 %1326
    %v1329 = vmul.f32 %v1324, %v1327
    %1331 = vrot.lane.b32.xlu0 %v1329, 64
    %v1332 = vpop.permute.xlu0 %1331
    %v1334 = vadd.f32 %v1290, %v1332
    %v1335 = vtanh.pop %v1334
    %v1336 = vsub.f32 1.0, %v1324
    %1338 = vrot.lane.b32.xlu0 %v1335, 96
    %v1339 = vpop.permute.xlu0 %1338
    %v1341 = vmul.f32 %v1336, %v1339
    %v1342 = vmul.f32 %v1324, 0.0
    %v1343 = vadd.f32 %v1341, %v1342
    %v1344 = vpack.c.bf16 %v1343, %v1343
    %1346 = vrot.lane.b32.xlu0 %v1344, 96
    %v1347 = vpop.permute.xlu0 %1346
    %v1349 = vsel %vm185, %v1347, 0
    %1351 = vmatpush.bf16.msra.mxu0 0
    %1352 = vmatpush.bf16.msra.mxu0 0
    %1353 = vmatpush.bf16.msra.mxu0 0
    %1354 = vmatpush.bf16.msra.mxu0 0
    %1355 = vmatpush.bf16.msra.mxu0 0
    %1356 = vmatpush.bf16.msra.mxu0 0
    %1357 = vmatpush.bf16.msra.mxu0 %v1303
    %1358 = vmatpush.bf16.msra.mxu0 %v1302
    %1359 = vmatmul.bf16.gmra.mxu0 %v1349
    %v1360 = vpop.f32.mrf.mxu0
    %v1361 = vadd.f32 %v1256, %v1360
    %v1362 = vpop.f32.mrf.mxu0
    %1363 = vdwg.mxu0
    %v1365 = vrot.slane %v1361, 6
    %v1367 = vadd.f32 %v1290, %v1365
    %v1368 = vsub.f32 0.0, %v1367
    %v1369 = vmul.f32 %v1368, 1.442695
    %v1370 = vpow.pop %v1369
    %v1371 = vadd.f32 %v1370, 1.0
    %v1372 = vrcp.pop %v1371
    %1373 = vrot.lane.b32.xlu0 %v1365, 64
    %v1374 = vpop.permute.xlu0 %1373
    %v1376 = vmul.f32 %v1372, %v1374
    %1378 = vrot.lane.b32.xlu0 %v1376, 64
    %v1379 = vpop.permute.xlu0 %1378
    %v1381 = vadd.f32 %v1290, %v1379
    %v1382 = vtanh.pop %v1381
    %v1383 = vsub.f32 1.0, %v1372
    %1385 = vrot.lane.b32.xlu0 %v1382, 96
    %v1386 = vpop.permute.xlu0 %1385
    %v1388 = vmul.f32 %v1383, %v1386
    %v1390 = vrot.slane %v1343, 6
    %v1392 = vmul.f32 %v1372, %v1390
    %v1393 = vadd.f32 %v1388, %v1392
    %v1394 = vpack.c.bf16 %v1393, %v1393
    %v1396 = vrot.slane %v1394, 1
    %1397 = vrot.lane.b32.xlu0 %v1396, 96
    %v1398 = vpop.permute.xlu0 %1397
    %v1400 = vsel %vm185, %v1398, 0
    %1402 = vmatpush.bf16.msra.mxu0 0
    %1403 = vmatpush.bf16.msra.mxu0 0
    %1404 = vmatpush.bf16.msra.mxu0 0
    %1405 = vmatpush.bf16.msra.mxu0 0
    %1406 = vmatpush.bf16.msra.mxu0 0
    %1407 = vmatpush.bf16.msra.mxu0 0
    %1408 = vmatpush.bf16.msra.mxu0 %v1303
    %1409 = vmatpush.bf16.msra.mxu0 %v1302
    %1410 = vmatmul.bf16.gmra.mxu0 %v1400
    %v1411 = vpop.f32.mrf.mxu0
    %v1412 = vadd.f32 %v1256, %v1411
    %v1413 = vpop.f32.mrf.mxu0
    %1414 = vdwg.mxu0
    %v1416 = vrot.slane %v1412, 4
    %v1418 = vadd.f32 %v1290, %v1416
    %v1419 = vsub.f32 0.0, %v1418
    %v1420 = vmul.f32 %v1419, 1.442695
    %v1421 = vpow.pop %v1420
    %v1422 = vadd.f32 %v1421, 1.0
    %v1423 = vrcp.pop %v1422
    %1424 = vrot.lane.b32.xlu0 %v1416, 64
    %v1425 = vpop.permute.xlu0 %1424
    %v1427 = vmul.f32 %v1423, %v1425
    %1429 = vrot.lane.b32.xlu0 %v1427, 64
    %v1430 = vpop.permute.xlu0 %1429
    %v1432 = vadd.f32 %v1290, %v1430
    %v1433 = vtanh.pop %v1432
    %v1434 = vsub.f32 1.0, %v1423
    %1436 = vrot.lane.b32.xlu0 %v1433, 96
    %v1437 = vpop.permute.xlu0 %1436
    %v1439 = vmul.f32 %v1434, %v1437
    %v1441 = vrot.slane %v1393, 6
    %v1443 = vmul.f32 %v1423, %v1441
    %v1444 = vadd.f32 %v1439, %v1443
    %v1445 = vpack.c.bf16 %v1444, %v1444
    %v1447 = vrot.slane %v1445, 2
    %1448 = vrot.lane.b32.xlu0 %v1447, 96
    %v1449 = vpop.permute.xlu0 %1448
    %v1451 = vsel %vm185, %v1449, 0
    %1453 = vmatpush.bf16.msra.mxu0 0
    %1454 = vmatpush.bf16.msra.mxu0 0
    %1455 = vmatpush.bf16.msra.mxu0 0
    %1456 = vmatpush.bf16.msra.mxu0 0
    %1457 = vmatpush.bf16.msra.mxu0 0
    %1458 = vmatpush.bf16.msra.mxu0 0
    %1459 = vmatpush.bf16.msra.mxu0 %v1303
    %1460 = vmatpush.bf16.msra.mxu0 %v1302
    %1461 = vmatmul.bf16.gmra.mxu0 %v1451
    %v1462 = vpop.f32.mrf.mxu0
    %v1463 = vadd.f32 %v1256, %v1462
    %v1464 = vpop.f32.mrf.mxu0
    %1465 = vdwg.mxu0
    %v1467 = vrot.slane %v1463, 2
    %v1469 = vadd.f32 %v1290, %v1467
    %v1470 = vsub.f32 0.0, %v1469
    %v1471 = vmul.f32 %v1470, 1.442695
    %v1472 = vpow.pop %v1471
    %v1473 = vadd.f32 %v1472, 1.0
    %v1474 = vrcp.pop %v1473
    %1475 = vrot.lane.b32.xlu0 %v1467, 64
    %v1476 = vpop.permute.xlu0 %1475
    %v1478 = vmul.f32 %v1474, %v1476
    %1480 = vrot.lane.b32.xlu0 %v1478, 64
    %v1481 = vpop.permute.xlu0 %1480
    %v1483 = vadd.f32 %v1290, %v1481
    %v1484 = vtanh.pop %v1483
    %v1485 = vsub.f32 1.0, %v1474
    %1487 = vrot.lane.b32.xlu0 %v1484, 96
    %v1488 = vpop.permute.xlu0 %1487
    %v1490 = vmul.f32 %v1485, %v1488
    %v1492 = vrot.slane %v1444, 6
    %v1494 = vmul.f32 %v1474, %v1492
    %v1495 = vadd.f32 %v1490, %v1494
    %v1496 = vpack.c.bf16 %v1495, %v1495
    %v1498 = vrot.slane %v1496, 3
    %1499 = vrot.lane.b32.xlu0 %v1498, 96
    %v1500 = vpop.permute.xlu0 %1499
    %v1502 = vsel %vm185, %v1500, 0
    %1504 = vmatpush.bf16.msra.mxu0 0
    %1505 = vmatpush.bf16.msra.mxu0 0
    %1506 = vmatpush.bf16.msra.mxu0 0
    %1507 = vmatpush.bf16.msra.mxu0 0
    %1508 = vmatpush.bf16.msra.mxu0 0
    %1509 = vmatpush.bf16.msra.mxu0 0
    %1510 = vmatpush.bf16.msra.mxu0 %v1303
    %1511 = vmatpush.bf16.msra.mxu0 %v1302
    %1512 = vmatmul.bf16.gmra.mxu0 %v1502
    %v1513 = vpop.f32.mrf.mxu0
    %v1514 = vadd.f32 %v1256, %v1513
    %v1515 = vpop.f32.mrf.mxu0
    %1516 = vdwg.mxu0
    %v1517 = vadd.f32 %v1292, %v1514
    %v1518 = vsub.f32 0.0, %v1517
    %v1519 = vmul.f32 %v1518, 1.442695
    %v1520 = vpow.pop %v1519
    %v1521 = vadd.f32 %v1520, 1.0
    %v1522 = vrcp.pop %v1521
    %1524 = vrot.lane.b32.xlu0 %v1514, 64
    %v1525 = vpop.permute.xlu0 %1524
    %v1527 = vmul.f32 %v1522, %v1525
    %1529 = vrot.lane.b32.xlu0 %v1527, 64
    %v1530 = vpop.permute.xlu0 %1529
    %v1532 = vadd.f32 %v1292, %v1530
    %v1533 = vtanh.pop %v1532
    %v1534 = vsub.f32 1.0, %v1522
    %1536 = vrot.lane.b32.xlu0 %v1533, 96
    %v1537 = vpop.permute.xlu0 %1536
    %v1539 = vmul.f32 %v1534, %v1537
    %v1541 = vrot.slane %v1495, 6
    %v1543 = vmul.f32 %v1522, %v1541
    %v1544 = vadd.f32 %v1539, %v1543
    %v1545 = vrot.slane %v1393, 4
    %1546 = vrot.lane.b32.xlu0 %v1545, 96
    %v1547 = vpop.permute.xlu0 %1546
    %v1549 = vrot.slane %v1343, 2
    %1550 = vrot.lane.b32.xlu0 %v1549, 96
    %v1551 = vpop.permute.xlu0 %1550
    %v1553 = vsel %vm890, %v1547, %v1551
    %1554 = vrot.lane.b32.xlu0 %v1492, 96
    %v1555 = vpop.permute.xlu0 %1554
    %v1557 = vsel %vm906, %v1555, %v1553
    %1559 = vrot.lane.b32.xlu0 %v1557, 32
    %v1560 = vpop.permute.xlu0 %1559
    %v1562 = vsel %vm919, %v1495, %v1560
    %v1564 = vrot.slane %v1544, 2
    %1565 = vrot.lane.b32.xlu0 %v1564, 96
    %v1566 = vpop.permute.xlu0 %1565
    %1569 = vrot.lane.b32.xlu0 %v1562, 96
    %v1570 = vpop.permute.xlu0 %1569
    %v1572 = vsel %vm929, %v1566, %v1570
    %s1573 = scalar_lea.vmem %s2, 16
    %v1574 = vld [vmem:[%s1573] sm:$0xff]
    %v1575 = vld [vmem:[%s1573 + $0x8] sm:$0x3]
    %s1576 = scalar_lea.vmem %s4, 64
    %v1577 = vld [vmem:[%s1576] sm:$0xf]
    %v1578 = vld [vmem:[%s1576 + $0x4] sm:$0xf]
    %v1579 = vld [vmem:[%s1576 + $0x8] sm:$0xf]
    %v1580 = vld [vmem:[%s1576 + $0xc] sm:$0xf]
    %s1581 = scalar_lea.vmem %s5, 64
    %v1582 = vld [vmem:[%s1581] sm:$0xf]
    %v1583 = vld [vmem:[%s1581 + $0x4] sm:$0xf]
    %v1584 = vld [vmem:[%s1581 + $0x8] sm:$0xf]
    %v1585 = vld [vmem:[%s1581 + $0xc] sm:$0xf]
    %s1586 = scalar_lea.vmem [#allocation7], 8
    %v1587 = vld [vmem:[%s1586] sm:$0x1]
    %s1588 = scalar_lea.vmem [#allocation7], 9
    %v1589 = vld [vmem:[%s1588] sm:$0x1]
    %v1591 = vperm.slane %v1589, 0
    %v1593 = vpack.c.bf16 %v1575, %v1574
    %v1595 = vperm.slane %v1587, 0
    %v1601 = vunpack.c.l.b16 %v1577
    %v1602 = vunpack.c.l.b16 %v1578
    %v1603 = vunpack.c.l.b16 %v1579
    %v1604 = vunpack.c.l.b16 %v1580
    %v1605 = vpack.c.b16 %v1602, %v1601
    %v1606 = vpack.c.b16 %v1604, %v1603
    %v1610 = vsel %vm185, %v1593, 0
    %1612 = vmatpush.bf16.msra.mxu0 0
    %1613 = vmatpush.bf16.msra.mxu0 0
    %1614 = vmatpush.bf16.msra.mxu0 0
    %1615 = vmatpush.bf16.msra.mxu0 0
    %1616 = vmatpush.bf16.msra.mxu0 0
    %1617 = vmatpush.bf16.msra.mxu0 0
    %1618 = vmatpush.bf16.msra.mxu0 %v1606
    %1619 = vmatpush.bf16.msra.mxu0 %v1605
    %1620 = vmatmul.bf16.gmra.mxu0 %v1610
    %v1621 = vpop.f32.mrf.mxu0
    %v1622 = vadd.f32 %v1595, %v1621
    %v1623 = vpop.f32.mrf.mxu0
    %v1624 = vadd.f32 %v1595, %v1623
    %1625 = vdwg.mxu0
    %v1630 = vunpack.c.l.b16 %v1582
    %v1631 = vunpack.c.l.b16 %v1583
    %v1632 = vunpack.c.l.b16 %v1584
    %v1633 = vunpack.c.l.b16 %v1585
    %v1634 = vpack.c.b16 %v1631, %v1630
    %v1635 = vpack.c.b16 %v1633, %v1632
    %1638 = vmatpush.bf16.msra.mxu0 0
    %1639 = vmatpush.bf16.msra.mxu0 0
    %1640 = vmatpush.bf16.msra.mxu0 0
    %1641 = vmatpush.bf16.msra.mxu0 0
    %1642 = vmatpush.bf16.msra.mxu0 0
    %1643 = vmatpush.bf16.msra.mxu0 0
    %1644 = vmatpush.bf16.msra.mxu0 %v1635
    %1645 = vmatpush.bf16.msra.mxu0 %v1634
    %1646 = vmatmul.bf16.gmra.mxu0 %v224
    %v1647 = vpop.f32.mrf.mxu0
    %v1648 = vadd.f32 %v1591, %v1647
    %v1649 = vpop.f32.mrf.mxu0
    %1650 = vdwg.mxu0
    %v1651 = vadd.f32 %v1622, %v1648
    %v1652 = vsub.f32 0.0, %v1651
    %v1653 = vmul.f32 %v1652, 1.442695
    %v1654 = vpow.pop %v1653
    %v1655 = vadd.f32 %v1654, 1.0
    %v1656 = vrcp.pop %v1655
    %1658 = vrot.lane.b32.xlu0 %v1648, 64
    %v1659 = vpop.permute.xlu0 %1658
    %v1661 = vmul.f32 %v1656, %v1659
    %1663 = vrot.lane.b32.xlu0 %v1661, 64
    %v1664 = vpop.permute.xlu0 %1663
    %v1666 = vadd.f32 %v1622, %v1664
    %v1667 = vtanh.pop %v1666
    %v1668 = vsub.f32 1.0, %v1656
    %1670 = vrot.lane.b32.xlu0 %v1667, 96
    %v1671 = vpop.permute.xlu0 %1670
    %v1673 = vmul.f32 %v1668, %v1671
    %v1674 = vmul.f32 %v1656, 0.0
    %v1675 = vadd.f32 %v1673, %v1674
    %v1676 = vpack.c.bf16 %v1675, %v1675
    %1678 = vrot.lane.b32.xlu0 %v1676, 96
    %v1679 = vpop.permute.xlu0 %1678
    %v1681 = vsel %vm185, %v1679, 0
    %1683 = vmatpush.bf16.msra.mxu0 0
    %1684 = vmatpush.bf16.msra.mxu0 0
    %1685 = vmatpush.bf16.msra.mxu0 0
    %1686 = vmatpush.bf16.msra.mxu0 0
    %1687 = vmatpush.bf16.msra.mxu0 0
    %1688 = vmatpush.bf16.msra.mxu0 0
    %1689 = vmatpush.bf16.msra.mxu0 %v1635
    %1690 = vmatpush.bf16.msra.mxu0 %v1634
    %1691 = vmatmul.bf16.gmra.mxu0 %v1681
    %v1692 = vpop.f32.mrf.mxu0
    %v1693 = vadd.f32 %v1591, %v1692
    %v1694 = vpop.f32.mrf.mxu0
    %1695 = vdwg.mxu0
    %v1697 = vrot.slane %v1693, 6
    %v1699 = vadd.f32 %v1622, %v1697
    %v1700 = vsub.f32 0.0, %v1699
    %v1701 = vmul.f32 %v1700, 1.442695
    %v1702 = vpow.pop %v1701
    %v1703 = vadd.f32 %v1702, 1.0
    %v1704 = vrcp.pop %v1703
    %1705 = vrot.lane.b32.xlu0 %v1697, 64
    %v1706 = vpop.permute.xlu0 %1705
    %v1708 = vmul.f32 %v1704, %v1706
    %1710 = vrot.lane.b32.xlu0 %v1708, 64
    %v1711 = vpop.permute.xlu0 %1710
    %v1713 = vadd.f32 %v1622, %v1711
    %v1714 = vtanh.pop %v1713
    %v1715 = vsub.f32 1.0, %v1704
    %1717 = vrot.lane.b32.xlu0 %v1714, 96
    %v1718 = vpop.permute.xlu0 %1717
    %v1720 = vmul.f32 %v1715, %v1718
    %v1722 = vrot.slane %v1675, 6
    %v1724 = vmul.f32 %v1704, %v1722
    %v1725 = vadd.f32 %v1720, %v1724
    %v1726 = vpack.c.bf16 %v1725, %v1725
    %v1728 = vrot.slane %v1726, 1
    %1729 = vrot.lane.b32.xlu0 %v1728, 96
    %v1730 = vpop.permute.xlu0 %1729
    %v1732 = vsel %vm185, %v1730, 0
    %1734 = vmatpush.bf16.msra.mxu0 0
    %1735 = vmatpush.bf16.msra.mxu0 0
    %1736 = vmatpush.bf16.msra.mxu0 0
    %1737 = vmatpush.bf16.msra.mxu0 0
    %1738 = vmatpush.bf16.msra.mxu0 0
    %1739 = vmatpush.bf16.msra.mxu0 0
    %1740 = vmatpush.bf16.msra.mxu0 %v1635
    %1741 = vmatpush.bf16.msra.mxu0 %v1634
    %1742 = vmatmul.bf16.gmra.mxu0 %v1732
    %v1743 = vpop.f32.mrf.mxu0
    %v1744 = vadd.f32 %v1591, %v1743
    %v1745 = vpop.f32.mrf.mxu0
    %1746 = vdwg.mxu0
    %v1748 = vrot.slane %v1744, 4
    %v1750 = vadd.f32 %v1622, %v1748
    %v1751 = vsub.f32 0.0, %v1750
    %v1752 = vmul.f32 %v1751, 1.442695
    %v1753 = vpow.pop %v1752
    %v1754 = vadd.f32 %v1753, 1.0
    %v1755 = vrcp.pop %v1754
    %1756 = vrot.lane.b32.xlu0 %v1748, 64
    %v1757 = vpop.permute.xlu0 %1756
    %v1759 = vmul.f32 %v1755, %v1757
    %1761 = vrot.lane.b32.xlu0 %v1759, 64
    %v1762 = vpop.permute.xlu0 %1761
    %v1764 = vadd.f32 %v1622, %v1762
    %v1765 = vtanh.pop %v1764
    %v1766 = vsub.f32 1.0, %v1755
    %1768 = vrot.lane.b32.xlu0 %v1765, 96
    %v1769 = vpop.permute.xlu0 %1768
    %v1771 = vmul.f32 %v1766, %v1769
    %v1773 = vrot.slane %v1725, 6
    %v1775 = vmul.f32 %v1755, %v1773
    %v1776 = vadd.f32 %v1771, %v1775
    %v1777 = vpack.c.bf16 %v1776, %v1776
    %v1779 = vrot.slane %v1777, 2
    %1780 = vrot.lane.b32.xlu0 %v1779, 96
    %v1781 = vpop.permute.xlu0 %1780
    %v1783 = vsel %vm185, %v1781, 0
    %1785 = vmatpush.bf16.msra.mxu0 0
    %1786 = vmatpush.bf16.msra.mxu0 0
    %1787 = vmatpush.bf16.msra.mxu0 0
    %1788 = vmatpush.bf16.msra.mxu0 0
    %1789 = vmatpush.bf16.msra.mxu0 0
    %1790 = vmatpush.bf16.msra.mxu0 0
    %1791 = vmatpush.bf16.msra.mxu0 %v1635
    %1792 = vmatpush.bf16.msra.mxu0 %v1634
    %1793 = vmatmul.bf16.gmra.mxu0 %v1783
    %v1794 = vpop.f32.mrf.mxu0
    %v1795 = vadd.f32 %v1591, %v1794
    %v1796 = vpop.f32.mrf.mxu0
    %1797 = vdwg.mxu0
    %v1799 = vrot.slane %v1795, 2
    %v1801 = vadd.f32 %v1622, %v1799
    %v1802 = vsub.f32 0.0, %v1801
    %v1803 = vmul.f32 %v1802, 1.442695
    %v1804 = vpow.pop %v1803
    %v1805 = vadd.f32 %v1804, 1.0
    %v1806 = vrcp.pop %v1805
    %1807 = vrot.lane.b32.xlu0 %v1799, 64
    %v1808 = vpop.permute.xlu0 %1807
    %v1810 = vmul.f32 %v1806, %v1808
    %1812 = vrot.lane.b32.xlu0 %v1810, 64
    %v1813 = vpop.permute.xlu0 %1812
    %v1815 = vadd.f32 %v1622, %v1813
    %v1816 = vtanh.pop %v1815
    %v1817 = vsub.f32 1.0, %v1806
    %1819 = vrot.lane.b32.xlu0 %v1816, 96
    %v1820 = vpop.permute.xlu0 %1819
    %v1822 = vmul.f32 %v1817, %v1820
    %v1824 = vrot.slane %v1776, 6
    %v1826 = vmul.f32 %v1806, %v1824
    %v1827 = vadd.f32 %v1822, %v1826
    %v1828 = vpack.c.bf16 %v1827, %v1827
    %v1830 = vrot.slane %v1828, 3
    %1831 = vrot.lane.b32.xlu0 %v1830, 96
    %v1832 = vpop.permute.xlu0 %1831
    %v1834 = vsel %vm185, %v1832, 0
    %1836 = vmatpush.bf16.msra.mxu0 0
    %1837 = vmatpush.bf16.msra.mxu0 0
    %1838 = vmatpush.bf16.msra.mxu0 0
    %1839 = vmatpush.bf16.msra.mxu0 0
    %1840 = vmatpush.bf16.msra.mxu0 0
    %1841 = vmatpush.bf16.msra.mxu0 0
    %1842 = vmatpush.bf16.msra.mxu0 %v1635
    %1843 = vmatpush.bf16.msra.mxu0 %v1634
    %1844 = vmatmul.bf16.gmra.mxu0 %v1834
    %v1845 = vpop.f32.mrf.mxu0
    %v1846 = vadd.f32 %v1591, %v1845
    %v1847 = vpop.f32.mrf.mxu0
    %1848 = vdwg.mxu0
    %v1849 = vadd.f32 %v1624, %v1846
    %v1850 = vsub.f32 0.0, %v1849
    %v1851 = vmul.f32 %v1850, 1.442695
    %v1852 = vpow.pop %v1851
    %v1853 = vadd.f32 %v1852, 1.0
    %v1854 = vrcp.pop %v1853
    %1856 = vrot.lane.b32.xlu0 %v1846, 64
    %v1857 = vpop.permute.xlu0 %1856
    %v1859 = vmul.f32 %v1854, %v1857
    %1861 = vrot.lane.b32.xlu0 %v1859, 64
    %v1862 = vpop.permute.xlu0 %1861
    %v1864 = vadd.f32 %v1624, %v1862
    %v1865 = vtanh.pop %v1864
    %v1866 = vsub.f32 1.0, %v1854
    %1868 = vrot.lane.b32.xlu0 %v1865, 96
    %v1869 = vpop.permute.xlu0 %1868
    %v1871 = vmul.f32 %v1866, %v1869
    %v1873 = vrot.slane %v1827, 6
    %v1875 = vmul.f32 %v1854, %v1873
    %v1876 = vadd.f32 %v1871, %v1875
    %v1877 = vsel %vm518, %v1675, %v1725
    %v1878 = vsel %vm516, %v1877, %v1776
    %v1879 = vsel %vm402, %v1878, %v1827
    %s1880 = scalar_lea.vmem %s4, 80
    %v1881 = vld [vmem:[%s1880] sm:$0xf]
    %v1882 = vld [vmem:[%s1880 + $0x4] sm:$0xf]
    %v1883 = vld [vmem:[%s1880 + $0x8] sm:$0xf]
    %v1884 = vld [vmem:[%s1880 + $0xc] sm:$0xf]
    %s1885 = scalar_lea.vmem %s5, 80
    %v1886 = vld [vmem:[%s1885] sm:$0xf]
    %v1887 = vld [vmem:[%s1885 + $0x4] sm:$0xf]
    %v1888 = vld [vmem:[%s1885 + $0x8] sm:$0xf]
    %v1889 = vld [vmem:[%s1885 + $0xc] sm:$0xf]
    %s1890 = scalar_lea.vmem [#allocation7], 10
    %v1891 = vld [vmem:[%s1890] sm:$0x1]
    %s1892 = scalar_lea.vmem [#allocation7], 11
    %v1893 = vld [vmem:[%s1892] sm:$0x1]
    %v1895 = vperm.slane %v1893, 0
    %v1897 = vpack.c.bf16 %v1876, %v1879
    %v1899 = vperm.slane %v1891, 0
    %1902 = vrot.lane.b32.xlu0 %v1897, 96
    %v1903 = vpop.permute.xlu0 %1902
    %v1908 = vunpack.c.l.b16 %v1881
    %v1909 = vunpack.c.l.b16 %v1882
    %v1910 = vunpack.c.l.b16 %v1883
    %v1911 = vunpack.c.l.b16 %v1884
    %v1912 = vpack.c.b16 %v1909, %v1908
    %v1913 = vpack.c.b16 %v1911, %v1910
    %v1917 = vsel %vm185, %v1903, 0
    %1919 = vmatpush.bf16.msra.mxu0 0
    %1920 = vmatpush.bf16.msra.mxu0 0
    %1921 = vmatpush.bf16.msra.mxu0 0
    %1922 = vmatpush.bf16.msra.mxu0 0
    %1923 = vmatpush.bf16.msra.mxu0 0
    %1924 = vmatpush.bf16.msra.mxu0 0
    %1925 = vmatpush.bf16.msra.mxu0 %v1913
    %1926 = vmatpush.bf16.msra.mxu0 %v1912
    %1927 = vmatmul.bf16.gmra.mxu0 %v1917
    %v1928 = vpop.f32.mrf.mxu0
    %v1929 = vadd.f32 %v1899, %v1928
    %v1930 = vpop.f32.mrf.mxu0
    %v1931 = vadd.f32 %v1899, %v1930
    %1932 = vdwg.mxu0
    %v1937 = vunpack.c.l.b16 %v1886
    %v1938 = vunpack.c.l.b16 %v1887
    %v1939 = vunpack.c.l.b16 %v1888
    %v1940 = vunpack.c.l.b16 %v1889
    %v1941 = vpack.c.b16 %v1938, %v1937
    %v1942 = vpack.c.b16 %v1940, %v1939
    %1945 = vmatpush.bf16.msra.mxu0 0
    %1946 = vmatpush.bf16.msra.mxu0 0
    %1947 = vmatpush.bf16.msra.mxu0 0
    %1948 = vmatpush.bf16.msra.mxu0 0
    %1949 = vmatpush.bf16.msra.mxu0 0
    %1950 = vmatpush.bf16.msra.mxu0 0
    %1951 = vmatpush.bf16.msra.mxu0 %v1942
    %1952 = vmatpush.bf16.msra.mxu0 %v1941
    %1953 = vmatmul.bf16.gmra.mxu0 %v224
    %v1954 = vpop.f32.mrf.mxu0
    %v1955 = vadd.f32 %v1895, %v1954
    %v1956 = vpop.f32.mrf.mxu0
    %1957 = vdwg.mxu0
    %v1958 = vadd.f32 %v1929, %v1955
    %v1959 = vsub.f32 0.0, %v1958
    %v1960 = vmul.f32 %v1959, 1.442695
    %v1961 = vpow.pop %v1960
    %v1962 = vadd.f32 %v1961, 1.0
    %v1963 = vrcp.pop %v1962
    %1965 = vrot.lane.b32.xlu0 %v1955, 64
    %v1966 = vpop.permute.xlu0 %1965
    %v1968 = vmul.f32 %v1963, %v1966
    %1970 = vrot.lane.b32.xlu0 %v1968, 64
    %v1971 = vpop.permute.xlu0 %1970
    %v1973 = vadd.f32 %v1929, %v1971
    %v1974 = vtanh.pop %v1973
    %v1975 = vsub.f32 1.0, %v1963
    %1977 = vrot.lane.b32.xlu0 %v1974, 96
    %v1978 = vpop.permute.xlu0 %1977
    %v1980 = vmul.f32 %v1975, %v1978
    %v1981 = vmul.f32 %v1963, 0.0
    %v1982 = vadd.f32 %v1980, %v1981
    %v1983 = vpack.c.bf16 %v1982, %v1982
    %1985 = vrot.lane.b32.xlu0 %v1983, 96
    %v1986 = vpop.permute.xlu0 %1985
    %v1988 = vsel %vm185, %v1986, 0
    %1990 = vmatpush.bf16.msra.mxu0 0
    %1991 = vmatpush.bf16.msra.mxu0 0
    %1992 = vmatpush.bf16.msra.mxu0 0
    %1993 = vmatpush.bf16.msra.mxu0 0
    %1994 = vmatpush.bf16.msra.mxu0 0
    %1995 = vmatpush.bf16.msra.mxu0 0
    %1996 = vmatpush.bf16.msra.mxu0 %v1942
    %1997 = vmatpush.bf16.msra.mxu0 %v1941
    %1998 = vmatmul.bf16.gmra.mxu0 %v1988
    %v1999 = vpop.f32.mrf.mxu0
    %v2000 = vadd.f32 %v1895, %v1999
    %v2001 = vpop.f32.mrf.mxu0
    %2002 = vdwg.mxu0
    %v2004 = vrot.slane %v2000, 6
    %v2006 = vadd.f32 %v1929, %v2004
    %v2007 = vsub.f32 0.0, %v2006
    %v2008 = vmul.f32 %v2007, 1.442695
    %v2009 = vpow.pop %v2008
    %v2010 = vadd.f32 %v2009, 1.0
    %v2011 = vrcp.pop %v2010
    %2012 = vrot.lane.b32.xlu0 %v2004, 64
    %v2013 = vpop.permute.xlu0 %2012
    %v2015 = vmul.f32 %v2011, %v2013
    %2017 = vrot.lane.b32.xlu0 %v2015, 64
    %v2018 = vpop.permute.xlu0 %2017
    %v2020 = vadd.f32 %v1929, %v2018
    %v2021 = vtanh.pop %v2020
    %v2022 = vsub.f32 1.0, %v2011
    %2024 = vrot.lane.b32.xlu0 %v2021, 96
    %v2025 = vpop.permute.xlu0 %2024
    %v2027 = vmul.f32 %v2022, %v2025
    %v2029 = vrot.slane %v1982, 6
    %v2031 = vmul.f32 %v2011, %v2029
    %v2032 = vadd.f32 %v2027, %v2031
    %v2033 = vpack.c.bf16 %v2032, %v2032
    %v2035 = vrot.slane %v2033, 1
    %2036 = vrot.lane.b32.xlu0 %v2035, 96
    %v2037 = vpop.permute.xlu0 %2036
    %v2039 = vsel %vm185, %v2037, 0
    %2041 = vmatpush.bf16.msra.mxu0 0
    %2042 = vmatpush.bf16.msra.mxu0 0
    %2043 = vmatpush.bf16.msra.mxu0 0
    %2044 = vmatpush.bf16.msra.mxu0 0
    %2045 = vmatpush.bf16.msra.mxu0 0
    %2046 = vmatpush.bf16.msra.mxu0 0
    %2047 = vmatpush.bf16.msra.mxu0 %v1942
    %2048 = vmatpush.bf16.msra.mxu0 %v1941
    %2049 = vmatmul.bf16.gmra.mxu0 %v2039
    %v2050 = vpop.f32.mrf.mxu0
    %v2051 = vadd.f32 %v1895, %v2050
    %v2052 = vpop.f32.mrf.mxu0
    %2053 = vdwg.mxu0
    %v2055 = vrot.slane %v2051, 4
    %v2057 = vadd.f32 %v1929, %v2055
    %v2058 = vsub.f32 0.0, %v2057
    %v2059 = vmul.f32 %v2058, 1.442695
    %v2060 = vpow.pop %v2059
    %v2061 = vadd.f32 %v2060, 1.0
    %v2062 = vrcp.pop %v2061
    %2063 = vrot.lane.b32.xlu0 %v2055, 64
    %v2064 = vpop.permute.xlu0 %2063
    %v2066 = vmul.f32 %v2062, %v2064
    %2068 = vrot.lane.b32.xlu0 %v2066, 64
    %v2069 = vpop.permute.xlu0 %2068
    %v2071 = vadd.f32 %v1929, %v2069
    %v2072 = vtanh.pop %v2071
    %v2073 = vsub.f32 1.0, %v2062
    %2075 = vrot.lane.b32.xlu0 %v2072, 96
    %v2076 = vpop.permute.xlu0 %2075
    %v2078 = vmul.f32 %v2073, %v2076
    %v2080 = vrot.slane %v2032, 6
    %v2082 = vmul.f32 %v2062, %v2080
    %v2083 = vadd.f32 %v2078, %v2082
    %v2084 = vpack.c.bf16 %v2083, %v2083
    %v2086 = vrot.slane %v2084, 2
    %2087 = vrot.lane.b32.xlu0 %v2086, 96
    %v2088 = vpop.permute.xlu0 %2087
    %v2090 = vsel %vm185, %v2088, 0
    %2092 = vmatpush.bf16.msra.mxu0 0
    %2093 = vmatpush.bf16.msra.mxu0 0
    %2094 = vmatpush.bf16.msra.mxu0 0
    %2095 = vmatpush.bf16.msra.mxu0 0
    %2096 = vmatpush.bf16.msra.mxu0 0
    %2097 = vmatpush.bf16.msra.mxu0 0
    %2098 = vmatpush.bf16.msra.mxu0 %v1942
    %2099 = vmatpush.bf16.msra.mxu0 %v1941
    %2100 = vmatmul.bf16.gmra.mxu0 %v2090
    %v2101 = vpop.f32.mrf.mxu0
    %v2102 = vadd.f32 %v1895, %v2101
    %v2103 = vpop.f32.mrf.mxu0
    %2104 = vdwg.mxu0
    %v2106 = vrot.slane %v2102, 2
    %v2108 = vadd.f32 %v1929, %v2106
    %v2109 = vsub.f32 0.0, %v2108
    %v2110 = vmul.f32 %v2109, 1.442695
    %v2111 = vpow.pop %v2110
    %v2112 = vadd.f32 %v2111, 1.0
    %v2113 = vrcp.pop %v2112
    %2114 = vrot.lane.b32.xlu0 %v2106, 64
    %v2115 = vpop.permute.xlu0 %2114
    %v2117 = vmul.f32 %v2113, %v2115
    %2119 = vrot.lane.b32.xlu0 %v2117, 64
    %v2120 = vpop.permute.xlu0 %2119
    %v2122 = vadd.f32 %v1929, %v2120
    %v2123 = vtanh.pop %v2122
    %v2124 = vsub.f32 1.0, %v2113
    %2126 = vrot.lane.b32.xlu0 %v2123, 96
    %v2127 = vpop.permute.xlu0 %2126
    %v2129 = vmul.f32 %v2124, %v2127
    %v2131 = vrot.slane %v2083, 6
    %v2133 = vmul.f32 %v2113, %v2131
    %v2134 = vadd.f32 %v2129, %v2133
    %v2135 = vpack.c.bf16 %v2134, %v2134
    %v2137 = vrot.slane %v2135, 3
    %2138 = vrot.lane.b32.xlu0 %v2137, 96
    %v2139 = vpop.permute.xlu0 %2138
    %v2141 = vsel %vm185, %v2139, 0
    %2143 = vmatpush.bf16.msra.mxu0 0
    %2144 = vmatpush.bf16.msra.mxu0 0
    %2145 = vmatpush.bf16.msra.mxu0 0
    %2146 = vmatpush.bf16.msra.mxu0 0
    %2147 = vmatpush.bf16.msra.mxu0 0
    %2148 = vmatpush.bf16.msra.mxu0 0
    %2149 = vmatpush.bf16.msra.mxu0 %v1942
    %2150 = vmatpush.bf16.msra.mxu0 %v1941
    %2151 = vmatmul.bf16.gmra.mxu0 %v2141
    %v2152 = vpop.f32.mrf.mxu0
    %v2153 = vadd.f32 %v1895, %v2152
    %v2154 = vpop.f32.mrf.mxu0
    %2155 = vdwg.mxu0
    %v2156 = vadd.f32 %v1931, %v2153
    %v2157 = vsub.f32 0.0, %v2156
    %v2158 = vmul.f32 %v2157, 1.442695
    %v2159 = vpow.pop %v2158
    %v2160 = vadd.f32 %v2159, 1.0
    %v2161 = vrcp.pop %v2160
    %2163 = vrot.lane.b32.xlu0 %v2153, 64
    %v2164 = vpop.permute.xlu0 %2163
    %v2166 = vmul.f32 %v2161, %v2164
    %2168 = vrot.lane.b32.xlu0 %v2166, 64
    %v2169 = vpop.permute.xlu0 %2168
    %v2171 = vadd.f32 %v1931, %v2169
    %v2172 = vtanh.pop %v2171
    %v2173 = vsub.f32 1.0, %v2161
    %2175 = vrot.lane.b32.xlu0 %v2172, 96
    %v2176 = vpop.permute.xlu0 %2175
    %v2178 = vmul.f32 %v2173, %v2176
    %v2180 = vrot.slane %v2134, 6
    %v2182 = vmul.f32 %v2161, %v2180
    %v2183 = vadd.f32 %v2178, %v2182
    %vm2184 = vcmp.eq.s32.totalorder %v149, 2
    %v2185 = vsel %vm2184, 1, 0
    %2186 = vset.pattern.permute.xlu0 0
    %2187 = vperm.xlu0 %2186, %v2185
    %v2188 = vpop.permute.xlu0 %2187
    %vm2189 = vcmp.eq.s32.totalorder %v2188, 1
    %v2190 = vrot.slane %v2032, 2
    %2191 = vrot.lane.b32.xlu0 %v2190, 96
    %v2192 = vpop.permute.xlu0 %2191
    %2194 = vrot.lane.b32.xlu0 %v1982, 96
    %v2195 = vpop.permute.xlu0 %2194
    %v2197 = vsel %vm2189, %v2192, %v2195
    %vm2198 = vcmp.eq.s32.totalorder %v149, 3
    %v2199 = vsel %vm2198, 1, 0
    %2200 = vset.pattern.permute.xlu0 0
    %2201 = vperm.xlu0 %2200, %v2199
    %v2202 = vpop.permute.xlu0 %2201
    %vm2203 = vcmp.eq.s32.totalorder %v2202, 1
    %v2204 = vrot.slane %v2083, 4
    %2205 = vrot.lane.b32.xlu0 %v2204, 96
    %v2206 = vpop.permute.xlu0 %2205
    %v2208 = vsel %vm2203, %v2206, %v2197
    %vm2209 = vcmp.eq.s32.totalorder %v149, 4
    %v2210 = vsel %vm2209, 1, 0
    %2211 = vset.pattern.permute.xlu0 0
    %2212 = vperm.xlu0 %2211, %v2210
    %v2213 = vpop.permute.xlu0 %2212
    %vm2214 = vcmp.eq.s32.totalorder %v2213, 1
    %2215 = vrot.lane.b32.xlu0 %v2180, 96
    %v2216 = vpop.permute.xlu0 %2215
    %v2218 = vsel %vm2214, %v2216, %v2208
    %vm2219 = vcmp.eq.s32.totalorder %v149, 5
    %v2220 = vsel %vm2219, 1, 0
    %2221 = vset.pattern.permute.xlu0 0
    %2222 = vperm.xlu0 %2221, %v2220
    %v2223 = vpop.permute.xlu0 %2222
    %vm2224 = vcmp.eq.s32.totalorder %v2223, 1
    %2226 = vrot.lane.b32.xlu0 %v2218, 32
    %v2227 = vpop.permute.xlu0 %2226
    %v2229 = vsel %vm2224, %v2183, %v2227
    %v2230 = vld [vmem:[#allocation8] sm:$0xf]
    %v2231 = vld [vmem:[#allocation8 + $0x4] sm:$0xf]
    %v2232 = vld [vmem:[#allocation8 + $0x8] sm:$0xf]
    %v2233 = vld [vmem:[#allocation8 + $0xc] sm:$0xf]
    %v2234 = vpack.c.bf16 %v934, %v934
    %v2235 = vld [vmem:[#allocation10] sm:$0x1]
    %v2237 = vperm.slane %v2235, 0
    %2240 = vrot.lane.b32.xlu0 %v2234, 96
    %v2241 = vpop.permute.xlu0 %2240
    %v2246 = vunpack.c.l.b16 %v2230
    %v2247 = vunpack.c.l.b16 %v2231
    %v2248 = vunpack.c.l.b16 %v2232
    %v2249 = vunpack.c.l.b16 %v2233
    %v2250 = vpack.c.b16 %v2247, %v2246
    %v2251 = vpack.c.b16 %v2249, %v2248
    %v2255 = vsel %vm185, %v2241, 0
    %2257 = vmatpush.bf16.msra.mxu0 0
    %2258 = vmatpush.bf16.msra.mxu0 0
    %2259 = vmatpush.bf16.msra.mxu0 0
    %2260 = vmatpush.bf16.msra.mxu0 0
    %2261 = vmatpush.bf16.msra.mxu0 0
    %2262 = vmatpush.bf16.msra.mxu0 0
    %2263 = vmatpush.bf16.msra.mxu0 %v2251
    %2264 = vmatpush.bf16.msra.mxu0 %v2250
    %2265 = vmatmul.bf16.gmra.mxu0 %v2255
    %v2266 = vpop.f32.mrf.mxu0
    %v2267 = vadd.f32 %v2237, %v2266
    %v2268 = vpop.f32.mrf.mxu0
    %2269 = vdwg.mxu0
    %vm2270 = vcmp.gt.f32.partialorder %v2267, 0.0
    %v2271 = vmul.f32 %v2267, 0.01
    %v2272 = vsel %vm2270, %v2267, %v2271
    %v2273 = vld [vmem:[%s8] sm:$0xf]
    %v2274 = vld [vmem:[%s8 + $0x4] sm:$0xf]
    %v2275 = vld [vmem:[%s8 + $0x8] sm:$0xf]
    %v2276 = vld [vmem:[%s8 + $0xc] sm:$0xf]
    %v2277 = vld [vmem:[%s8 + $0x10] sm:$0xf]
    %v2278 = vld [vmem:[%s8 + $0x14] sm:$0xf]
    %v2279 = vld [vmem:[%s8 + $0x18] sm:$0xf]
    %v2280 = vld [vmem:[%s8 + $0x1c] sm:$0xf]
    %v2281 = vpack.c.bf16 %v2272, %v2272
    %s2282 = scalar_lea.vmem [#allocation10], 1
    %v2283 = vld [vmem:[%s2282] sm:$0x1]
    %v2285 = vperm.slane %v2283, 0
    %v2295 = vunpack.c.l.b16 %v2273
    %v2296 = vunpack.c.l.b16 %v2274
    %v2297 = vunpack.c.l.b16 %v2275
    %v2298 = vunpack.c.l.b16 %v2276
    %v2299 = vunpack.c.l.b16 %v2277
    %v2300 = vunpack.c.l.b16 %v2278
    %v2301 = vunpack.c.l.b16 %v2279
    %v2302 = vunpack.c.l.b16 %v2280
    %v2303 = vpack.c.b16 %v2296, %v2295
    %v2304 = vpack.c.b16 %v2298, %v2297
    %v2305 = vpack.c.b16 %v2300, %v2299
    %v2306 = vpack.c.b16 %v2302, %v2301
    %vm2311 = vcmask 523264
    %v2313 = vsel %vm2311, %v2281, 0
    %2315 = vmatpush.bf16.msra.mxu0 0
    %2316 = vmatpush.bf16.msra.mxu0 0
    %2317 = vmatpush.bf16.msra.mxu0 0
    %2318 = vmatpush.bf16.msra.mxu0 0
    %2319 = vmatpush.bf16.msra.mxu0 %v2306
    %2320 = vmatpush.bf16.msra.mxu0 %v2305
    %2321 = vmatpush.bf16.msra.mxu0 %v2304
    %2322 = vmatpush.bf16.msra.mxu0 %v2303
    %2323 = vmatmul.bf16.gmra.mxu0 %v2313
    %v2324 = vpop.f32.mrf.mxu0
    %v2325 = vadd.f32 %v2285, %v2324
    %v2326 = vpop.f32.mrf.mxu0
    %2327 = vdwg.mxu0
    %s2328 = scalar_lea.vmem [#allocation8], 16
    %v2329 = vld [vmem:[%s2328] sm:$0xf]
    %v2330 = vld [vmem:[%s2328 + $0x4] sm:$0xf]
    %v2331 = vld [vmem:[%s2328 + $0x8] sm:$0xf]
    %v2332 = vld [vmem:[%s2328 + $0xc] sm:$0xf]
    %v2333 = vpack.c.bf16 %v1572, %v1572
    %s2334 = scalar_lea.vmem [#allocation10], 2
    %v2335 = vld [vmem:[%s2334] sm:$0x1]
    %v2337 = vperm.slane %v2335, 0
    %v2340 = vrot.slane %v2333, 3
    %v2345 = vunpack.c.l.b16 %v2329
    %v2346 = vunpack.c.l.b16 %v2330
    %v2347 = vunpack.c.l.b16 %v2331
    %v2348 = vunpack.c.l.b16 %v2332
    %v2349 = vpack.c.b16 %v2346, %v2345
    %v2350 = vpack.c.b16 %v2348, %v2347
    %v2354 = vsel %vm185, %v2340, 0
    %2356 = vmatpush.bf16.msra.mxu0 0
    %2357 = vmatpush.bf16.msra.mxu0 0
    %2358 = vmatpush.bf16.msra.mxu0 0
    %2359 = vmatpush.bf16.msra.mxu0 0
    %2360 = vmatpush.bf16.msra.mxu0 0
    %2361 = vmatpush.bf16.msra.mxu0 0
    %2362 = vmatpush.bf16.msra.mxu0 %v2350
    %2363 = vmatpush.bf16.msra.mxu0 %v2349
    %2364 = vmatmul.bf16.gmra.mxu0 %v2354
    %v2365 = vpop.f32.mrf.mxu0
    %v2366 = vadd.f32 %v2337, %v2365
    %v2367 = vpop.f32.mrf.mxu0
    %2368 = vdwg.mxu0
    %vm2369 = vcmp.gt.f32.partialorder %v2366, 0.0
    %v2370 = vmul.f32 %v2366, 0.01
    %v2371 = vsel %vm2369, %v2366, %v2370
    %s2372 = scalar_lea.vmem %s8, 32
    %v2373 = vld [vmem:[%s2372] sm:$0xf]
    %v2374 = vld [vmem:[%s2372 + $0x4] sm:$0xf]
    %v2375 = vld [vmem:[%s2372 + $0x8] sm:$0xf]
    %v2376 = vld [vmem:[%s2372 + $0xc] sm:$0xf]
    %v2377 = vld [vmem:[%s2372 + $0x10] sm:$0xf]
    %v2378 = vld [vmem:[%s2372 + $0x14] sm:$0xf]
    %v2379 = vld [vmem:[%s2372 + $0x18] sm:$0xf]
    %v2380 = vld [vmem:[%s2372 + $0x1c] sm:$0xf]
    %v2381 = vpack.c.bf16 %v2371, %v2371
    %s2382 = scalar_lea.vmem [#allocation10], 3
    %v2383 = vld [vmem:[%s2382] sm:$0x1]
    %v2385 = vperm.slane %v2383, 0
    %v2395 = vunpack.c.l.b16 %v2373
    %v2396 = vunpack.c.l.b16 %v2374
    %v2397 = vunpack.c.l.b16 %v2375
    %v2398 = vunpack.c.l.b16 %v2376
    %v2399 = vunpack.c.l.b16 %v2377
    %v2400 = vunpack.c.l.b16 %v2378
    %v2401 = vunpack.c.l.b16 %v2379
    %v2402 = vunpack.c.l.b16 %v2380
    %v2403 = vpack.c.b16 %v2396, %v2395
    %v2404 = vpack.c.b16 %v2398, %v2397
    %v2405 = vpack.c.b16 %v2400, %v2399
    %v2406 = vpack.c.b16 %v2402, %v2401
    %v2412 = vsel %vm2311, %v2381, 0
    %2414 = vmatpush.bf16.msra.mxu0 0
    %2415 = vmatpush.bf16.msra.mxu0 0
    %2416 = vmatpush.bf16.msra.mxu0 0
    %2417 = vmatpush.bf16.msra.mxu0 0
    %2418 = vmatpush.bf16.msra.mxu0 %v2406
    %2419 = vmatpush.bf16.msra.mxu0 %v2405
    %2420 = vmatpush.bf16.msra.mxu0 %v2404
    %2421 = vmatpush.bf16.msra.mxu0 %v2403
    %2422 = vmatmul.bf16.gmra.mxu0 %v2412
    %v2423 = vpop.f32.mrf.mxu0
    %v2424 = vadd.f32 %v2385, %v2423
    %v2425 = vpop.f32.mrf.mxu0
    %2426 = vdwg.mxu0
    %s2427 = scalar_lea.vmem [#allocation8], 32
    %v2428 = vld [vmem:[%s2427] sm:$0xf]
    %v2429 = vld [vmem:[%s2427 + $0x4] sm:$0xf]
    %v2430 = vld [vmem:[%s2427 + $0x8] sm:$0xf]
    %v2431 = vld [vmem:[%s2427 + $0xc] sm:$0xf]
    %v2432 = vpack.c.bf16 %v2229, %v2229
    %s2433 = scalar_lea.vmem [#allocation10], 4
    %v2434 = vld [vmem:[%s2433] sm:$0x1]
    %v2436 = vperm.slane %v2434, 0
    %2439 = vrot.lane.b32.xlu0 %v2432, 96
    %v2440 = vpop.permute.xlu0 %2439
    %v2445 = vunpack.c.l.b16 %v2428
    %v2446 = vunpack.c.l.b16 %v2429
    %v2447 = vunpack.c.l.b16 %v2430
    %v2448 = vunpack.c.l.b16 %v2431
    %v2449 = vpack.c.b16 %v2446, %v2445
    %v2450 = vpack.c.b16 %v2448, %v2447
    %v2454 = vsel %vm185, %v2440, 0
    %2456 = vmatpush.bf16.msra.mxu0 0
    %2457 = vmatpush.bf16.msra.mxu0 0
    %2458 = vmatpush.bf16.msra.mxu0 0
    %2459 = vmatpush.bf16.msra.mxu0 0
    %2460 = vmatpush.bf16.msra.mxu0 0
    %2461 = vmatpush.bf16.msra.mxu0 0
    %2462 = vmatpush.bf16.msra.mxu0 %v2450
    %2463 = vmatpush.bf16.msra.mxu0 %v2449
    %2464 = vmatmul.bf16.gmra.mxu0 %v2454
    %v2465 = vpop.f32.mrf.mxu0
    %v2466 = vadd.f32 %v2436, %v2465
    %v2467 = vpop.f32.mrf.mxu0
    %2468 = vdwg.mxu0
    %vm2469 = vcmp.gt.f32.partialorder %v2466, 0.0
    %v2470 = vmul.f32 %v2466, 0.01
    %v2471 = vsel %vm2469, %v2466, %v2470
    %s2472 = scalar_lea.vmem %s8, 64
    %v2473 = vld [vmem:[%s2472] sm:$0xf]
    %v2474 = vld [vmem:[%s2472 + $0x4] sm:$0xf]
    %v2475 = vld [vmem:[%s2472 + $0x8] sm:$0xf]
    %v2476 = vld [vmem:[%s2472 + $0xc] sm:$0xf]
    %v2477 = vld [vmem:[%s2472 + $0x10] sm:$0xf]
    %v2478 = vld [vmem:[%s2472 + $0x14] sm:$0xf]
    %v2479 = vld [vmem:[%s2472 + $0x18] sm:$0xf]
    %v2480 = vld [vmem:[%s2472 + $0x1c] sm:$0xf]
    %v2481 = vpack.c.bf16 %v2471, %v2471
    %s2482 = scalar_lea.vmem [#allocation10], 5
    %v2483 = vld [vmem:[%s2482] sm:$0x1]
    %v2485 = vperm.slane %v2483, 0
    %v2495 = vunpack.c.l.b16 %v2473
    %v2496 = vunpack.c.l.b16 %v2474
    %v2497 = vunpack.c.l.b16 %v2475
    %v2498 = vunpack.c.l.b16 %v2476
    %v2499 = vunpack.c.l.b16 %v2477
    %v2500 = vunpack.c.l.b16 %v2478
    %v2501 = vunpack.c.l.b16 %v2479
    %v2502 = vunpack.c.l.b16 %v2480
    %v2503 = vpack.c.b16 %v2496, %v2495
    %v2504 = vpack.c.b16 %v2498, %v2497
    %v2505 = vpack.c.b16 %v2500, %v2499
    %v2506 = vpack.c.b16 %v2502, %v2501
    %v2512 = vsel %vm2311, %v2481, 0
    %2514 = vmatpush.bf16.msra.mxu0 0
    %2515 = vmatpush.bf16.msra.mxu0 0
    %2516 = vmatpush.bf16.msra.mxu0 0
    %2517 = vmatpush.bf16.msra.mxu0 0
    %2518 = vmatpush.bf16.msra.mxu0 %v2506
    %2519 = vmatpush.bf16.msra.mxu0 %v2505
    %2520 = vmatpush.bf16.msra.mxu0 %v2504
    %2521 = vmatpush.bf16.msra.mxu0 %v2503
    %2522 = vmatmul.bf16.gmra.mxu0 %v2512
    %v2523 = vpop.f32.mrf.mxu0
    %v2524 = vadd.f32 %v2485, %v2523
    %v2525 = vpop.f32.mrf.mxu0
    %2526 = vdwg.mxu0
    %v2527 = vld [vmem:[#allocation2] sm:$0x3]
    %v2528 = vmul.f32 %v2527, 0.001
    %v2529 = vld [vmem:[#allocation13] sm:$0x1]
    %v2530 = vld [vmem:[#allocation13 + $0x1] sm:$0x1]
    %v2531 = vld [vmem:[#allocation13 + $0x2] sm:$0x1]
    %v2532 = vld [vmem:[#allocation13 + $0x3] sm:$0x1]
    %v2533 = vld [vmem:[#allocation13 + $0x4] sm:$0x1]
    %v2534 = vld [vmem:[#allocation11] sm:$0xf]
    %v2535 = vld [vmem:[#allocation11 + $0x4] sm:$0xf]
    %v2536 = vpack.c.bf16 %v2528, %v2528
    %s2537 = scalar_lea.vmem [#allocation11], 16
    %v2538 = vld [vmem:[%s2537] sm:$0xf]
    %v2539 = vld [vmem:[%s2537 + $0x4] sm:$0xf]
    %v2540 = vpack.c.bf16 %v2424, %v2424
    %v2543 = vunpack.c.l.b16 %v2538
    %v2544 = vunpack.c.l.b16 %v2539
    %v2545 = vpack.c.b16 %v2544, %v2543
    %vm2547 = vcmask 130048
    %v2549 = vsel %vm2547, %v2540, 0
    %2551 = vmatpush.bf16.msra.mxu0 0
    %2552 = vmatpush.bf16.msra.mxu0 0
    %2553 = vmatpush.bf16.msra.mxu0 0
    %2554 = vmatpush.bf16.msra.mxu0 0
    %2555 = vmatpush.bf16.msra.mxu0 0
    %2556 = vmatpush.bf16.msra.mxu0 0
    %2557 = vmatpush.bf16.msra.mxu0 0
    %2558 = vmatpush.bf16.msra.mxu0 %v2545
    %2559 = vmatmul.bf16.gmra.mxu0 %v2549
    %v2560 = vpop.f32.mrf.mxu0
    %v2561 = vadd.f32 0.0, %v2560
    %v2562 = vpop.f32.mrf.mxu0
    %2563 = vdwg.mxu0
    %v2566 = vunpack.c.l.b16 %v2534
    %v2567 = vunpack.c.l.b16 %v2535
    %v2568 = vpack.c.b16 %v2567, %v2566
    %v2571 = vsel %vm2547, %v2536, 0
    %2573 = vmatpush.bf16.msra.mxu0 0
    %2574 = vmatpush.bf16.msra.mxu0 0
    %2575 = vmatpush.bf16.msra.mxu0 0
    %2576 = vmatpush.bf16.msra.mxu0 0
    %2577 = vmatpush.bf16.msra.mxu0 0
    %2578 = vmatpush.bf16.msra.mxu0 0
    %2579 = vmatpush.bf16.msra.mxu0 0
    %2580 = vmatpush.bf16.msra.mxu0 %v2568
    %2581 = vmatmul.bf16.gmra.mxu0 %v2571
    %v2582 = vpop.f32.mrf.mxu0
    %v2583 = vadd.f32 %v2561, %v2582
    %v2584 = vpop.f32.mrf.mxu0
    %2585 = vdwg.mxu0
    %s2586 = scalar_lea.vmem [#allocation11], 24
    %v2587 = vld [vmem:[%s2586] sm:$0xf]
    %v2588 = vld [vmem:[%s2586 + $0x4] sm:$0xf]
    %v2589 = vpack.c.bf16 %v2524, %v2524
    %v2592 = vunpack.c.l.b16 %v2587
    %v2593 = vunpack.c.l.b16 %v2588
    %v2594 = vpack.c.b16 %v2593, %v2592
    %v2597 = vsel %vm2547, %v2589, 0
    %2599 = vmatpush.bf16.msra.mxu0 0
    %2600 = vmatpush.bf16.msra.mxu0 0
    %2601 = vmatpush.bf16.msra.mxu0 0
    %2602 = vmatpush.bf16.msra.mxu0 0
    %2603 = vmatpush.bf16.msra.mxu0 0
    %2604 = vmatpush.bf16.msra.mxu0 0
    %2605 = vmatpush.bf16.msra.mxu0 0
    %2606 = vmatpush.bf16.msra.mxu0 %v2594
    %2607 = vmatmul.bf16.gmra.mxu0 %v2597
    %v2608 = vpop.f32.mrf.mxu0
    %v2609 = vadd.f32 0.0, %v2608
    %v2610 = vpop.f32.mrf.mxu0
    %2611 = vdwg.mxu0
    %v2612 = vadd.f32 %v2583, %v2609
    %v2613 = vperm.slane %v2529, 0
    %v2614 = vadd.f32 %v2612, %v2613
    %v2616 = vrot.slane %v2614, 6
    %v2618 = vrot.slane %v2614, 4
    %v2620 = vsel %vm518, %v2614, %v2616
    %v2621 = vsel %vm516, %v2620, %v2618
    %s2622 = scalar_lea.vmem [#allocation11], 8
    %v2623 = vld [vmem:[%s2622] sm:$0xf]
    %v2624 = vld [vmem:[%s2622 + $0x4] sm:$0xf]
    %v2625 = vpack.c.bf16 %v2325, %v2325
    %v2628 = vunpack.c.l.b16 %v2623
    %v2629 = vunpack.c.l.b16 %v2624
    %v2630 = vpack.c.b16 %v2629, %v2628
    %v2633 = vsel %vm2547, %v2625, 0
    %2635 = vmatpush.bf16.msra.mxu0 0
    %2636 = vmatpush.bf16.msra.mxu0 0
    %2637 = vmatpush.bf16.msra.mxu0 0
    %2638 = vmatpush.bf16.msra.mxu0 0
    %2639 = vmatpush.bf16.msra.mxu0 0
    %2640 = vmatpush.bf16.msra.mxu0 0
    %2641 = vmatpush.bf16.msra.mxu0 0
    %2642 = vmatpush.bf16.msra.mxu0 %v2630
    %2643 = vmatmul.bf16.gmra.mxu0 %v2633
    %v2644 = vpop.f32.mrf.mxu0
    %v2645 = vadd.f32 0.0, %v2644
    %v2646 = vpop.f32.mrf.mxu0
    %2647 = vdwg.mxu0
    %v2648 = vadd.f32 %v2621, %v2645
    %vm2649 = vcmp.gt.f32.partialorder %v2648, 0.0
    %v2650 = vmul.f32 %v2648, 0.01
    %v2651 = vsel %vm2649, %v2648, %v2650
    %v2652 = vperm.slane %v2530, 0
    %v2653 = vmul.f32 %v2651, %v2652
    %vm2654 = vcmask 521216
    %v2655 = vsel %vm2654, %v2653, 0.0
    %2656 = vadd.xlane.f32.xlu0 %v2655
    %v2657 = vpop.xlane.xlu0 %2656
    %v2658 = vperm.slane %v2533, 0
    %v2659 = vadd.f32 %v2657, %v2658
    %s2660 = scalar_lea.vmem [#allocation11], 32
    %v2661 = vld [vmem:[%s2660] sm:$0xf]
    %v2662 = vld [vmem:[%s2660 + $0x4] sm:$0xf]
    %s2663 = scalar_lea.vmem [#allocation11], 40
    %v2664 = vld [vmem:[%s2663] sm:$0xf]
    %v2665 = vld [vmem:[%s2663 + $0x4] sm:$0xf]
    %v2668 = vunpack.c.l.b16 %v2664
    %v2669 = vunpack.c.l.b16 %v2665
    %v2670 = vpack.c.b16 %v2669, %v2668
    %2672 = vmatpush.bf16.msra.mxu0 0
    %2673 = vmatpush.bf16.msra.mxu0 0
    %2674 = vmatpush.bf16.msra.mxu0 0
    %2675 = vmatpush.bf16.msra.mxu0 0
    %2676 = vmatpush.bf16.msra.mxu0 0
    %2677 = vmatpush.bf16.msra.mxu0 0
    %2678 = vmatpush.bf16.msra.mxu0 0
    %2679 = vmatpush.bf16.msra.mxu0 %v2670
    %2680 = vmatmul.bf16.gmra.mxu0 %v2549
    %v2681 = vpop.f32.mrf.mxu0
    %v2682 = vadd.f32 0.0, %v2681
    %v2683 = vpop.f32.mrf.mxu0
    %2684 = vdwg.mxu0
    %v2687 = vunpack.c.l.b16 %v2661
    %v2688 = vunpack.c.l.b16 %v2662
    %v2689 = vpack.c.b16 %v2688, %v2687
    %2691 = vmatpush.bf16.msra.mxu0 0
    %2692 = vmatpush.bf16.msra.mxu0 0
    %2693 = vmatpush.bf16.msra.mxu0 0
    %2694 = vmatpush.bf16.msra.mxu0 0
    %2695 = vmatpush.bf16.msra.mxu0 0
    %2696 = vmatpush.bf16.msra.mxu0 0
    %2697 = vmatpush.bf16.msra.mxu0 0
    %2698 = vmatpush.bf16.msra.mxu0 %v2689
    %2699 = vmatmul.bf16.gmra.mxu0 %v2571
    %v2700 = vpop.f32.mrf.mxu0
    %v2701 = vadd.f32 %v2682, %v2700
    %v2702 = vpop.f32.mrf.mxu0
    %2703 = vdwg.mxu0
    %s2704 = scalar_lea.vmem [#allocation11], 48
    %v2705 = vld [vmem:[%s2704] sm:$0xf]
    %v2706 = vld [vmem:[%s2704 + $0x4] sm:$0xf]
    %v2709 = vunpack.c.l.b16 %v2705
    %v2710 = vunpack.c.l.b16 %v2706
    %v2711 = vpack.c.b16 %v2710, %v2709
    %2713 = vmatpush.bf16.msra.mxu0 0
    %2714 = vmatpush.bf16.msra.mxu0 0
    %2715 = vmatpush.bf16.msra.mxu0 0
    %2716 = vmatpush.bf16.msra.mxu0 0
    %2717 = vmatpush.bf16.msra.mxu0 0
    %2718 = vmatpush.bf16.msra.mxu0 0
    %2719 = vmatpush.bf16.msra.mxu0 0
    %2720 = vmatpush.bf16.msra.mxu0 %v2711
    %2721 = vmatmul.bf16.gmra.mxu0 %v2597
    %v2722 = vpop.f32.mrf.mxu0
    %v2723 = vadd.f32 0.0, %v2722
    %v2724 = vpop.f32.mrf.mxu0
    %2725 = vdwg.mxu0
    %v2726 = vadd.f32 %v2701, %v2723
    %v2727 = vperm.slane %v2531, 0
    %v2728 = vadd.f32 %v2726, %v2727
    %vm2729 = vcmp.gt.f32.partialorder %v2728, 0.0
    %v2730 = vmul.f32 %v2728, 0.01
    %v2731 = vsel %vm2729, %v2728, %v2730
    %v2732 = vperm.slane %v2532, 0
    %v2733 = vmul.f32 %v2731, %v2732
    %vm2734 = vcmask 517120
    %v2735 = vsel %vm2734, %v2733, 0.0
    %2736 = vadd.xlane.f32.xlu0 %v2735
    %v2737 = vpop.xlane.xlu0 %2736
    %v2738 = vadd.f32 %v2737, %v2658
    %v2740 = vrot.slane %v2659, 2
    %v2742 = vadd.f32 %v2659, %v2740
    %v2743 = vrot.slane %v2659, 4
    %v2745 = vadd.f32 %v2742, %v2743
    %v2746 = vmul.f32 %v2745, 0.33333334
    %2748 = vrot.lane.b32.xlu0 %v2738, 127
    %v2749 = vpop.permute.xlu0 %2748
    %v2751 = vadd.f32 %v2659, %v2749
    %v2752 = vsub.f32 %v2751, %v2746
    %v2753 = vrot.slane %v2738, 6
    %2754 = vrot.lane.b32.xlu0 %v2753, 127
    %v2755 = vpop.permute.xlu0 %2754
    %v2757 = vadd.f32 %v2659, %v2755
    %v2759 = vrot.slane %v2746, 6
    %v2761 = vsub.f32 %v2757, %v2759
    %v2762 = vrot.slane %v2738, 4
    %2763 = vrot.lane.b32.xlu0 %v2762, 127
    %v2764 = vpop.permute.xlu0 %2763
    %v2766 = vadd.f32 %v2659, %v2764
    %v2767 = vrot.slane %v2746, 4
    %v2769 = vsub.f32 %v2766, %v2767
    %v2771 = vrot.slane %v2761, 2
    %2772 = vrot.lane.b32.xlu0 %v2771, 1
    %v2773 = vpop.permute.xlu0 %2772
    %v2776 = vrot.slane %v2769, 4
    %2777 = vrot.lane.b32.xlu0 %v2776, 2
    %v2778 = vpop.permute.xlu0 %2777
    %vm2780 = vcmask 7168
    %v2781 = vsel %vm2780, %v2752, %v2773
    %vm2782 = vcmask 15360
    %v2783 = vsel %vm2782, %v2781, %v2778
    %vm2784 = vcmask 23552
    %v2785 = vsel %vm2784, %v2783, 0.0
    %2786 = vst [vmem:[#allocation14] sm:$0x3] %v2785
    // Predicated region
    $region78: #{tpu_custom_call.1} parent=1 // pred_check
      _
    $region79: #{tpu_custom_call.1} parent=1 // pred_check_branch
      %2788 = sbr.rel (0) target = $region81
    $region80: #{tpu_custom_call.1} parent=1 // pred_region
      %2790 = vsyncadd [#allocation4], 0
      %s2792 = sshll.u32 [#allocation14], 4
      %s2793 = int_to_ptr.vmem [resolvable:$true] %s2792
      %s2794 = sshll.u32 %s12, 4
      %s2795 = int_to_ptr.hbm [resolvable:$true] %s2794
      %2797 = dma.vmem_to_hbm [thread:$0]  %s2793, 32, %s2795, [#allocation4]
    $region81: #{tpu_custom_call.1} parent=1 // pred_fallthru
      _
    // Predicated region
    $region82: #{tpu_custom_call.1} parent=1 // pred_check
      _
    $region83: #{tpu_custom_call.1} parent=1 // pred_check_branch
      %2799 = sbr.rel (0) target = $region85
    $region84: #{tpu_custom_call.1} parent=1 // pred_region
      %2801 = dma.done [#allocation4], 32
    $region85: #{tpu_custom_call.1} parent=1 // pred_fallthru
      _
    %2802 = vsyncpa [#allocation3], 1
    %2803 = vsyncpa [#allocation6], 1
    %2804 = vsyncpa [#allocation9], 1
    %2805 = vsyncpa [#allocation12], 1
    %2806 = vsyncpa [#allocation4], 1

</llo_original>
